<compile_context>
chip_gen: v7x
topology: tpu7x:2x2x1
jax: 0.10.0
libtpu: 0.0.40
codegen_flags: <defaults>
</compile_context>

<pallas_src>
import functools

import jax
import jax.numpy as jnp
from jax.experimental import pallas as pl
from jax.experimental.pallas import tpu as pltpu

_EPS = 1e-5  # nn.BatchNorm2d default


# ----------------------------------------------------------------------------- kernel
def _basic_block_kernel(*args, stride, H1, W1, cin, planes,
                        has_projection, emit_preact):
    """One grid step == B_tile batch elements, folded into the matmul M dim."""
    if has_projection:
        (x_ref, w1_ref, s1_ref, b1_ref, w2_ref, s2_ref, b2_ref,
         wsc_ref, ssc_ref, bsc_ref, *rest) = args
    else:
        (x_ref, w1_ref, s1_ref, b1_ref, w2_ref, s2_ref, b2_ref, *rest) = args
        wsc_ref = ssc_ref = bsc_ref = None
    if emit_preact:
        out_ref, preact_ref, pad_ref = rest
    else:
        out_ref, pad_ref = rest
        preact_ref = None

    s = stride
    B = x_ref.shape[0]           # batch tile
    M = B * H1 * W1              # matmul M dimension
    f32 = jnp.float32

    # ---- conv1 (3x3, stride handled by wrapper space-to-depth) ----------------
    # 9 accumulating bf16 matmuls with f32 accumulation; no im2col concat and
    # no f32 round-trip on the taps.
    acc1 = None
    x_center = None
    for ky in range(3):
        for kx in range(3):
            dy, ry = ky // s, ky % s
            dx, rx = kx // s, kx % s
            sub = ry * s + rx                              # space-to-depth plane
            tap = x_ref[:, sub, dy:dy + H1, dx:dx + W1, :].reshape(M, cin)  # bf16
            if ky == 1 and kx == 1:
                x_center = tap                             # x at output positions
            k0 = (3 * ky + kx) * cin
            part = jnp.dot(tap, w1_ref[k0:k0 + cin, :],
                           preferred_element_type=f32)     # (M, planes) f32
            acc1 = part if acc1 is None else acc1 + part
    t1 = jnp.maximum(acc1 * s1_ref[...] + b1_ref[...], 0.0)

    # ---- stage relu(bn1(conv1)) into a zero-bordered bf16 scratch for conv2 ---
    # Only the 1-pixel border is zeroed (interior is fully overwritten below).
    # Re-zeroed every step: scratch is per-core, so a program_id==0 gate is not
    # safe when the grid is sharded across TensorCores.
    zrow = jnp.zeros((B, 1, W1 + 2, planes), pad_ref.dtype)
    zcol = jnp.zeros((B, H1, 1, planes), pad_ref.dtype)
    pad_ref[:, 0:1, :, :] = zrow
    pad_ref[:, H1 + 1:H1 + 2, :, :] = zrow
    pad_ref[:, 1:H1 + 1, 0:1, :] = zcol
    pad_ref[:, 1:H1 + 1, W1 + 1:W1 + 2, :] = zcol
    pad_ref[:, 1:H1 + 1, 1:W1 + 1, :] = (
        t1.reshape(B, H1, W1, planes).astype(pad_ref.dtype))

    # ---- conv2 (3x3, stride 1): 9 accumulating bf16 matmuls -------------------
    acc2 = None
    for ky in range(3):
        for kx in range(3):
            tap = pad_ref[:, ky:ky + H1, kx:kx + W1, :].reshape(M, planes)
            k0 = (3 * ky + kx) * planes
            part = jnp.dot(tap, w2_ref[k0:k0 + planes, :],
                           preferred_element_type=f32)
            acc2 = part if acc2 is None else acc2 + part
    t2 = acc2 * s2_ref[...] + b2_ref[...]

    # ---- shortcut: the center conv1 tap is exactly x sampled at the output
    #      positions (the 1x1-conv / identity view) -----------------------------
    if has_projection:
        sc = jnp.dot(x_center, wsc_ref[...], preferred_element_type=f32)
        sc = sc * ssc_ref[...] + bsc_ref[...]
    else:
        # identity shortcut (cin == planes, stride == 1): no matmul at all
        sc = x_center.astype(f32)

    pre = t2 + sc
    out_ref[...] = jnp.maximum(pre, 0.0).astype(out_ref.dtype)
    if emit_preact:
        preact_ref[...] = pre.astype(preact_ref.dtype)


# ----------------------------------------------------------------------------- helpers
def _fold_bn(gamma, beta, mean, var):
    scale = gamma / jnp.sqrt(var + _EPS)
    bias = beta - mean * scale
    return (scale.reshape(1, -1).astype(jnp.float32),
            bias.reshape(1, -1).astype(jnp.float32))


def _space_to_depth(xpad, s):
    """(N, Hp, Wp, C) -> (N, s*s, Hp//s, Wp//s, C); pure reshape for s=1."""
    n, hp, wp, c = xpad.shape
    if s == 1:
        return xpad.reshape(n, 1, hp, wp, c)
    pad_h = (-hp) % s
    pad_w = (-wp) % s
    if pad_h or pad_w:
        xpad = jnp.pad(xpad, ((0, 0), (0, pad_h), (0, pad_w), (0, 0)))
        hp += pad_h
        wp += pad_w
    x = xpad.reshape(n, hp // s, s, wp // s, s, c)
    x = jnp.transpose(x, (0, 2, 4, 1, 3, 5))      # (n, ry, rx, Hs, Ws, c)
    return x.reshape(n, s * s, hp // s, wp // s, c)


def _vmem_limit_bytes():
    """Generation-aware scoped-VMEM limit (v5e/v6e: 128 MiB, v7x: 64 MiB phys)."""
    try:
        cap = int(pltpu.get_tpu_info().vmem_capacity_bytes)
    except Exception:
        cap = 64 << 20                       # conservative default (v7x per-core)
    return min((cap * 3) // 4, 80 << 20)     # ~80 MiB on 128-MiB parts, ~48 MiB on v7x


def _pick_batch_tile(n, per_image_bytes, fixed_bytes, budget_bytes):
    """Largest divisor of n that fits the per-step VMEM budget while keeping
    >=2 grid steps when possible (so both TensorCores get work on megacore)."""
    best = 1
    for bt in range(1, n + 1):
        if n % bt:
            continue
        if bt > 1 and fixed_bytes + bt * per_image_bytes > budget_bytes:
            continue
        if n // bt >= 2 or n == 1:
            best = bt
    return best


# ----------------------------------------------------------------------------- wrapper
def basic_block_forward(x, params, *, stride, is_last=False):
    """x: NCHW float32 (like the PyTorch module).  Returns NCHW output(s)."""
    N, Cin, H, W = x.shape
    planes = params["w1"].shape[0]
    H1 = (H - 1) // stride + 1
    W1 = (W - 1) // stride + 1
    has_projection = "wsc" in params
    if not has_projection:
        assert stride == 1 and Cin == planes, (
            "identity shortcut requires stride == 1 and in_planes == planes")

    # glue: NCHW -> NHWC, bf16 activations, pad=1, space-to-depth for the stride
    x_nhwc = jnp.transpose(x, (0, 2, 3, 1)).astype(jnp.bfloat16)
    xpad = jnp.pad(x_nhwc, ((0, 0), (1, 1), (1, 1), (0, 0)))
    x_prep = _space_to_depth(xpad, stride)          # (N, s*s, Hs, Ws, Cin)
    _, SS, Hs, Ws, _ = x_prep.shape

    # glue: OIHW -> (ky, kx, cin) x planes weight slabs, bf16; fold BN (f32)
    w1c = jnp.transpose(params["w1"], (2, 3, 1, 0)).reshape(9 * Cin, planes)
    w2c = jnp.transpose(params["w2"], (2, 3, 1, 0)).reshape(9 * planes, planes)
    w1c = w1c.astype(jnp.bfloat16)
    w2c = w2c.astype(jnp.bfloat16)
    s1, b1 = _fold_bn(params["g1"], params["b1"], params["m1"], params["v1"])
    s2, b2 = _fold_bn(params["g2"], params["b2"], params["m2"], params["v2"])

    # batch tile: fold several images into the matmul M dimension.
    n_outs = 2 if is_last else 1
    per_image = (
        2 * 2 * SS * Hs * Ws * Cin                  # x block (bf16, dbl-buffered)
        + 2 * (H1 + 2) * (W1 + 2) * planes          # pad scratch (bf16)
        + 2 * 4 * n_outs * H1 * W1 * planes         # outputs (f32, dbl-buffered)
        + 4 * 4 * H1 * W1 * planes                  # live f32 accumulators/epilogue
        + 2 * 2 * H1 * W1 * max(Cin, planes))       # live bf16 taps
    fixed = 2 * 2 * (9 * Cin * planes + 9 * planes * planes
                     + (Cin * planes if has_projection else 0))
    vmem_limit = _vmem_limit_bytes()
    budget = vmem_limit // 2                        # headroom for compiler temps
    B_tile = _pick_batch_tile(N, per_image, fixed, budget)
    grid = (N // B_tile,)
    M_tile = B_tile * H1 * W1

    vec_spec = pl.BlockSpec((1, planes), lambda n: (0, 0))
    inputs = [x_prep, w1c, s1, b1, w2c, s2, b2]
    in_specs = [
        pl.BlockSpec((B_tile, SS, Hs, Ws, Cin), lambda n: (n, 0, 0, 0, 0)),
        pl.BlockSpec((9 * Cin, planes), lambda n: (0, 0)),
        vec_spec, vec_spec,
        pl.BlockSpec((9 * planes, planes), lambda n: (0, 0)),
        vec_spec, vec_spec,
    ]
    if has_projection:
        wsc = jnp.transpose(params["wsc"][:, :, 0, 0]).astype(jnp.bfloat16)
        ssc, bsc = _fold_bn(params["gsc"], params["bsc"],
                            params["msc"], params["vsc"])
        inputs += [wsc, ssc, bsc]
        in_specs += [pl.BlockSpec((Cin, planes), lambda n: (0, 0)),
                     vec_spec, vec_spec]

    # flat (M, planes) outputs: no in-kernel reshape of the matmul result.
    out_shapes = [jax.ShapeDtypeStruct((N * H1 * W1, planes), jnp.float32)]
    out_specs = [pl.BlockSpec((M_tile, planes), lambda n: (n, 0))]
    if is_last:
        out_shapes.append(jax.ShapeDtypeStruct((N * H1 * W1, planes), jnp.float32))
        out_specs.append(pl.BlockSpec((M_tile, planes), lambda n: (n, 0)))

    # scheduler hint for XLA around the custom call
    flops = 2 * N * H1 * W1 * planes * (
        9 * Cin + 9 * planes + (Cin if has_projection else 0))
    bytes_accessed = (
        x_prep.size * 2
        + (w1c.size + w2c.size + (Cin * planes if has_projection else 0)) * 2
        + n_outs * N * H1 * W1 * planes * 4)
    cost = pl.CostEstimate(flops=int(flops), transcendentals=0,
                           bytes_accessed=int(bytes_accessed))

    kernel = functools.partial(
        _basic_block_kernel, stride=stride, H1=H1, W1=W1, cin=Cin,
        planes=planes, has_projection=has_projection, emit_preact=is_last)

    results = pl.pallas_call(
        kernel,
        out_shape=tuple(out_shapes),
        grid_spec=pltpu.PrefetchScalarGridSpec(
            num_scalar_prefetch=0,
            grid=grid,
            in_specs=in_specs,
            out_specs=out_specs,
            scratch_shapes=[
                pltpu.VMEM((B_tile, H1 + 2, W1 + 2, planes), jnp.bfloat16)]),
        compiler_params=pltpu.CompilerParams(
            dimension_semantics=("parallel",),
            vmem_limit_bytes=vmem_limit),
        cost_estimate=cost,
    )(*inputs)

    def _to_nchw(flat):
        return jnp.transpose(flat.reshape(N, H1, W1, planes), (0, 3, 1, 2))

    if is_last:
        out_flat, pre_flat = results
        return _to_nchw(out_flat), _to_nchw(pre_flat)
    (out_flat,) = results
    return _to_nchw(out_flat)


# ----------------------------------------------------------------------------- reference (pure JAX, f32)
def _ref_basic_block(x, params, *, stride, is_last=False):
    def conv(y_nhwc, w_oihw, st, pad):
        w = jnp.transpose(w_oihw, (2, 3, 1, 0))
        return jax.lax.conv_general_dilated(
            y_nhwc, w, (st, st), [(pad, pad), (pad, pad)],
            dimension_numbers=("NHWC", "HWIO", "NHWC"))

    def bn(y, g, b, m, v):
        return (y - m) / jnp.sqrt(v + _EPS) * g + b

    xh = jnp.transpose(x, (0, 2, 3, 1)).astype(jnp.float32)
    o = jax.nn.relu(bn(conv(xh, params["w1"], stride, 1),
                       params["g1"], params["b1"], params["m1"], params["v1"]))
    o = bn(conv(o, params["w2"], 1, 1),
           params["g2"], params["b2"], params["m2"], params["v2"])
    if "wsc" in params:
        sc = bn(conv(xh, params["wsc"], stride, 0),
                params["gsc"], params["bsc"], params["msc"], params["vsc"])
    else:
        sc = xh
    pre = o + sc
    out = jax.nn.relu(pre)
    out = jnp.transpose(out, (0, 3, 1, 2))
    pre = jnp.transpose(pre, (0, 3, 1, 2))
    return (out, pre) if is_last else out


# ----------------------------------------------------------------------------- param init
def make_params(key, in_planes, planes, stride):
    ks = jax.random.split(key, 16)
    p = {
        "w1": 0.1 * jax.random.normal(ks[0], (planes, in_planes, 3, 3), jnp.float32),
        "g1": 1.0 + 0.1 * jax.random.normal(ks[1], (planes,), jnp.float32),
        "b1": 0.1 * jax.random.normal(ks[2], (planes,), jnp.float32),
        "m1": 0.1 * jax.random.normal(ks[3], (planes,), jnp.float32),
        "v1": 0.5 + jnp.abs(jax.random.normal(ks[4], (planes,), jnp.float32)),
        "w2": 0.1 * jax.random.normal(ks[5], (planes, planes, 3, 3), jnp.float32),
        "g2": 1.0 + 0.1 * jax.random.normal(ks[6], (planes,), jnp.float32),
        "b2": 0.1 * jax.random.normal(ks[7], (planes,), jnp.float32),
        "m2": 0.1 * jax.random.normal(ks[8], (planes,), jnp.float32),
        "v2": 0.5 + jnp.abs(jax.random.normal(ks[9], (planes,), jnp.float32)),
    }
    if stride != 1 or in_planes != planes:
        p.update({
            "wsc": 0.1 * jax.random.normal(ks[10], (planes, in_planes, 1, 1), jnp.float32),
            "gsc": 1.0 + 0.1 * jax.random.normal(ks[11], (planes,), jnp.float32),
            "bsc": 0.1 * jax.random.normal(ks[12], (planes,), jnp.float32),
            "msc": 0.1 * jax.random.normal(ks[13], (planes,), jnp.float32),
            "vsc": 0.5 + jnp.abs(jax.random.normal(ks[14], (planes,), jnp.float32)),
        })
    return p


# ----------------------------------------------------------------------------- main
if __name__ == "__main__":
    key = jax.random.PRNGKey(0)
    k_x1, k_p1, k_x2, k_p2 = jax.random.split(key, 4)

    # bf16 MXU operands with f32 accumulation => compare against the f32
    # reference with a bf16-appropriate tolerance.
    TOL = 5e-2

    # Case 1: projection shortcut (stride=2, channel change), is_last=True.
    x1 = jax.random.normal(k_x1, (2, 4, 16, 16), jnp.float32)
    params1 = make_params(k_p1, in_planes=4, planes=8, stride=2)
    out1, pre1 = basic_block_forward(x1, params1, stride=2, is_last=True)
    out1, pre1 = jax.block_until_ready((out1, pre1))
    r_out1, r_pre1 = _ref_basic_block(x1, params1, stride=2, is_last=True)
    assert out1.shape == (2, 8, 8, 8) and pre1.shape == (2, 8, 8, 8)
    assert float(jnp.max(jnp.abs(out1 - r_out1))) < TOL
    assert float(jnp.max(jnp.abs(pre1 - r_pre1))) < TOL

    # Case 2: identity shortcut (stride=1, in_planes == planes), is_last=False.
    x2 = jax.random.normal(k_x2, (2, 8, 16, 16), jnp.float32)
    params2 = make_params(k_p2, in_planes=8, planes=8, stride=1)
    out2 = basic_block_forward(x2, params2, stride=1, is_last=False)
    out2 = jax.block_until_ready(out2)
    r_out2 = _ref_basic_block(x2, params2, stride=1, is_last=False)
    assert out2.shape == (2, 8, 16, 16)
    assert float(jnp.max(jnp.abs(out2 - r_out2))) < TOL

    print("KERNEL_OK")
</pallas_src>

<mosaic_0001>
module attributes {stable_mosaic.version = 11 : i64} {
  func.func @_basic_block_kernel(%arg0: i32, %arg1: memref<1x4x9x9x4xbf16, #tpu.memory_space<vmem>>, %arg2: memref<36x8xbf16, #tpu.memory_space<vmem>>, %arg3: memref<1x8xf32, #tpu.memory_space<vmem>>, %arg4: memref<1x8xf32, #tpu.memory_space<vmem>>, %arg5: memref<72x8xbf16, #tpu.memory_space<vmem>>, %arg6: memref<1x8xf32, #tpu.memory_space<vmem>>, %arg7: memref<1x8xf32, #tpu.memory_space<vmem>>, %arg8: memref<4x8xbf16, #tpu.memory_space<vmem>>, %arg9: memref<1x8xf32, #tpu.memory_space<vmem>>, %arg10: memref<1x8xf32, #tpu.memory_space<vmem>>, %arg11: memref<64x8xf32, #tpu.memory_space<vmem>>, %arg12: memref<64x8xf32, #tpu.memory_space<vmem>>, %arg13: memref<1x10x10x8xbf16, #tpu.memory_space<vmem>>) attributes {dimension_semantics = [#tpu.dimension_semantics<parallel>], iteration_bounds = array<i64: 2>, scalar_prefetch = 0 : i64, scratch_operands = 1 : i64, tpu.core_type = #tpu.core_type<tc>, window_params = [{transform_indices = @transform_0, window_bounds = array<i64: 1, 4, 9, 9, 4>}, {pipeline_mode = #tpu.pipeline_mode<synchronous>, transform_indices = @transform_1, window_bounds = array<i64: 36, 8>}, {pipeline_mode = #tpu.pipeline_mode<synchronous>, transform_indices = @transform_2, window_bounds = array<i64: 1, 8>}, {pipeline_mode = #tpu.pipeline_mode<synchronous>, transform_indices = @transform_3, window_bounds = array<i64: 1, 8>}, {pipeline_mode = #tpu.pipeline_mode<synchronous>, transform_indices = @transform_4, window_bounds = array<i64: 72, 8>}, {pipeline_mode = #tpu.pipeline_mode<synchronous>, transform_indices = @transform_5, window_bounds = array<i64: 1, 8>}, {pipeline_mode = #tpu.pipeline_mode<synchronous>, transform_indices = @transform_6, window_bounds = array<i64: 1, 8>}, {pipeline_mode = #tpu.pipeline_mode<synchronous>, transform_indices = @transform_7, window_bounds = array<i64: 4, 8>}, {pipeline_mode = #tpu.pipeline_mode<synchronous>, transform_indices = @transform_8, window_bounds = array<i64: 1, 8>}, {pipeline_mode = #tpu.pipeline_mode<synchronous>, transform_indices = @transform_9, window_bounds = array<i64: 1, 8>}, {transform_indices = @transform_10, window_bounds = array<i64: 64, 8>}, {transform_indices = @transform_11, window_bounds = array<i64: 64, 8>}]} {
    %c0 = arith.constant 0 : index
    %c0_0 = arith.constant 0 : index
    %c0_1 = arith.constant 0 : index
    %c0_2 = arith.constant 0 : index
    %c0_3 = arith.constant 0 : index
    %0 = vector.load %arg1[%c0, %c0_0, %c0_1, %c0_2, %c0_3] : memref<1x4x9x9x4xbf16, #tpu.memory_space<vmem>>, vector<1x1x8x8x4xbf16>
    %1 = vector.shape_cast %0 : vector<1x1x8x8x4xbf16> to vector<1x8x8x4xbf16>
    %2 = vector.shape_cast %1 : vector<1x8x8x4xbf16> to vector<64x4xbf16>
    %c0_4 = arith.constant 0 : index
    %c0_5 = arith.constant 0 : index
    %3 = vector.load %arg2[%c0_4, %c0_5] : memref<36x8xbf16, #tpu.memory_space<vmem>>, vector<4x8xbf16>
    %cst = arith.constant dense<0.000000e+00> : vector<64x8xf32>
    %4 = tpu.matmul %2, %3, %cst {dimension_numbers = #tpu.dot_dimension_numbers<[1], [0], [0], [1], [0, 0, 1, 1], [], []>} : vector<64x4xbf16>, vector<4x8xbf16>, vector<64x8xf32> -> vector<64x8xf32>
    %c0_6 = arith.constant 0 : index
    %c1 = arith.constant 1 : index
    %c0_7 = arith.constant 0 : index
    %c0_8 = arith.constant 0 : index
    %c0_9 = arith.constant 0 : index
    %5 = vector.load %arg1[%c0_6, %c1, %c0_7, %c0_8, %c0_9] : memref<1x4x9x9x4xbf16, #tpu.memory_space<vmem>>, vector<1x1x8x8x4xbf16>
    %6 = vector.shape_cast %5 : vector<1x1x8x8x4xbf16> to vector<1x8x8x4xbf16>
    %7 = vector.shape_cast %6 : vector<1x8x8x4xbf16> to vector<64x4xbf16>
    %c4 = arith.constant 4 : index
    %c0_10 = arith.constant 0 : index
    %8 = vector.load %arg2[%c4, %c0_10] : memref<36x8xbf16, #tpu.memory_space<vmem>>, vector<4x8xbf16>
    %cst_11 = arith.constant dense<0.000000e+00> : vector<64x8xf32>
    %9 = tpu.matmul %7, %8, %cst_11 {dimension_numbers = #tpu.dot_dimension_numbers<[1], [0], [0], [1], [0, 0, 1, 1], [], []>} : vector<64x4xbf16>, vector<4x8xbf16>, vector<64x8xf32> -> vector<64x8xf32>
    %10 = arith.addf %4, %9 : vector<64x8xf32>
    %c0_12 = arith.constant 0 : index
    %c0_13 = arith.constant 0 : index
    %c0_14 = arith.constant 0 : index
    %c1_15 = arith.constant 1 : index
    %c0_16 = arith.constant 0 : index
    %11 = vector.load %arg1[%c0_12, %c0_13, %c0_14, %c1_15, %c0_16] : memref<1x4x9x9x4xbf16, #tpu.memory_space<vmem>>, vector<1x1x8x8x4xbf16>
    %12 = vector.shape_cast %11 : vector<1x1x8x8x4xbf16> to vector<1x8x8x4xbf16>
    %13 = vector.shape_cast %12 : vector<1x8x8x4xbf16> to vector<64x4xbf16>
    %c8 = arith.constant 8 : index
    %c0_17 = arith.constant 0 : index
    %14 = vector.load %arg2[%c8, %c0_17] : memref<36x8xbf16, #tpu.memory_space<vmem>>, vector<4x8xbf16>
    %cst_18 = arith.constant dense<0.000000e+00> : vector<64x8xf32>
    %15 = tpu.matmul %13, %14, %cst_18 {dimension_numbers = #tpu.dot_dimension_numbers<[1], [0], [0], [1], [0, 0, 1, 1], [], []>} : vector<64x4xbf16>, vector<4x8xbf16>, vector<64x8xf32> -> vector<64x8xf32>
    %16 = arith.addf %10, %15 : vector<64x8xf32>
    %c0_19 = arith.constant 0 : index
    %c2 = arith.constant 2 : index
    %c0_20 = arith.constant 0 : index
    %c0_21 = arith.constant 0 : index
    %c0_22 = arith.constant 0 : index
    %17 = vector.load %arg1[%c0_19, %c2, %c0_20, %c0_21, %c0_22] : memref<1x4x9x9x4xbf16, #tpu.memory_space<vmem>>, vector<1x1x8x8x4xbf16>
    %18 = vector.shape_cast %17 : vector<1x1x8x8x4xbf16> to vector<1x8x8x4xbf16>
    %19 = vector.shape_cast %18 : vector<1x8x8x4xbf16> to vector<64x4xbf16>
    %c12 = arith.constant 12 : index
    %c0_23 = arith.constant 0 : index
    %20 = vector.load %arg2[%c12, %c0_23] : memref<36x8xbf16, #tpu.memory_space<vmem>>, vector<4x8xbf16>
    %cst_24 = arith.constant dense<0.000000e+00> : vector<64x8xf32>
    %21 = tpu.matmul %19, %20, %cst_24 {dimension_numbers = #tpu.dot_dimension_numbers<[1], [0], [0], [1], [0, 0, 1, 1], [], []>} : vector<64x4xbf16>, vector<4x8xbf16>, vector<64x8xf32> -> vector<64x8xf32>
    %22 = arith.addf %16, %21 : vector<64x8xf32>
    %c0_25 = arith.constant 0 : index
    %c3 = arith.constant 3 : index
    %c0_26 = arith.constant 0 : index
    %c0_27 = arith.constant 0 : index
    %c0_28 = arith.constant 0 : index
    %23 = vector.load %arg1[%c0_25, %c3, %c0_26, %c0_27, %c0_28] : memref<1x4x9x9x4xbf16, #tpu.memory_space<vmem>>, vector<1x1x8x8x4xbf16>
    %24 = vector.shape_cast %23 : vector<1x1x8x8x4xbf16> to vector<1x8x8x4xbf16>
    %25 = vector.shape_cast %24 : vector<1x8x8x4xbf16> to vector<64x4xbf16>
    %c16 = arith.constant 16 : index
    %c0_29 = arith.constant 0 : index
    %26 = vector.load %arg2[%c16, %c0_29] : memref<36x8xbf16, #tpu.memory_space<vmem>>, vector<4x8xbf16>
    %cst_30 = arith.constant dense<0.000000e+00> : vector<64x8xf32>
    %27 = tpu.matmul %25, %26, %cst_30 {dimension_numbers = #tpu.dot_dimension_numbers<[1], [0], [0], [1], [0, 0, 1, 1], [], []>} : vector<64x4xbf16>, vector<4x8xbf16>, vector<64x8xf32> -> vector<64x8xf32>
    %28 = arith.addf %22, %27 : vector<64x8xf32>
    %c0_31 = arith.constant 0 : index
    %c2_32 = arith.constant 2 : index
    %c0_33 = arith.constant 0 : index
    %c1_34 = arith.constant 1 : index
    %c0_35 = arith.constant 0 : index
    %29 = vector.load %arg1[%c0_31, %c2_32, %c0_33, %c1_34, %c0_35] : memref<1x4x9x9x4xbf16, #tpu.memory_space<vmem>>, vector<1x1x8x8x4xbf16>
    %30 = vector.shape_cast %29 : vector<1x1x8x8x4xbf16> to vector<1x8x8x4xbf16>
    %31 = vector.shape_cast %30 : vector<1x8x8x4xbf16> to vector<64x4xbf16>
    %c20 = arith.constant 20 : index
    %c0_36 = arith.constant 0 : index
    %32 = vector.load %arg2[%c20, %c0_36] : memref<36x8xbf16, #tpu.memory_space<vmem>>, vector<4x8xbf16>
    %cst_37 = arith.constant dense<0.000000e+00> : vector<64x8xf32>
    %33 = tpu.matmul %31, %32, %cst_37 {dimension_numbers = #tpu.dot_dimension_numbers<[1], [0], [0], [1], [0, 0, 1, 1], [], []>} : vector<64x4xbf16>, vector<4x8xbf16>, vector<64x8xf32> -> vector<64x8xf32>
    %34 = arith.addf %28, %33 : vector<64x8xf32>
    %c0_38 = arith.constant 0 : index
    %c0_39 = arith.constant 0 : index
    %c1_40 = arith.constant 1 : index
    %c0_41 = arith.constant 0 : index
    %c0_42 = arith.constant 0 : index
    %35 = vector.load %arg1[%c0_38, %c0_39, %c1_40, %c0_41, %c0_42] : memref<1x4x9x9x4xbf16, #tpu.memory_space<vmem>>, vector<1x1x8x8x4xbf16>
    %36 = vector.shape_cast %35 : vector<1x1x8x8x4xbf16> to vector<1x8x8x4xbf16>
    %37 = vector.shape_cast %36 : vector<1x8x8x4xbf16> to vector<64x4xbf16>
    %c24 = arith.constant 24 : index
    %c0_43 = arith.constant 0 : index
    %38 = vector.load %arg2[%c24, %c0_43] : memref<36x8xbf16, #tpu.memory_space<vmem>>, vector<4x8xbf16>
    %cst_44 = arith.constant dense<0.000000e+00> : vector<64x8xf32>
    %39 = tpu.matmul %37, %38, %cst_44 {dimension_numbers = #tpu.dot_dimension_numbers<[1], [0], [0], [1], [0, 0, 1, 1], [], []>} : vector<64x4xbf16>, vector<4x8xbf16>, vector<64x8xf32> -> vector<64x8xf32>
    %40 = arith.addf %34, %39 : vector<64x8xf32>
    %c0_45 = arith.constant 0 : index
    %c1_46 = arith.constant 1 : index
    %c1_47 = arith.constant 1 : index
    %c0_48 = arith.constant 0 : index
    %c0_49 = arith.constant 0 : index
    %41 = vector.load %arg1[%c0_45, %c1_46, %c1_47, %c0_48, %c0_49] : memref<1x4x9x9x4xbf16, #tpu.memory_space<vmem>>, vector<1x1x8x8x4xbf16>
    %42 = vector.shape_cast %41 : vector<1x1x8x8x4xbf16> to vector<1x8x8x4xbf16>
    %43 = vector.shape_cast %42 : vector<1x8x8x4xbf16> to vector<64x4xbf16>
    %c28 = arith.constant 28 : index
    %c0_50 = arith.constant 0 : index
    %44 = vector.load %arg2[%c28, %c0_50] : memref<36x8xbf16, #tpu.memory_space<vmem>>, vector<4x8xbf16>
    %cst_51 = arith.constant dense<0.000000e+00> : vector<64x8xf32>
    %45 = tpu.matmul %43, %44, %cst_51 {dimension_numbers = #tpu.dot_dimension_numbers<[1], [0], [0], [1], [0, 0, 1, 1], [], []>} : vector<64x4xbf16>, vector<4x8xbf16>, vector<64x8xf32> -> vector<64x8xf32>
    %46 = arith.addf %40, %45 : vector<64x8xf32>
    %c0_52 = arith.constant 0 : index
    %c0_53 = arith.constant 0 : index
    %c1_54 = arith.constant 1 : index
    %c1_55 = arith.constant 1 : index
    %c0_56 = arith.constant 0 : index
    %47 = vector.load %arg1[%c0_52, %c0_53, %c1_54, %c1_55, %c0_56] : memref<1x4x9x9x4xbf16, #tpu.memory_space<vmem>>, vector<1x1x8x8x4xbf16>
    %48 = vector.shape_cast %47 : vector<1x1x8x8x4xbf16> to vector<1x8x8x4xbf16>
    %49 = vector.shape_cast %48 : vector<1x8x8x4xbf16> to vector<64x4xbf16>
    %c32 = arith.constant 32 : index
    %c0_57 = arith.constant 0 : index
    %50 = vector.load %arg2[%c32, %c0_57] : memref<36x8xbf16, #tpu.memory_space<vmem>>, vector<4x8xbf16>
    %cst_58 = arith.constant dense<0.000000e+00> : vector<64x8xf32>
    %51 = tpu.matmul %49, %50, %cst_58 {dimension_numbers = #tpu.dot_dimension_numbers<[1], [0], [0], [1], [0, 0, 1, 1], [], []>} : vector<64x4xbf16>, vector<4x8xbf16>, vector<64x8xf32> -> vector<64x8xf32>
    %52 = arith.addf %46, %51 : vector<64x8xf32>
    %c0_59 = arith.constant 0 : index
    %c0_60 = arith.constant 0 : index
    %53 = vector.load %arg3[%c0_59, %c0_60] : memref<1x8xf32, #tpu.memory_space<vmem>>, vector<1x8xf32>
    %54 = vector.broadcast %53 : vector<1x8xf32> to vector<64x8xf32>
    %55 = arith.mulf %52, %54 : vector<64x8xf32>
    %c0_61 = arith.constant 0 : index
    %c0_62 = arith.constant 0 : index
    %56 = vector.load %arg4[%c0_61, %c0_62] : memref<1x8xf32, #tpu.memory_space<vmem>>, vector<1x8xf32>
    %57 = vector.broadcast %56 : vector<1x8xf32> to vector<64x8xf32>
    %58 = arith.addf %55, %57 : vector<64x8xf32>
    %cst_63 = arith.constant 0.000000e+00 : f32
    %59 = vector.broadcast %cst_63 : f32 to vector<64x8xf32>
    %60 = arith.maximumf %58, %59 : vector<64x8xf32>
    %cst_64 = arith.constant 0.000000e+00 : bf16
    %61 = vector.broadcast %cst_64 : bf16 to vector<1x1x10x8xbf16>
    %cst_65 = arith.constant 0.000000e+00 : bf16
    %62 = vector.broadcast %cst_65 : bf16 to vector<1x8x1x8xbf16>
    %c0_66 = arith.constant 0 : index
    %c0_67 = arith.constant 0 : index
    %c0_68 = arith.constant 0 : index
    %c0_69 = arith.constant 0 : index
    %63 = vector.load %arg13[%c0_66, %c0_67, %c0_68, %c0_69] : memref<1x10x10x8xbf16, #tpu.memory_space<vmem>>, vector<1x1x10x8xbf16>
    tpu.vector_store %arg13[%c0_66, %c0_67, %c0_68, %c0_69], %61 {strides = array<i32>} : memref<1x10x10x8xbf16, #tpu.memory_space<vmem>>, vector<1x1x10x8xbf16>,
    %c0_70 = arith.constant 0 : index
    %c9 = arith.constant 9 : index
    %c0_71 = arith.constant 0 : index
    %c0_72 = arith.constant 0 : index
    %64 = vector.load %arg13[%c0_70, %c9, %c0_71, %c0_72] : memref<1x10x10x8xbf16, #tpu.memory_space<vmem>>, vector<1x1x10x8xbf16>
    tpu.vector_store %arg13[%c0_70, %c9, %c0_71, %c0_72], %61 {strides = array<i32>} : memref<1x10x10x8xbf16, #tpu.memory_space<vmem>>, vector<1x1x10x8xbf16>,
    %c0_73 = arith.constant 0 : index
    %c1_74 = arith.constant 1 : index
    %c0_75 = arith.constant 0 : index
    %c0_76 = arith.constant 0 : index
    %65 = vector.load %arg13[%c0_73, %c1_74, %c0_75, %c0_76] : memref<1x10x10x8xbf16, #tpu.memory_space<vmem>>, vector<1x8x1x8xbf16>
    tpu.vector_store %arg13[%c0_73, %c1_74, %c0_75, %c0_76], %62 {strides = array<i32>} : memref<1x10x10x8xbf16, #tpu.memory_space<vmem>>, vector<1x8x1x8xbf16>,
    %c0_77 = arith.constant 0 : index
    %c1_78 = arith.constant 1 : index
    %c9_79 = arith.constant 9 : index
    %c0_80 = arith.constant 0 : index
    %66 = vector.load %arg13[%c0_77, %c1_78, %c9_79, %c0_80] : memref<1x10x10x8xbf16, #tpu.memory_space<vmem>>, vector<1x8x1x8xbf16>
    tpu.vector_store %arg13[%c0_77, %c1_78, %c9_79, %c0_80], %62 {strides = array<i32>} : memref<1x10x10x8xbf16, #tpu.memory_space<vmem>>, vector<1x8x1x8xbf16>,
    %67 = vector.shape_cast %60 : vector<64x8xf32> to vector<1x8x8x8xf32>
    %68 = arith.truncf %67 : vector<1x8x8x8xf32> to vector<1x8x8x8xbf16>
    %c0_81 = arith.constant 0 : index
    %c1_82 = arith.constant 1 : index
    %c1_83 = arith.constant 1 : index
    %c0_84 = arith.constant 0 : index
    %69 = vector.load %arg13[%c0_81, %c1_82, %c1_83, %c0_84] : memref<1x10x10x8xbf16, #tpu.memory_space<vmem>>, vector<1x8x8x8xbf16>
    tpu.vector_store %arg13[%c0_81, %c1_82, %c1_83, %c0_84], %68 {strides = array<i32>} : memref<1x10x10x8xbf16, #tpu.memory_space<vmem>>, vector<1x8x8x8xbf16>,
    %c0_85 = arith.constant 0 : index
    %c0_86 = arith.constant 0 : index
    %c0_87 = arith.constant 0 : index
    %c0_88 = arith.constant 0 : index
    %70 = vector.load %arg13[%c0_85, %c0_86, %c0_87, %c0_88] : memref<1x10x10x8xbf16, #tpu.memory_space<vmem>>, vector<1x8x8x8xbf16>
    %71 = vector.shape_cast %70 : vector<1x8x8x8xbf16> to vector<64x8xbf16>
    %c0_89 = arith.constant 0 : index
    %c0_90 = arith.constant 0 : index
    %72 = vector.load %arg5[%c0_89, %c0_90] : memref<72x8xbf16, #tpu.memory_space<vmem>>, vector<8x8xbf16>
    %cst_91 = arith.constant dense<0.000000e+00> : vector<64x8xf32>
    %73 = tpu.matmul %71, %72, %cst_91 {dimension_numbers = #tpu.dot_dimension_numbers<[1], [0], [0], [1], [0, 0, 1, 1], [], []>} : vector<64x8xbf16>, vector<8x8xbf16>, vector<64x8xf32> -> vector<64x8xf32>
    %c0_92 = arith.constant 0 : index
    %c0_93 = arith.constant 0 : index
    %c1_94 = arith.constant 1 : index
    %c0_95 = arith.constant 0 : index
    %74 = vector.load %arg13[%c0_92, %c0_93, %c1_94, %c0_95] : memref<1x10x10x8xbf16, #tpu.memory_space<vmem>>, vector<1x8x8x8xbf16>
    %75 = vector.shape_cast %74 : vector<1x8x8x8xbf16> to vector<64x8xbf16>
    %c8_96 = arith.constant 8 : index
    %c0_97 = arith.constant 0 : index
    %76 = vector.load %arg5[%c8_96, %c0_97] : memref<72x8xbf16, #tpu.memory_space<vmem>>, vector<8x8xbf16>
    %cst_98 = arith.constant dense<0.000000e+00> : vector<64x8xf32>
    %77 = tpu.matmul %75, %76, %cst_98 {dimension_numbers = #tpu.dot_dimension_numbers<[1], [0], [0], [1], [0, 0, 1, 1], [], []>} : vector<64x8xbf16>, vector<8x8xbf16>, vector<64x8xf32> -> vector<64x8xf32>
    %78 = arith.addf %73, %77 : vector<64x8xf32>
    %c0_99 = arith.constant 0 : index
    %c0_100 = arith.constant 0 : index
    %c2_101 = arith.constant 2 : index
    %c0_102 = arith.constant 0 : index
    %79 = vector.load %arg13[%c0_99, %c0_100, %c2_101, %c0_102] : memref<1x10x10x8xbf16, #tpu.memory_space<vmem>>, vector<1x8x8x8xbf16>
    %80 = vector.shape_cast %79 : vector<1x8x8x8xbf16> to vector<64x8xbf16>
    %c16_103 = arith.constant 16 : index
    %c0_104 = arith.constant 0 : index
    %81 = vector.load %arg5[%c16_103, %c0_104] : memref<72x8xbf16, #tpu.memory_space<vmem>>, vector<8x8xbf16>
    %cst_105 = arith.constant dense<0.000000e+00> : vector<64x8xf32>
    %82 = tpu.matmul %80, %81, %cst_105 {dimension_numbers = #tpu.dot_dimension_numbers<[1], [0], [0], [1], [0, 0, 1, 1], [], []>} : vector<64x8xbf16>, vector<8x8xbf16>, vector<64x8xf32> -> vector<64x8xf32>
    %83 = arith.addf %78, %82 : vector<64x8xf32>
    %c0_106 = arith.constant 0 : index
    %c1_107 = arith.constant 1 : index
    %c0_108 = arith.constant 0 : index
    %c0_109 = arith.constant 0 : index
    %84 = vector.load %arg13[%c0_106, %c1_107, %c0_108, %c0_109] : memref<1x10x10x8xbf16, #tpu.memory_space<vmem>>, vector<1x8x8x8xbf16>
    %85 = vector.shape_cast %84 : vector<1x8x8x8xbf16> to vector<64x8xbf16>
    %c24_110 = arith.constant 24 : index
    %c0_111 = arith.constant 0 : index
    %86 = vector.load %arg5[%c24_110, %c0_111] : memref<72x8xbf16, #tpu.memory_space<vmem>>, vector<8x8xbf16>
    %cst_112 = arith.constant dense<0.000000e+00> : vector<64x8xf32>
    %87 = tpu.matmul %85, %86, %cst_112 {dimension_numbers = #tpu.dot_dimension_numbers<[1], [0], [0], [1], [0, 0, 1, 1], [], []>} : vector<64x8xbf16>, vector<8x8xbf16>, vector<64x8xf32> -> vector<64x8xf32>
    %88 = arith.addf %83, %87 : vector<64x8xf32>
    %c0_113 = arith.constant 0 : index
    %c1_114 = arith.constant 1 : index
    %c1_115 = arith.constant 1 : index
    %c0_116 = arith.constant 0 : index
    %89 = vector.load %arg13[%c0_113, %c1_114, %c1_115, %c0_116] : memref<1x10x10x8xbf16, #tpu.memory_space<vmem>>, vector<1x8x8x8xbf16>
    %90 = vector.shape_cast %89 : vector<1x8x8x8xbf16> to vector<64x8xbf16>
    %c32_117 = arith.constant 32 : index
    %c0_118 = arith.constant 0 : index
    %91 = vector.load %arg5[%c32_117, %c0_118] : memref<72x8xbf16, #tpu.memory_space<vmem>>, vector<8x8xbf16>
    %cst_119 = arith.constant dense<0.000000e+00> : vector<64x8xf32>
    %92 = tpu.matmul %90, %91, %cst_119 {dimension_numbers = #tpu.dot_dimension_numbers<[1], [0], [0], [1], [0, 0, 1, 1], [], []>} : vector<64x8xbf16>, vector<8x8xbf16>, vector<64x8xf32> -> vector<64x8xf32>
    %93 = arith.addf %88, %92 : vector<64x8xf32>
    %c0_120 = arith.constant 0 : index
    %c1_121 = arith.constant 1 : index
    %c2_122 = arith.constant 2 : index
    %c0_123 = arith.constant 0 : index
    %94 = vector.load %arg13[%c0_120, %c1_121, %c2_122, %c0_123] : memref<1x10x10x8xbf16, #tpu.memory_space<vmem>>, vector<1x8x8x8xbf16>
    %95 = vector.shape_cast %94 : vector<1x8x8x8xbf16> to vector<64x8xbf16>
    %c40 = arith.constant 40 : index
    %c0_124 = arith.constant 0 : index
    %96 = vector.load %arg5[%c40, %c0_124] : memref<72x8xbf16, #tpu.memory_space<vmem>>, vector<8x8xbf16>
    %cst_125 = arith.constant dense<0.000000e+00> : vector<64x8xf32>
    %97 = tpu.matmul %95, %96, %cst_125 {dimension_numbers = #tpu.dot_dimension_numbers<[1], [0], [0], [1], [0, 0, 1, 1], [], []>} : vector<64x8xbf16>, vector<8x8xbf16>, vector<64x8xf32> -> vector<64x8xf32>
    %98 = arith.addf %93, %97 : vector<64x8xf32>
    %c0_126 = arith.constant 0 : index
    %c2_127 = arith.constant 2 : index
    %c0_128 = arith.constant 0 : index
    %c0_129 = arith.constant 0 : index
    %99 = vector.load %arg13[%c0_126, %c2_127, %c0_128, %c0_129] : memref<1x10x10x8xbf16, #tpu.memory_space<vmem>>, vector<1x8x8x8xbf16>
    %100 = vector.shape_cast %99 : vector<1x8x8x8xbf16> to vector<64x8xbf16>
    %c48 = arith.constant 48 : index
    %c0_130 = arith.constant 0 : index
    %101 = vector.load %arg5[%c48, %c0_130] : memref<72x8xbf16, #tpu.memory_space<vmem>>, vector<8x8xbf16>
    %cst_131 = arith.constant dense<0.000000e+00> : vector<64x8xf32>
    %102 = tpu.matmul %100, %101, %cst_131 {dimension_numbers = #tpu.dot_dimension_numbers<[1], [0], [0], [1], [0, 0, 1, 1], [], []>} : vector<64x8xbf16>, vector<8x8xbf16>, vector<64x8xf32> -> vector<64x8xf32>
    %103 = arith.addf %98, %102 : vector<64x8xf32>
    %c0_132 = arith.constant 0 : index
    %c2_133 = arith.constant 2 : index
    %c1_134 = arith.constant 1 : index
    %c0_135 = arith.constant 0 : index
    %104 = vector.load %arg13[%c0_132, %c2_133, %c1_134, %c0_135] : memref<1x10x10x8xbf16, #tpu.memory_space<vmem>>, vector<1x8x8x8xbf16>
    %105 = vector.shape_cast %104 : vector<1x8x8x8xbf16> to vector<64x8xbf16>
    %c56 = arith.constant 56 : index
    %c0_136 = arith.constant 0 : index
    %106 = vector.load %arg5[%c56, %c0_136] : memref<72x8xbf16, #tpu.memory_space<vmem>>, vector<8x8xbf16>
    %cst_137 = arith.constant dense<0.000000e+00> : vector<64x8xf32>
    %107 = tpu.matmul %105, %106, %cst_137 {dimension_numbers = #tpu.dot_dimension_numbers<[1], [0], [0], [1], [0, 0, 1, 1], [], []>} : vector<64x8xbf16>, vector<8x8xbf16>, vector<64x8xf32> -> vector<64x8xf32>
    %108 = arith.addf %103, %107 : vector<64x8xf32>
    %c0_138 = arith.constant 0 : index
    %c2_139 = arith.constant 2 : index
    %c2_140 = arith.constant 2 : index
    %c0_141 = arith.constant 0 : index
    %109 = vector.load %arg13[%c0_138, %c2_139, %c2_140, %c0_141] : memref<1x10x10x8xbf16, #tpu.memory_space<vmem>>, vector<1x8x8x8xbf16>
    %110 = vector.shape_cast %109 : vector<1x8x8x8xbf16> to vector<64x8xbf16>
    %c64 = arith.constant 64 : index
    %c0_142 = arith.constant 0 : index
    %111 = vector.load %arg5[%c64, %c0_142] : memref<72x8xbf16, #tpu.memory_space<vmem>>, vector<8x8xbf16>
    %cst_143 = arith.constant dense<0.000000e+00> : vector<64x8xf32>
    %112 = tpu.matmul %110, %111, %cst_143 {dimension_numbers = #tpu.dot_dimension_numbers<[1], [0], [0], [1], [0, 0, 1, 1], [], []>} : vector<64x8xbf16>, vector<8x8xbf16>, vector<64x8xf32> -> vector<64x8xf32>
    %113 = arith.addf %108, %112 : vector<64x8xf32>
    %c0_144 = arith.constant 0 : index
    %c0_145 = arith.constant 0 : index
    %114 = vector.load %arg6[%c0_144, %c0_145] : memref<1x8xf32, #tpu.memory_space<vmem>>, vector<1x8xf32>
    %115 = vector.broadcast %114 : vector<1x8xf32> to vector<64x8xf32>
    %116 = arith.mulf %113, %115 : vector<64x8xf32>
    %c0_146 = arith.constant 0 : index
    %c0_147 = arith.constant 0 : index
    %117 = vector.load %arg7[%c0_146, %c0_147] : memref<1x8xf32, #tpu.memory_space<vmem>>, vector<1x8xf32>
    %118 = vector.broadcast %117 : vector<1x8xf32> to vector<64x8xf32>
    %119 = arith.addf %116, %118 : vector<64x8xf32>
    %c0_148 = arith.constant 0 : index
    %c0_149 = arith.constant 0 : index
    %120 = vector.load %arg8[%c0_148, %c0_149] : memref<4x8xbf16, #tpu.memory_space<vmem>>, vector<4x8xbf16>
    %cst_150 = arith.constant dense<0.000000e+00> : vector<64x8xf32>
    %121 = tpu.matmul %25, %120, %cst_150 {dimension_numbers = #tpu.dot_dimension_numbers<[1], [0], [0], [1], [0, 0, 1, 1], [], []>} : vector<64x4xbf16>, vector<4x8xbf16>, vector<64x8xf32> -> vector<64x8xf32>
    %c0_151 = arith.constant 0 : index
    %c0_152 = arith.constant 0 : index
    %122 = vector.load %arg9[%c0_151, %c0_152] : memref<1x8xf32, #tpu.memory_space<vmem>>, vector<1x8xf32>
    %123 = vector.broadcast %122 : vector<1x8xf32> to vector<64x8xf32>
    %124 = arith.mulf %121, %123 : vector<64x8xf32>
    %c0_153 = arith.constant 0 : index
    %c0_154 = arith.constant 0 : index
    %125 = vector.load %arg10[%c0_153, %c0_154] : memref<1x8xf32, #tpu.memory_space<vmem>>, vector<1x8xf32>
    %126 = vector.broadcast %125 : vector<1x8xf32> to vector<64x8xf32>
    %127 = arith.addf %124, %126 : vector<64x8xf32>
    %128 = arith.addf %119, %127 : vector<64x8xf32>
    %cst_155 = arith.constant 0.000000e+00 : f32
    %129 = vector.broadcast %cst_155 : f32 to vector<64x8xf32>
    %130 = arith.maximumf %128, %129 : vector<64x8xf32>
    %c0_156 = arith.constant 0 : index
    %c0_157 = arith.constant 0 : index
    %131 = vector.load %arg11[%c0_156, %c0_157] : memref<64x8xf32, #tpu.memory_space<vmem>>, vector<64x8xf32>
    tpu.vector_store %arg11[%c0_156, %c0_157], %130 {strides = array<i32>} : memref<64x8xf32, #tpu.memory_space<vmem>>, vector<64x8xf32>,
    %c0_158 = arith.constant 0 : index
    %c0_159 = arith.constant 0 : index
    %132 = vector.load %arg12[%c0_158, %c0_159] : memref<64x8xf32, #tpu.memory_space<vmem>>, vector<64x8xf32>
    tpu.vector_store %arg12[%c0_158, %c0_159], %128 {strides = array<i32>} : memref<64x8xf32, #tpu.memory_space<vmem>>, vector<64x8xf32>,
    return
  }
  func.func @transform_0(%arg0: i32) -> (i32, i32, i32, i32, i32) {
    %c0_i32 = arith.constant 0 : i32
    %c0_i32_0 = arith.constant 0 : i32
    %c0_i32_1 = arith.constant 0 : i32
    %c0_i32_2 = arith.constant 0 : i32
    %c0_i32_3 = arith.constant 0 : i32
    return %arg0, %c0_i32, %c0_i32_0, %c0_i32_1, %c0_i32_2 : i32, i32, i32, i32, i32
  }
  func.func @transform_1(%arg0: i32) -> (i32, i32) {
    %c0_i32 = arith.constant 0 : i32
    %c0_i32_0 = arith.constant 0 : i32
    %c0_i32_1 = arith.constant 0 : i32
    return %c0_i32, %c0_i32_0 : i32, i32
  }
  func.func @transform_2(%arg0: i32) -> (i32, i32) {
    %c0_i32 = arith.constant 0 : i32
    %c0_i32_0 = arith.constant 0 : i32
    %c0_i32_1 = arith.constant 0 : i32
    return %c0_i32, %c0_i32_0 : i32, i32
  }
  func.func @transform_3(%arg0: i32) -> (i32, i32) {
    %c0_i32 = arith.constant 0 : i32
    %c0_i32_0 = arith.constant 0 : i32
    %c0_i32_1 = arith.constant 0 : i32
    return %c0_i32, %c0_i32_0 : i32, i32
  }
  func.func @transform_4(%arg0: i32) -> (i32, i32) {
    %c0_i32 = arith.constant 0 : i32
    %c0_i32_0 = arith.constant 0 : i32
    %c0_i32_1 = arith.constant 0 : i32
    return %c0_i32, %c0_i32_0 : i32, i32
  }
  func.func @transform_5(%arg0: i32) -> (i32, i32) {
    %c0_i32 = arith.constant 0 : i32
    %c0_i32_0 = arith.constant 0 : i32
    %c0_i32_1 = arith.constant 0 : i32
    return %c0_i32, %c0_i32_0 : i32, i32
  }
  func.func @transform_6(%arg0: i32) -> (i32, i32) {
    %c0_i32 = arith.constant 0 : i32
    %c0_i32_0 = arith.constant 0 : i32
    %c0_i32_1 = arith.constant 0 : i32
    return %c0_i32, %c0_i32_0 : i32, i32
  }
  func.func @transform_7(%arg0: i32) -> (i32, i32) {
    %c0_i32 = arith.constant 0 : i32
    %c0_i32_0 = arith.constant 0 : i32
    %c0_i32_1 = arith.constant 0 : i32
    return %c0_i32, %c0_i32_0 : i32, i32
  }
  func.func @transform_8(%arg0: i32) -> (i32, i32) {
    %c0_i32 = arith.constant 0 : i32
    %c0_i32_0 = arith.constant 0 : i32
    %c0_i32_1 = arith.constant 0 : i32
    return %c0_i32, %c0_i32_0 : i32, i32
  }
  func.func @transform_9(%arg0: i32) -> (i32, i32) {
    %c0_i32 = arith.constant 0 : i32
    %c0_i32_0 = arith.constant 0 : i32
    %c0_i32_1 = arith.constant 0 : i32
    return %c0_i32, %c0_i32_0 : i32, i32
  }
  func.func @transform_10(%arg0: i32) -> (i32, i32) {
    %c0_i32 = arith.constant 0 : i32
    %c0_i32_0 = arith.constant 0 : i32
    return %arg0, %c0_i32 : i32, i32
  }
  func.func @transform_11(%arg0: i32) -> (i32, i32) {
    %c0_i32 = arith.constant 0 : i32
    %c0_i32_0 = arith.constant 0 : i32
    return %arg0, %c0_i32 : i32, i32
  }
}

</mosaic_0001>

<llo_original>
// kernel: tpu_custom_call.1
$region0: #{tpu_custom_call.1}
  #allocation0 [shape = 'u32[]', space=smem, size = 0x4, offset = 0x4, fixed_abs, tag = 'smem constant byte address 0x4 - core index']
  #allocation1 [shape = 'u32[144,128]{1,0:T(1,128)}', space=vmem, size = 0x12000, scoped, tag = 'internal scratch']
  #allocation2 [shape = 'bf16[1,10,10,8]{3,2,1,0:T(8,128)(2,1)}', space=vmem, size = 0xa000, scoped, tag = 'scratch operand']
  %s0 = inlined_call_operand.vmem [shape: bf16[2,4,9,9,4], index: 0, kind: input, shape index: {}]
  %s1 = inlined_call_operand.vmem [shape: bf16[36,8], index: 1, kind: input, shape index: {}]
  %s2 = inlined_call_operand.vmem [shape: f32[1,8], index: 2, kind: input, shape index: {}]
  %s3 = inlined_call_operand.vmem [shape: f32[1,8], index: 3, kind: input, shape index: {}]
  %s4 = inlined_call_operand.vmem [shape: bf16[72,8], index: 4, kind: input, shape index: {}]
  %s5 = inlined_call_operand.vmem [shape: f32[1,8], index: 5, kind: input, shape index: {}]
  %s6 = inlined_call_operand.vmem [shape: f32[1,8], index: 6, kind: input, shape index: {}]
  %s7 = inlined_call_operand.vmem [shape: bf16[4,8], index: 7, kind: input, shape index: {}]
  %s8 = inlined_call_operand.vmem [shape: f32[1,8], index: 8, kind: input, shape index: {}]
  %s9 = inlined_call_operand.vmem [shape: f32[1,8], index: 9, kind: input, shape index: {}]
  %s10 = inlined_call_operand.vmem [shape: f32[128,8], index: 10, kind: output, shape index: {0}]
  %s11 = inlined_call_operand.vmem [shape: f32[128,8], index: 11, kind: output, shape index: {1}]
  %12 = xla_tuple %s10, %s11
  %s13 = sld [smem:[#allocation0]]
  $region81: #{tpu_custom_call.1} parent=0
    _
  %s15 = ssub.s32 1, %s13
  %s16 = scalar_select 0, %s15, %s13
  loop: start=0, step=1, limit=4
  $region2: #{tpu_custom_call.1} parent=0 // loop_pre_header
    _
  $region3: #{tpu_custom_call.1} parent=0 // loop_header
    %s18 = sphi 0, %s22
    %p19 = scmp.ge.s32.totalorder %s18, 4
    %s28 = sphi 0, %s30
    %s31 = sphi 0, %s28
    %s32 = sphi 0, %s31
    %s48 = sphi 0, %s32
    %s52 = sphi 0, %s52
    %s54 = sphi 0, %s52
    %s55 = sphi 0, %s54
    %s69 = sphi 0, %s55
    %s73 = sphi 0, %s73
    %s75 = sphi 0, %s73
    %s76 = sphi 0, %s75
    %s90 = sphi 0, %s76
    %s94 = sphi 0, %s94
    %s96 = sphi 0, %s94
    %s97 = sphi 0, %s96
    %s111 = sphi 0, %s97
    %s115 = sphi 0, %s115
    %s117 = sphi 0, %s115
    %s118 = sphi 0, %s117
    %s132 = sphi 0, %s118
    %s136 = sphi 0, %s136
    %s138 = sphi 0, %s136
    %s139 = sphi 0, %s138
    %s153 = sphi 0, %s139
    %s157 = sphi 0, %s157
    %s159 = sphi 0, %s157
    %s160 = sphi 0, %s159
    %s174 = sphi 0, %s160
    %s178 = sphi 0, %s178
    %s180 = sphi 0, %s178
    %s181 = sphi 0, %s180
    %s195 = sphi 0, %s181
    %s199 = sphi 0, %s199
    %s201 = sphi 0, %s199
    %s202 = sphi 0, %s201
    %s216 = sphi 0, %s202
    %s220 = sphi 0, %s220
    %s222 = sphi 0, %s220
    %s223 = sphi 0, %s222
    %s237 = sphi 0, %s223
    %s243 = sphi 0, %s245
    %s246 = sphi 0, %s243
    %s247 = sphi 0, %s246
    %s263 = sphi 0, %s247
    %s269 = sphi 0, %s271
    %s272 = sphi 0, %s269
    %s273 = sphi 0, %s272
    %s289 = sphi 0, %s273
  $region4: #{tpu_custom_call.1} parent=0 // loop_header_branch
    %21 = sbr.rel (%p19) target = $region8
  $region5: #{tpu_custom_call.1} parent=0 // loop_body
    %s23 = ssub.s32 %s18, 1
    %s24 = ssub.s32 %s18, 2
    %s25 = sadd.s32 %s18, 1
    %s26 = ssub.s32 %s18, %s25
    %p27 = scmp.eq.s32.totalorder %s26, 0
    %s29 = sadd.s32 %s28, 1
    %s30 = scalar_select %p27, %s28, %s29
    %p33 = pneg %p27
    %p34 = scmp.eq.s32.totalorder %s18, 1
    %p35 = por %p33, %p34
    %p36 = scmp.ne.s32.totalorder %s28, %s31
    %p37 = scmp.eq.s32.totalorder %s18, 0
    %p38 = por %p36, %p37
    %p39 = scmp.ne.s32.totalorder %s28, %s31
    %p40 = scmp.eq.s32.totalorder %s23, 1
    %p41 = por %p39, %p40
    %p42 = scmp.ne.s32.totalorder %s31, %s32
    %p43 = scmp.eq.s32.totalorder %s23, 0
    %p44 = por %p42, %p43
    %p45 = scmp.ne.s32.totalorder %s31, %s32
    %p46 = scmp.eq.s32.totalorder %s24, 1
    %p47 = por %p45, %p46
    %p49 = scmp.ne.s32.totalorder %s32, %s48
    %p50 = scmp.eq.s32.totalorder %s24, 0
    %p51 = por %p49, %p50
    %s53 = sadd.s32 %s52, 1
    %p56 = scmp.eq.s32.totalorder %s18, 1
    %p57 = scmp.ne.s32.totalorder %s52, %s54
    %p58 = scmp.eq.s32.totalorder %s18, 0
    %p59 = por %p57, %p58
    %p60 = scmp.ne.s32.totalorder %s52, %s54
    %p61 = scmp.eq.s32.totalorder %s23, 1
    %p62 = por %p60, %p61
    %p63 = scmp.ne.s32.totalorder %s54, %s55
    %p64 = scmp.eq.s32.totalorder %s23, 0
    %p65 = por %p63, %p64
    %p66 = scmp.ne.s32.totalorder %s54, %s55
    %p67 = scmp.eq.s32.totalorder %s24, 1
    %p68 = por %p66, %p67
    %p70 = scmp.ne.s32.totalorder %s55, %s69
    %p71 = scmp.eq.s32.totalorder %s24, 0
    %p72 = por %p70, %p71
    %s74 = sadd.s32 %s73, 1
    %p77 = scmp.eq.s32.totalorder %s18, 1
    %p78 = scmp.ne.s32.totalorder %s73, %s75
    %p79 = scmp.eq.s32.totalorder %s18, 0
    %p80 = por %p78, %p79
    %p81 = scmp.ne.s32.totalorder %s73, %s75
    %p82 = scmp.eq.s32.totalorder %s23, 1
    %p83 = por %p81, %p82
    %p84 = scmp.ne.s32.totalorder %s75, %s76
    %p85 = scmp.eq.s32.totalorder %s23, 0
    %p86 = por %p84, %p85
    %p87 = scmp.ne.s32.totalorder %s75, %s76
    %p88 = scmp.eq.s32.totalorder %s24, 1
    %p89 = por %p87, %p88
    %p91 = scmp.ne.s32.totalorder %s76, %s90
    %p92 = scmp.eq.s32.totalorder %s24, 0
    %p93 = por %p91, %p92
    %s95 = sadd.s32 %s94, 1
    %p98 = scmp.eq.s32.totalorder %s18, 1
    %p99 = scmp.ne.s32.totalorder %s94, %s96
    %p100 = scmp.eq.s32.totalorder %s18, 0
    %p101 = por %p99, %p100
    %p102 = scmp.ne.s32.totalorder %s94, %s96
    %p103 = scmp.eq.s32.totalorder %s23, 1
    %p104 = por %p102, %p103
    %p105 = scmp.ne.s32.totalorder %s96, %s97
    %p106 = scmp.eq.s32.totalorder %s23, 0
    %p107 = por %p105, %p106
    %p108 = scmp.ne.s32.totalorder %s96, %s97
    %p109 = scmp.eq.s32.totalorder %s24, 1
    %p110 = por %p108, %p109
    %p112 = scmp.ne.s32.totalorder %s97, %s111
    %p113 = scmp.eq.s32.totalorder %s24, 0
    %p114 = por %p112, %p113
    %s116 = sadd.s32 %s115, 1
    %p119 = scmp.eq.s32.totalorder %s18, 1
    %p120 = scmp.ne.s32.totalorder %s115, %s117
    %p121 = scmp.eq.s32.totalorder %s18, 0
    %p122 = por %p120, %p121
    %p123 = scmp.ne.s32.totalorder %s115, %s117
    %p124 = scmp.eq.s32.totalorder %s23, 1
    %p125 = por %p123, %p124
    %p126 = scmp.ne.s32.totalorder %s117, %s118
    %p127 = scmp.eq.s32.totalorder %s23, 0
    %p128 = por %p126, %p127
    %p129 = scmp.ne.s32.totalorder %s117, %s118
    %p130 = scmp.eq.s32.totalorder %s24, 1
    %p131 = por %p129, %p130
    %p133 = scmp.ne.s32.totalorder %s118, %s132
    %p134 = scmp.eq.s32.totalorder %s24, 0
    %p135 = por %p133, %p134
    %s137 = sadd.s32 %s136, 1
    %p140 = scmp.eq.s32.totalorder %s18, 1
    %p141 = scmp.ne.s32.totalorder %s136, %s138
    %p142 = scmp.eq.s32.totalorder %s18, 0
    %p143 = por %p141, %p142
    %p144 = scmp.ne.s32.totalorder %s136, %s138
    %p145 = scmp.eq.s32.totalorder %s23, 1
    %p146 = por %p144, %p145
    %p147 = scmp.ne.s32.totalorder %s138, %s139
    %p148 = scmp.eq.s32.totalorder %s23, 0
    %p149 = por %p147, %p148
    %p150 = scmp.ne.s32.totalorder %s138, %s139
    %p151 = scmp.eq.s32.totalorder %s24, 1
    %p152 = por %p150, %p151
    %p154 = scmp.ne.s32.totalorder %s139, %s153
    %p155 = scmp.eq.s32.totalorder %s24, 0
    %p156 = por %p154, %p155
    %s158 = sadd.s32 %s157, 1
    %p161 = scmp.eq.s32.totalorder %s18, 1
    %p162 = scmp.ne.s32.totalorder %s157, %s159
    %p163 = scmp.eq.s32.totalorder %s18, 0
    %p164 = por %p162, %p163
    %p165 = scmp.ne.s32.totalorder %s157, %s159
    %p166 = scmp.eq.s32.totalorder %s23, 1
    %p167 = por %p165, %p166
    %p168 = scmp.ne.s32.totalorder %s159, %s160
    %p169 = scmp.eq.s32.totalorder %s23, 0
    %p170 = por %p168, %p169
    %p171 = scmp.ne.s32.totalorder %s159, %s160
    %p172 = scmp.eq.s32.totalorder %s24, 1
    %p173 = por %p171, %p172
    %p175 = scmp.ne.s32.totalorder %s160, %s174
    %p176 = scmp.eq.s32.totalorder %s24, 0
    %p177 = por %p175, %p176
    %s179 = sadd.s32 %s178, 1
    %p182 = scmp.eq.s32.totalorder %s18, 1
    %p183 = scmp.ne.s32.totalorder %s178, %s180
    %p184 = scmp.eq.s32.totalorder %s18, 0
    %p185 = por %p183, %p184
    %p186 = scmp.ne.s32.totalorder %s178, %s180
    %p187 = scmp.eq.s32.totalorder %s23, 1
    %p188 = por %p186, %p187
    %p189 = scmp.ne.s32.totalorder %s180, %s181
    %p190 = scmp.eq.s32.totalorder %s23, 0
    %p191 = por %p189, %p190
    %p192 = scmp.ne.s32.totalorder %s180, %s181
    %p193 = scmp.eq.s32.totalorder %s24, 1
    %p194 = por %p192, %p193
    %p196 = scmp.ne.s32.totalorder %s181, %s195
    %p197 = scmp.eq.s32.totalorder %s24, 0
    %p198 = por %p196, %p197
    %s200 = sadd.s32 %s199, 1
    %p203 = scmp.eq.s32.totalorder %s18, 1
    %p204 = scmp.ne.s32.totalorder %s199, %s201
    %p205 = scmp.eq.s32.totalorder %s18, 0
    %p206 = por %p204, %p205
    %p207 = scmp.ne.s32.totalorder %s199, %s201
    %p208 = scmp.eq.s32.totalorder %s23, 1
    %p209 = por %p207, %p208
    %p210 = scmp.ne.s32.totalorder %s201, %s202
    %p211 = scmp.eq.s32.totalorder %s23, 0
    %p212 = por %p210, %p211
    %p213 = scmp.ne.s32.totalorder %s201, %s202
    %p214 = scmp.eq.s32.totalorder %s24, 1
    %p215 = por %p213, %p214
    %p217 = scmp.ne.s32.totalorder %s202, %s216
    %p218 = scmp.eq.s32.totalorder %s24, 0
    %p219 = por %p217, %p218
    %s221 = sadd.s32 %s220, 1
    %p224 = scmp.eq.s32.totalorder %s18, 1
    %p225 = scmp.ne.s32.totalorder %s220, %s222
    %p226 = scmp.eq.s32.totalorder %s18, 0
    %p227 = por %p225, %p226
    %p228 = scmp.ne.s32.totalorder %s220, %s222
    %p229 = scmp.eq.s32.totalorder %s23, 1
    %p230 = por %p228, %p229
    %p231 = scmp.ne.s32.totalorder %s222, %s223
    %p232 = scmp.eq.s32.totalorder %s23, 0
    %p233 = por %p231, %p232
    %p234 = scmp.ne.s32.totalorder %s222, %s223
    %p235 = scmp.eq.s32.totalorder %s24, 1
    %p236 = por %p234, %p235
    %p238 = scmp.ne.s32.totalorder %s223, %s237
    %p239 = scmp.eq.s32.totalorder %s24, 0
    %p240 = por %p238, %p239
    %s241 = ssub.s32 %s18, %s25
    %p242 = scmp.eq.s32.totalorder %s241, 0
    %s244 = sadd.s32 %s243, 1
    %s245 = scalar_select %p242, %s243, %s244
    %p248 = pneg %p242
    %p249 = scmp.eq.s32.totalorder %s18, 1
    %p250 = por %p248, %p249
    %p251 = scmp.ne.s32.totalorder %s243, %s246
    %p252 = scmp.eq.s32.totalorder %s18, 0
    %p253 = por %p251, %p252
    %p254 = scmp.ne.s32.totalorder %s243, %s246
    %p255 = scmp.eq.s32.totalorder %s23, 1
    %p256 = por %p254, %p255
    %p257 = scmp.ne.s32.totalorder %s246, %s247
    %p258 = scmp.eq.s32.totalorder %s23, 0
    %p259 = por %p257, %p258
    %p260 = scmp.ne.s32.totalorder %s246, %s247
    %p261 = scmp.eq.s32.totalorder %s24, 1
    %p262 = por %p260, %p261
    %p264 = scmp.ne.s32.totalorder %s247, %s263
    %p265 = scmp.eq.s32.totalorder %s24, 0
    %p266 = por %p264, %p265
    %s267 = ssub.s32 %s18, %s25
    %p268 = scmp.eq.s32.totalorder %s267, 0
    %s270 = sadd.s32 %s269, 1
    %s271 = scalar_select %p268, %s269, %s270
    %p274 = pneg %p268
    %p275 = scmp.eq.s32.totalorder %s18, 1
    %p276 = por %p274, %p275
    %p277 = scmp.ne.s32.totalorder %s269, %s272
    %p278 = scmp.eq.s32.totalorder %s18, 0
    %p279 = por %p277, %p278
    %p280 = scmp.ne.s32.totalorder %s269, %s272
    %p281 = scmp.eq.s32.totalorder %s23, 1
    %p282 = por %p280, %p281
    %p283 = scmp.ne.s32.totalorder %s272, %s273
    %p284 = scmp.eq.s32.totalorder %s23, 0
    %p285 = por %p283, %p284
    %p286 = scmp.ne.s32.totalorder %s272, %s273
    %p287 = scmp.eq.s32.totalorder %s24, 1
    %p288 = por %p286, %p287
    %p290 = scmp.ne.s32.totalorder %s273, %s289
    %p291 = scmp.eq.s32.totalorder %s24, 0
    %p292 = por %p290, %p291
    %p293 = scmp.le.s32.totalorder 1, %s18
    %p294 = scmp.lt.s32.totalorder %s18, 3
    %p295 = pnand %p293, %p294
    %p296 = pneg %p295
    // Predicated region
    $region9: #{tpu_custom_call.1} parent=5 // pred_check
      _
    $region10: #{tpu_custom_call.1} parent=5 // pred_check_branch
      %298 = sbr.rel (%p295) target = $region12
    $region11: #{tpu_custom_call.1} parent=5 // pred_region
      %s299 = ssub.s32 %s18, 1
      // Predicated region
      $region13: #{tpu_custom_call.1} parent=11 // pred_check
        %p300 = pneg %p65
      $region14: #{tpu_custom_call.1} parent=11 // pred_check_branch
        %302 = sbr.rel (%p300) target = $region16
      $region15: #{tpu_custom_call.1} parent=11 // pred_region
        _
      $region16: #{tpu_custom_call.1} parent=11 // pred_fallthru
        _
      // Predicated region
      $region17: #{tpu_custom_call.1} parent=11 // pred_check
        %p303 = pneg %p86
      $region18: #{tpu_custom_call.1} parent=11 // pred_check_branch
        %305 = sbr.rel (%p303) target = $region20
      $region19: #{tpu_custom_call.1} parent=11 // pred_region
        _
      $region20: #{tpu_custom_call.1} parent=11 // pred_fallthru
        _
      // Predicated region
      $region21: #{tpu_custom_call.1} parent=11 // pred_check
        %p306 = pneg %p107
      $region22: #{tpu_custom_call.1} parent=11 // pred_check_branch
        %308 = sbr.rel (%p306) target = $region24
      $region23: #{tpu_custom_call.1} parent=11 // pred_region
        _
      $region24: #{tpu_custom_call.1} parent=11 // pred_fallthru
        _
      // Predicated region
      $region25: #{tpu_custom_call.1} parent=11 // pred_check
        %p309 = pneg %p128
      $region26: #{tpu_custom_call.1} parent=11 // pred_check_branch
        %311 = sbr.rel (%p309) target = $region28
      $region27: #{tpu_custom_call.1} parent=11 // pred_region
        _
      $region28: #{tpu_custom_call.1} parent=11 // pred_fallthru
        _
      // Predicated region
      $region29: #{tpu_custom_call.1} parent=11 // pred_check
        %p312 = pneg %p149
      $region30: #{tpu_custom_call.1} parent=11 // pred_check_branch
        %314 = sbr.rel (%p312) target = $region32
      $region31: #{tpu_custom_call.1} parent=11 // pred_region
        _
      $region32: #{tpu_custom_call.1} parent=11 // pred_fallthru
        _
      // Predicated region
      $region33: #{tpu_custom_call.1} parent=11 // pred_check
        %p315 = pneg %p170
      $region34: #{tpu_custom_call.1} parent=11 // pred_check_branch
        %317 = sbr.rel (%p315) target = $region36
      $region35: #{tpu_custom_call.1} parent=11 // pred_region
        _
      $region36: #{tpu_custom_call.1} parent=11 // pred_fallthru
        _
      // Predicated region
      $region37: #{tpu_custom_call.1} parent=11 // pred_check
        %p318 = pneg %p191
      $region38: #{tpu_custom_call.1} parent=11 // pred_check_branch
        %320 = sbr.rel (%p318) target = $region40
      $region39: #{tpu_custom_call.1} parent=11 // pred_region
        _
      $region40: #{tpu_custom_call.1} parent=11 // pred_fallthru
        _
      // Predicated region
      $region41: #{tpu_custom_call.1} parent=11 // pred_check
        %p321 = pneg %p212
      $region42: #{tpu_custom_call.1} parent=11 // pred_check_branch
        %323 = sbr.rel (%p321) target = $region44
      $region43: #{tpu_custom_call.1} parent=11 // pred_region
        _
      $region44: #{tpu_custom_call.1} parent=11 // pred_fallthru
        _
      // Predicated region
      $region45: #{tpu_custom_call.1} parent=11 // pred_check
        %p324 = pneg %p233
      $region46: #{tpu_custom_call.1} parent=11 // pred_check_branch
        %326 = sbr.rel (%p324) target = $region48
      $region47: #{tpu_custom_call.1} parent=11 // pred_region
        _
      $region48: #{tpu_custom_call.1} parent=11 // pred_fallthru
        _
    $region12: #{tpu_custom_call.1} parent=5 // pred_fallthru
      _
    %p327 = scmp.lt.s32.totalorder %s18, 2
    // Predicated region
    $region49: #{tpu_custom_call.1} parent=5 // pred_check
      %p328 = pneg %p327
    $region50: #{tpu_custom_call.1} parent=5 // pred_check_branch
      %330 = sbr.rel (%p328) target = $region52
    $region51: #{tpu_custom_call.1} parent=5 // pred_region
      // Predicated region
      $region53: #{tpu_custom_call.1} parent=51 // pred_check
        %p331 = pneg %p38
      $region54: #{tpu_custom_call.1} parent=51 // pred_check_branch
        %333 = sbr.rel (%p331) target = $region56
      $region55: #{tpu_custom_call.1} parent=51 // pred_region
        %p334 = scmp.lt.s32.totalorder %s18, 1
        %s335 = scalar_select %p334, %s18, 1
        %s336 = smul.addr %s335, 72
        %s337 = smul.addr %s336, 4
        %s338 = scalar_lea.vmem %s0, %s337
      $region56: #{tpu_custom_call.1} parent=51 // pred_fallthru
        _
    $region52: #{tpu_custom_call.1} parent=5 // pred_fallthru
      _
    %p339 = scmp.le.s32.totalorder 1, %s18
    %p340 = scmp.lt.s32.totalorder %s18, 3
    %p341 = pnand %p339, %p340
    %p342 = pneg %p341
    // Predicated region
    $region57: #{tpu_custom_call.1} parent=5 // pred_check
      _
    $region58: #{tpu_custom_call.1} parent=5 // pred_check_branch
      %344 = sbr.rel (%p341) target = $region60
    $region59: #{tpu_custom_call.1} parent=5 // pred_region
      %s345 = ssub.s32 %s18, 1
      %p346 = scmp.lt.s32.totalorder %s23, 1
      %s347 = scalar_select %p346, %s23, 1
      %s348 = smul.addr %s347, 72
      %s349 = smul.addr %s348, 4
      %s350 = scalar_lea.vmem %s0, %s349
      %p351 = pneg %p44
      %p352 = pneg %p41
      %p353 = pneg %p65
      %p354 = pneg %p62
      %p355 = pneg %p86
      %p356 = pneg %p83
      %p357 = pneg %p107
      %p358 = pneg %p104
      %p359 = pneg %p128
      %p360 = pneg %p125
      %p361 = pneg %p149
      %p362 = pneg %p146
      %p363 = pneg %p170
      %p364 = pneg %p167
      %p365 = pneg %p191
      %p366 = pneg %p188
      %p367 = pneg %p212
      %p368 = pneg %p209
      %p369 = pneg %p233
      %p370 = pneg %p230
      %p371 = pneg %p259
      %p372 = pneg %p256
      %s373 = smul.u32 8, %s23
      %p374 = scmp.lt.s32.totalorder %s373, 15
      %s375 = scalar_select %p374, %s373, 15
      %s376 = smul.addr %s375, 8
      %s377 = scalar_lea.vmem %s10, %s376
      %p378 = pneg %p285
      %p379 = pneg %p282
      %s380 = smul.u32 8, %s23
      %p381 = scmp.lt.s32.totalorder %s380, 15
      %s382 = scalar_select %p381, %s380, 15
      %s383 = smul.addr %s382, 8
      %s384 = scalar_lea.vmem %s11, %s383
      %p385 = scmp.lt.s32.totalorder %s23, 1
      %s386 = scalar_select %p385, %s23, 1
      %s387 = smul.addr %s386, 72
      %s388 = smul.addr %s387, 4
      %s389 = scalar_lea.vmem %s0, %s388
      %s390 = smul.u32 8, %s23
      %p391 = scmp.lt.s32.totalorder %s390, 15
      %s392 = scalar_select %p391, %s390, 15
      %s393 = smul.addr %s392, 8
      %s394 = scalar_lea.vmem %s10, %s393
      %s395 = smul.u32 8, %s23
      %s396 = smul.u32 8, %s23
      %p397 = scmp.lt.s32.totalorder %s396, 15
      %s398 = scalar_select %p397, %s396, 15
      %s399 = smul.addr %s398, 8
      %s400 = scalar_lea.vmem %s11, %s399
      %s401 = smul.u32 8, %s23
      %v403 = vld [vmem:[%s389] sm:$0xf]
      %v404 = vld [vmem:[%s389 + $0x8] sm:$0xf]
      %v405 = vld [vmem:[%s389 + $0x10] sm:$0xf]
      %v406 = vld [vmem:[%s389 + $0x18] sm:$0xf]
      %v407 = vld [vmem:[%s389 + $0x20] sm:$0xf]
      %v408 = vld [vmem:[%s389 + $0x28] sm:$0xf]
      %v409 = vld [vmem:[%s389 + $0x30] sm:$0xf]
      %v410 = vld [vmem:[%s389 + $0x38] sm:$0xf]
      %v411 = vld [vmem:[%s1] sm:$0x3]
      %s412 = scalar_lea.vmem %s389, 72
      %v413 = vld [vmem:[%s412] sm:$0xf]
      %v414 = vld [vmem:[%s412 + $0x8] sm:$0xf]
      %v415 = vld [vmem:[%s412 + $0x10] sm:$0xf]
      %v416 = vld [vmem:[%s412 + $0x18] sm:$0xf]
      %v417 = vld [vmem:[%s412 + $0x20] sm:$0xf]
      %v418 = vld [vmem:[%s412 + $0x28] sm:$0xf]
      %v419 = vld [vmem:[%s412 + $0x30] sm:$0xf]
      %v420 = vld [vmem:[%s412 + $0x38] sm:$0xf]
      %v421 = vld [vmem:[%s1] sm:$0xc]
      %v430 = vunpack.c.l.b16 %v413
      %v431 = vunpack.c.l.b16 %v414
      %v432 = vunpack.c.l.b16 %v415
      %v433 = vunpack.c.l.b16 %v416
      %v434 = vunpack.c.l.b16 %v417
      %v435 = vunpack.c.l.b16 %v418
      %v436 = vunpack.c.l.b16 %v419
      %v437 = vunpack.c.l.b16 %v420
      %v438 = vpack.c.b16 %v431, %v430
      %v439 = vpack.c.b16 %v433, %v432
      %v440 = vpack.c.b16 %v435, %v434
      %v441 = vpack.c.b16 %v437, %v436
      %v443 = vunpack.c.l.b16 %v421
      %v444 = vpack.c.b16 %v443, %v443
      %v445 = vrot.slane %v444, 2
      %vm446 = vcmask 31744
      %v448 = vsel %vm446, %v438, 0
      %v451 = vsel %vm446, %v439, 0
      %v454 = vsel %vm446, %v440, 0
      %v457 = vsel %vm446, %v441, 0
      %vm459 = vcmask 1041408
      %v461 = vsel %vm459, %v445, 0
      %463 = vmatprep.subr.bf16.mxu0 0
      %464 = vmatpush1.bf16.msra.mxu0 %v461
      %465 = vmatprep.subr.bf16.mxu0 0
      %466 = vmatpush1.bf16.msra.mxu0 0
      %467 = vmatprep.subr.bf16.mxu0 0
      %468 = vmatpush1.bf16.msra.mxu0 0
      %469 = vmatprep.subr.bf16.mxu0 0
      %470 = vmatpush1.bf16.msra.mxu0 0
      %471 = vmatprep.subr.bf16.mxu0 0
      %472 = vmatpush1.bf16.msra.mxu0 0
      %473 = vmatprep.subr.bf16.mxu0 0
      %474 = vmatpush1.bf16.msra.mxu0 0
      %475 = vmatprep.subr.bf16.mxu0 0
      %476 = vmatpush1.bf16.msra.mxu0 0
      %477 = vmatprep.subr.bf16.mxu0 0
      %478 = vmatpush1.bf16.msra.mxu0 0
      %479 = vmatprep.subr.bf16.mxu0 0
      %480 = vmatpush1.bf16.msra.mxu0 0
      %481 = vmatprep.subr.bf16.mxu0 0
      %482 = vmatpush1.bf16.msra.mxu0 0
      %483 = vmatprep.subr.bf16.mxu0 0
      %484 = vmatpush1.bf16.msra.mxu0 0
      %485 = vmatprep.subr.bf16.mxu0 0
      %486 = vmatpush1.bf16.msra.mxu0 0
      %487 = vmatprep.subr.bf16.mxu0 0
      %488 = vmatpush1.bf16.msra.mxu0 0
      %489 = vmatprep.subr.bf16.mxu0 0
      %490 = vmatpush1.bf16.msra.mxu0 0
      %491 = vmatprep.subr.bf16.mxu0 0
      %492 = vmatpush1.bf16.msra.mxu0 0
      %493 = vmatprep.subr.bf16.mxu0 0
      %494 = vmatpush1.bf16.msra.mxu0 0
      %495 = vmatprep.mubr.bf16.mxu0 0
      %496 = vmatmul.mubr.bf16.gmra.mrb[0].mxu0 %v448
      %v497 = vpop.f32.mrb[0].mxu0
      %v498 = vadd.f32 0.0, %v497
      %v499 = vpop.f32.mrb[0].mxu0
      %v500 = vpop.f32.mrb[0].mxu0
      %v501 = vadd.f32 0.0, %v500
      %v502 = vpop.f32.mrb[0].mxu0
      %503 = vmatprep.mubr.bf16.mxu0 0
      %504 = vmatmul.mubr.bf16.gmra.mrb[0].mxu0 %v451
      %v505 = vpop.f32.mrb[0].mxu0
      %v506 = vadd.f32 0.0, %v505
      %v507 = vpop.f32.mrb[0].mxu0
      %v508 = vpop.f32.mrb[0].mxu0
      %v509 = vadd.f32 0.0, %v508
      %v510 = vpop.f32.mrb[0].mxu0
      %511 = vmatprep.mubr.bf16.mxu0 0
      %512 = vmatmul.mubr.bf16.gmra.mrb[0].mxu0 %v454
      %v513 = vpop.f32.mrb[0].mxu0
      %v514 = vadd.f32 0.0, %v513
      %v515 = vpop.f32.mrb[0].mxu0
      %v516 = vpop.f32.mrb[0].mxu0
      %v517 = vadd.f32 0.0, %v516
      %v518 = vpop.f32.mrb[0].mxu0
      %519 = vmatprep.mubr.bf16.mxu0 0
      %520 = vmatmul.mubr.bf16.gmra.mrb[0].mxu0 %v457
      %v521 = vpop.f32.mrb[0].mxu0
      %v522 = vadd.f32 0.0, %v521
      %v523 = vpop.f32.mrb[0].mxu0
      %v524 = vpop.f32.mrb[0].mxu0
      %v525 = vadd.f32 0.0, %v524
      %v526 = vpop.f32.mrb[0].mxu0
      %527 = vdwg.mxu0
      %v536 = vunpack.c.l.b16 %v403
      %v537 = vunpack.c.l.b16 %v404
      %v538 = vunpack.c.l.b16 %v405
      %v539 = vunpack.c.l.b16 %v406
      %v540 = vunpack.c.l.b16 %v407
      %v541 = vunpack.c.l.b16 %v408
      %v542 = vunpack.c.l.b16 %v409
      %v543 = vunpack.c.l.b16 %v410
      %v544 = vpack.c.b16 %v537, %v536
      %v545 = vpack.c.b16 %v539, %v538
      %v546 = vpack.c.b16 %v541, %v540
      %v547 = vpack.c.b16 %v543, %v542
      %v549 = vsel %vm446, %v544, 0
      %v552 = vsel %vm446, %v545, 0
      %v555 = vsel %vm446, %v546, 0
      %v558 = vsel %vm446, %v547, 0
      %v561 = vsel %vm459, %v411, 0
      %563 = vmatprep.subr.bf16.mxu0 0
      %564 = vmatpush1.bf16.msra.mxu0 %v561
      %565 = vmatprep.subr.bf16.mxu0 0
      %566 = vmatpush1.bf16.msra.mxu0 0
      %567 = vmatprep.subr.bf16.mxu0 0
      %568 = vmatpush1.bf16.msra.mxu0 0
      %569 = vmatprep.subr.bf16.mxu0 0
      %570 = vmatpush1.bf16.msra.mxu0 0
      %571 = vmatprep.subr.bf16.mxu0 0
      %572 = vmatpush1.bf16.msra.mxu0 0
      %573 = vmatprep.subr.bf16.mxu0 0
      %574 = vmatpush1.bf16.msra.mxu0 0
      %575 = vmatprep.subr.bf16.mxu0 0
      %576 = vmatpush1.bf16.msra.mxu0 0
      %577 = vmatprep.subr.bf16.mxu0 0
      %578 = vmatpush1.bf16.msra.mxu0 0
      %579 = vmatprep.subr.bf16.mxu0 0
      %580 = vmatpush1.bf16.msra.mxu0 0
      %581 = vmatprep.subr.bf16.mxu0 0
      %582 = vmatpush1.bf16.msra.mxu0 0
      %583 = vmatprep.subr.bf16.mxu0 0
      %584 = vmatpush1.bf16.msra.mxu0 0
      %585 = vmatprep.subr.bf16.mxu0 0
      %586 = vmatpush1.bf16.msra.mxu0 0
      %587 = vmatprep.subr.bf16.mxu0 0
      %588 = vmatpush1.bf16.msra.mxu0 0
      %589 = vmatprep.subr.bf16.mxu0 0
      %590 = vmatpush1.bf16.msra.mxu0 0
      %591 = vmatprep.subr.bf16.mxu0 0
      %592 = vmatpush1.bf16.msra.mxu0 0
      %593 = vmatprep.subr.bf16.mxu0 0
      %594 = vmatpush1.bf16.msra.mxu0 0
      %595 = vmatprep.mubr.bf16.mxu0 0
      %596 = vmatmul.mubr.bf16.gmra.mrb[0].mxu0 %v549
      %v597 = vpop.f32.mrb[0].mxu0
      %v598 = vadd.f32 %v498, %v597
      %v599 = vpop.f32.mrb[0].mxu0
      %v600 = vpop.f32.mrb[0].mxu0
      %v601 = vadd.f32 %v501, %v600
      %v602 = vpop.f32.mrb[0].mxu0
      %603 = vmatprep.mubr.bf16.mxu0 0
      %604 = vmatmul.mubr.bf16.gmra.mrb[0].mxu0 %v552
      %v605 = vpop.f32.mrb[0].mxu0
      %v606 = vadd.f32 %v506, %v605
      %v607 = vpop.f32.mrb[0].mxu0
      %v608 = vpop.f32.mrb[0].mxu0
      %v609 = vadd.f32 %v509, %v608
      %v610 = vpop.f32.mrb[0].mxu0
      %611 = vmatprep.mubr.bf16.mxu0 0
      %612 = vmatmul.mubr.bf16.gmra.mrb[0].mxu0 %v555
      %v613 = vpop.f32.mrb[0].mxu0
      %v614 = vadd.f32 %v514, %v613
      %v615 = vpop.f32.mrb[0].mxu0
      %v616 = vpop.f32.mrb[0].mxu0
      %v617 = vadd.f32 %v517, %v616
      %v618 = vpop.f32.mrb[0].mxu0
      %619 = vmatprep.mubr.bf16.mxu0 0
      %620 = vmatmul.mubr.bf16.gmra.mrb[0].mxu0 %v558
      %v621 = vpop.f32.mrb[0].mxu0
      %v622 = vadd.f32 %v522, %v621
      %v623 = vpop.f32.mrb[0].mxu0
      %v624 = vpop.f32.mrb[0].mxu0
      %v625 = vadd.f32 %v525, %v624
      %v626 = vpop.f32.mrb[0].mxu0
      %627 = vdwg.mxu0
      %v628 = vld [vmem:[%s389] sm:$0xf]
      %v629 = vld [vmem:[%s389 + $0x4] sm:$0x1]
      %v630 = vld [vmem:[%s389 + $0x8] sm:$0xf]
      %v631 = vld [vmem:[%s389 + $0xc] sm:$0x1]
      %v632 = vld [vmem:[%s389 + $0x10] sm:$0xf]
      %v633 = vld [vmem:[%s389 + $0x14] sm:$0x1]
      %v634 = vld [vmem:[%s389 + $0x18] sm:$0xf]
      %v635 = vld [vmem:[%s389 + $0x1c] sm:$0x1]
      %v636 = vld [vmem:[%s389 + $0x20] sm:$0xf]
      %v637 = vld [vmem:[%s389 + $0x24] sm:$0x1]
      %v638 = vld [vmem:[%s389 + $0x28] sm:$0xf]
      %v639 = vld [vmem:[%s389 + $0x2c] sm:$0x1]
      %v640 = vld [vmem:[%s389 + $0x30] sm:$0xf]
      %v641 = vld [vmem:[%s389 + $0x34] sm:$0x1]
      %v642 = vld [vmem:[%s389 + $0x38] sm:$0xf]
      %v643 = vld [vmem:[%s389 + $0x3c] sm:$0x1]
      %vm644 = vsmask.f32 3328
      %vm645 = vsmask.f32 7440
      %vm646 = vmor %vm644, %vm645
      %v648 = vshrl.u32 %v628, 16
      %v650 = vrot.slane %v648, 4
      %v651 = vshll.u32 %v628, 16
      %v653 = vrot.slane %v651, 5
      %v654 = vor.u32 %v650, %v653
      %v655 = vrot.slane %v654, 4
      %v657 = vshll.u32 %v629, 16
      %v659 = vrot.slane %v657, 5
      %v660 = vsel %vm646, %v655, %v659
      %v662 = vshrl.u32 %v630, 16
      %v664 = vrot.slane %v662, 4
      %v665 = vshll.u32 %v630, 16
      %v667 = vrot.slane %v665, 5
      %v668 = vor.u32 %v664, %v667
      %v669 = vrot.slane %v668, 4
      %v671 = vshll.u32 %v631, 16
      %v673 = vrot.slane %v671, 5
      %v674 = vsel %vm646, %v669, %v673
      %v676 = vshrl.u32 %v632, 16
      %v678 = vrot.slane %v676, 4
      %v679 = vshll.u32 %v632, 16
      %v681 = vrot.slane %v679, 5
      %v682 = vor.u32 %v678, %v681
      %v683 = vrot.slane %v682, 4
      %v685 = vshll.u32 %v633, 16
      %v687 = vrot.slane %v685, 5
      %v688 = vsel %vm646, %v683, %v687
      %v690 = vshrl.u32 %v634, 16
      %v692 = vrot.slane %v690, 4
      %v693 = vshll.u32 %v634, 16
      %v695 = vrot.slane %v693, 5
      %v696 = vor.u32 %v692, %v695
      %v697 = vrot.slane %v696, 4
      %v699 = vshll.u32 %v635, 16
      %v701 = vrot.slane %v699, 5
      %v702 = vsel %vm646, %v697, %v701
      %v704 = vshrl.u32 %v636, 16
      %v706 = vrot.slane %v704, 4
      %v707 = vshll.u32 %v636, 16
      %v709 = vrot.slane %v707, 5
      %v710 = vor.u32 %v706, %v709
      %v711 = vrot.slane %v710, 4
      %v713 = vshll.u32 %v637, 16
      %v715 = vrot.slane %v713, 5
      %v716 = vsel %vm646, %v711, %v715
      %v718 = vshrl.u32 %v638, 16
      %v720 = vrot.slane %v718, 4
      %v721 = vshll.u32 %v638, 16
      %v723 = vrot.slane %v721, 5
      %v724 = vor.u32 %v720, %v723
      %v725 = vrot.slane %v724, 4
      %v727 = vshll.u32 %v639, 16
      %v729 = vrot.slane %v727, 5
      %v730 = vsel %vm646, %v725, %v729
      %v732 = vshrl.u32 %v640, 16
      %v734 = vrot.slane %v732, 4
      %v735 = vshll.u32 %v640, 16
      %v737 = vrot.slane %v735, 5
      %v738 = vor.u32 %v734, %v737
      %v739 = vrot.slane %v738, 4
      %v741 = vshll.u32 %v641, 16
      %v743 = vrot.slane %v741, 5
      %v744 = vsel %vm646, %v739, %v743
      %v746 = vshrl.u32 %v642, 16
      %v748 = vrot.slane %v746, 4
      %v749 = vshll.u32 %v642, 16
      %v751 = vrot.slane %v749, 5
      %v752 = vor.u32 %v748, %v751
      %v753 = vrot.slane %v752, 4
      %v755 = vshll.u32 %v643, 16
      %v757 = vrot.slane %v755, 5
      %v758 = vsel %vm646, %v753, %v757
      %v759 = vld [vmem:[%s1 + $0x4] sm:$0x3]
      %v760 = vunpack.c.l.b16 %v660
      %v761 = vunpack.c.l.b16 %v674
      %v762 = vunpack.c.l.b16 %v688
      %v763 = vunpack.c.l.b16 %v702
      %v764 = vunpack.c.l.b16 %v716
      %v765 = vunpack.c.l.b16 %v730
      %v766 = vunpack.c.l.b16 %v744
      %v767 = vunpack.c.l.b16 %v758
      %v768 = vpack.c.b16 %v761, %v760
      %v769 = vpack.c.b16 %v763, %v762
      %v770 = vpack.c.b16 %v765, %v764
      %v771 = vpack.c.b16 %v767, %v766
      %v773 = vsel %vm446, %v768, 0
      %v776 = vsel %vm446, %v769, 0
      %v779 = vsel %vm446, %v770, 0
      %v782 = vsel %vm446, %v771, 0
      %v785 = vsel %vm459, %v759, 0
      %787 = vmatprep.subr.bf16.mxu0 0
      %788 = vmatpush1.bf16.msra.mxu0 %v785
      %789 = vmatprep.subr.bf16.mxu0 0
      %790 = vmatpush1.bf16.msra.mxu0 0
      %791 = vmatprep.subr.bf16.mxu0 0
      %792 = vmatpush1.bf16.msra.mxu0 0
      %793 = vmatprep.subr.bf16.mxu0 0
      %794 = vmatpush1.bf16.msra.mxu0 0
      %795 = vmatprep.subr.bf16.mxu0 0
      %796 = vmatpush1.bf16.msra.mxu0 0
      %797 = vmatprep.subr.bf16.mxu0 0
      %798 = vmatpush1.bf16.msra.mxu0 0
      %799 = vmatprep.subr.bf16.mxu0 0
      %800 = vmatpush1.bf16.msra.mxu0 0
      %801 = vmatprep.subr.bf16.mxu0 0
      %802 = vmatpush1.bf16.msra.mxu0 0
      %803 = vmatprep.subr.bf16.mxu0 0
      %804 = vmatpush1.bf16.msra.mxu0 0
      %805 = vmatprep.subr.bf16.mxu0 0
      %806 = vmatpush1.bf16.msra.mxu0 0
      %807 = vmatprep.subr.bf16.mxu0 0
      %808 = vmatpush1.bf16.msra.mxu0 0
      %809 = vmatprep.subr.bf16.mxu0 0
      %810 = vmatpush1.bf16.msra.mxu0 0
      %811 = vmatprep.subr.bf16.mxu0 0
      %812 = vmatpush1.bf16.msra.mxu0 0
      %813 = vmatprep.subr.bf16.mxu0 0
      %814 = vmatpush1.bf16.msra.mxu0 0
      %815 = vmatprep.subr.bf16.mxu0 0
      %816 = vmatpush1.bf16.msra.mxu0 0
      %817 = vmatprep.subr.bf16.mxu0 0
      %818 = vmatpush1.bf16.msra.mxu0 0
      %819 = vmatprep.mubr.bf16.mxu0 0
      %820 = vmatmul.mubr.bf16.gmra.mrb[0].mxu0 %v773
      %v821 = vpop.f32.mrb[0].mxu0
      %v822 = vadd.f32 0.0, %v821
      %v823 = vpop.f32.mrb[0].mxu0
      %v824 = vpop.f32.mrb[0].mxu0
      %v825 = vadd.f32 0.0, %v824
      %v826 = vpop.f32.mrb[0].mxu0
      %827 = vmatprep.mubr.bf16.mxu0 0
      %828 = vmatmul.mubr.bf16.gmra.mrb[0].mxu0 %v776
      %v829 = vpop.f32.mrb[0].mxu0
      %v830 = vadd.f32 0.0, %v829
      %v831 = vpop.f32.mrb[0].mxu0
      %v832 = vpop.f32.mrb[0].mxu0
      %v833 = vadd.f32 0.0, %v832
      %v834 = vpop.f32.mrb[0].mxu0
      %835 = vmatprep.mubr.bf16.mxu0 0
      %836 = vmatmul.mubr.bf16.gmra.mrb[0].mxu0 %v779
      %v837 = vpop.f32.mrb[0].mxu0
      %v838 = vadd.f32 0.0, %v837
      %v839 = vpop.f32.mrb[0].mxu0
      %v840 = vpop.f32.mrb[0].mxu0
      %v841 = vadd.f32 0.0, %v840
      %v842 = vpop.f32.mrb[0].mxu0
      %843 = vmatprep.mubr.bf16.mxu0 0
      %844 = vmatmul.mubr.bf16.gmra.mrb[0].mxu0 %v782
      %v845 = vpop.f32.mrb[0].mxu0
      %v846 = vadd.f32 0.0, %v845
      %v847 = vpop.f32.mrb[0].mxu0
      %v848 = vpop.f32.mrb[0].mxu0
      %v849 = vadd.f32 0.0, %v848
      %v850 = vpop.f32.mrb[0].mxu0
      %851 = vdwg.mxu0
      %v852 = vadd.f32 %v598, %v822
      %v853 = vadd.f32 %v601, %v825
      %v854 = vadd.f32 %v606, %v830
      %v855 = vadd.f32 %v609, %v833
      %v856 = vadd.f32 %v614, %v838
      %v857 = vadd.f32 %v617, %v841
      %v858 = vadd.f32 %v622, %v846
      %v859 = vadd.f32 %v625, %v849
      %s860 = scalar_lea.vmem %s389, 144
      %v861 = vld [vmem:[%s860] sm:$0xf]
      %v862 = vld [vmem:[%s860 + $0x8] sm:$0xf]
      %v863 = vld [vmem:[%s860 + $0x10] sm:$0xf]
      %v864 = vld [vmem:[%s860 + $0x18] sm:$0xf]
      %v865 = vld [vmem:[%s860 + $0x20] sm:$0xf]
      %v866 = vld [vmem:[%s860 + $0x28] sm:$0xf]
      %v867 = vld [vmem:[%s860 + $0x30] sm:$0xf]
      %v868 = vld [vmem:[%s860 + $0x38] sm:$0xf]
      %v869 = vld [vmem:[%s1 + $0x4] sm:$0xc]
      %v878 = vunpack.c.l.b16 %v861
      %v879 = vunpack.c.l.b16 %v862
      %v880 = vunpack.c.l.b16 %v863
      %v881 = vunpack.c.l.b16 %v864
      %v882 = vunpack.c.l.b16 %v865
      %v883 = vunpack.c.l.b16 %v866
      %v884 = vunpack.c.l.b16 %v867
      %v885 = vunpack.c.l.b16 %v868
      %v886 = vpack.c.b16 %v879, %v878
      %v887 = vpack.c.b16 %v881, %v880
      %v888 = vpack.c.b16 %v883, %v882
      %v889 = vpack.c.b16 %v885, %v884
      %v891 = vunpack.c.l.b16 %v869
      %v892 = vpack.c.b16 %v891, %v891
      %v893 = vrot.slane %v892, 2
      %v895 = vsel %vm446, %v886, 0
      %v898 = vsel %vm446, %v887, 0
      %v901 = vsel %vm446, %v888, 0
      %v904 = vsel %vm446, %v889, 0
      %v907 = vsel %vm459, %v893, 0
      %909 = vmatprep.subr.bf16.mxu0 0
      %910 = vmatpush1.bf16.msra.mxu0 %v907
      %911 = vmatprep.subr.bf16.mxu0 0
      %912 = vmatpush1.bf16.msra.mxu0 0
      %913 = vmatprep.subr.bf16.mxu0 0
      %914 = vmatpush1.bf16.msra.mxu0 0
      %915 = vmatprep.subr.bf16.mxu0 0
      %916 = vmatpush1.bf16.msra.mxu0 0
      %917 = vmatprep.subr.bf16.mxu0 0
      %918 = vmatpush1.bf16.msra.mxu0 0
      %919 = vmatprep.subr.bf16.mxu0 0
      %920 = vmatpush1.bf16.msra.mxu0 0
      %921 = vmatprep.subr.bf16.mxu0 0
      %922 = vmatpush1.bf16.msra.mxu0 0
      %923 = vmatprep.subr.bf16.mxu0 0
      %924 = vmatpush1.bf16.msra.mxu0 0
      %925 = vmatprep.subr.bf16.mxu0 0
      %926 = vmatpush1.bf16.msra.mxu0 0
      %927 = vmatprep.subr.bf16.mxu0 0
      %928 = vmatpush1.bf16.msra.mxu0 0
      %929 = vmatprep.subr.bf16.mxu0 0
      %930 = vmatpush1.bf16.msra.mxu0 0
      %931 = vmatprep.subr.bf16.mxu0 0
      %932 = vmatpush1.bf16.msra.mxu0 0
      %933 = vmatprep.subr.bf16.mxu0 0
      %934 = vmatpush1.bf16.msra.mxu0 0
      %935 = vmatprep.subr.bf16.mxu0 0
      %936 = vmatpush1.bf16.msra.mxu0 0
      %937 = vmatprep.subr.bf16.mxu0 0
      %938 = vmatpush1.bf16.msra.mxu0 0
      %939 = vmatprep.subr.bf16.mxu0 0
      %940 = vmatpush1.bf16.msra.mxu0 0
      %941 = vmatprep.mubr.bf16.mxu0 0
      %942 = vmatmul.mubr.bf16.gmra.mrb[0].mxu0 %v895
      %v943 = vpop.f32.mrb[0].mxu0
      %v944 = vadd.f32 0.0, %v943
      %v945 = vpop.f32.mrb[0].mxu0
      %v946 = vpop.f32.mrb[0].mxu0
      %v947 = vadd.f32 0.0, %v946
      %v948 = vpop.f32.mrb[0].mxu0
      %949 = vmatprep.mubr.bf16.mxu0 0
      %950 = vmatmul.mubr.bf16.gmra.mrb[0].mxu0 %v898
      %v951 = vpop.f32.mrb[0].mxu0
      %v952 = vadd.f32 0.0, %v951
      %v953 = vpop.f32.mrb[0].mxu0
      %v954 = vpop.f32.mrb[0].mxu0
      %v955 = vadd.f32 0.0, %v954
      %v956 = vpop.f32.mrb[0].mxu0
      %957 = vmatprep.mubr.bf16.mxu0 0
      %958 = vmatmul.mubr.bf16.gmra.mrb[0].mxu0 %v901
      %v959 = vpop.f32.mrb[0].mxu0
      %v960 = vadd.f32 0.0, %v959
      %v961 = vpop.f32.mrb[0].mxu0
      %v962 = vpop.f32.mrb[0].mxu0
      %v963 = vadd.f32 0.0, %v962
      %v964 = vpop.f32.mrb[0].mxu0
      %965 = vmatprep.mubr.bf16.mxu0 0
      %966 = vmatmul.mubr.bf16.gmra.mrb[0].mxu0 %v904
      %v967 = vpop.f32.mrb[0].mxu0
      %v968 = vadd.f32 0.0, %v967
      %v969 = vpop.f32.mrb[0].mxu0
      %v970 = vpop.f32.mrb[0].mxu0
      %v971 = vadd.f32 0.0, %v970
      %v972 = vpop.f32.mrb[0].mxu0
      %973 = vdwg.mxu0
      %v974 = vadd.f32 %v852, %v944
      %v975 = vadd.f32 %v853, %v947
      %v976 = vadd.f32 %v854, %v952
      %v977 = vadd.f32 %v855, %v955
      %v978 = vadd.f32 %v856, %v960
      %v979 = vadd.f32 %v857, %v963
      %v980 = vadd.f32 %v858, %v968
      %v981 = vadd.f32 %v859, %v971
      %s982 = scalar_lea.vmem %s389, 216
      %v983 = vld [vmem:[%s982] sm:$0xf]
      %v984 = vld [vmem:[%s982 + $0x8] sm:$0xf]
      %v985 = vld [vmem:[%s982 + $0x10] sm:$0xf]
      %v986 = vld [vmem:[%s982 + $0x18] sm:$0xf]
      %v987 = vld [vmem:[%s982 + $0x20] sm:$0xf]
      %v988 = vld [vmem:[%s982 + $0x28] sm:$0xf]
      %v989 = vld [vmem:[%s982 + $0x30] sm:$0xf]
      %v990 = vld [vmem:[%s982 + $0x38] sm:$0xf]
      %v991 = vld [vmem:[%s1 + $0x8] sm:$0x3]
      %v1000 = vunpack.c.l.b16 %v983
      %v1001 = vunpack.c.l.b16 %v984
      %v1002 = vunpack.c.l.b16 %v985
      %v1003 = vunpack.c.l.b16 %v986
      %v1004 = vunpack.c.l.b16 %v987
      %v1005 = vunpack.c.l.b16 %v988
      %v1006 = vunpack.c.l.b16 %v989
      %v1007 = vunpack.c.l.b16 %v990
      %v1008 = vpack.c.b16 %v1001, %v1000
      %v1009 = vpack.c.b16 %v1003, %v1002
      %v1010 = vpack.c.b16 %v1005, %v1004
      %v1011 = vpack.c.b16 %v1007, %v1006
      %v1013 = vsel %vm446, %v1008, 0
      %v1016 = vsel %vm446, %v1009, 0
      %v1019 = vsel %vm446, %v1010, 0
      %v1022 = vsel %vm446, %v1011, 0
      %v1025 = vsel %vm459, %v991, 0
      %1027 = vmatprep.subr.bf16.mxu0 0
      %1028 = vmatpush1.bf16.msra.mxu0 %v1025
      %1029 = vmatprep.subr.bf16.mxu0 0
      %1030 = vmatpush1.bf16.msra.mxu0 0
      %1031 = vmatprep.subr.bf16.mxu0 0
      %1032 = vmatpush1.bf16.msra.mxu0 0
      %1033 = vmatprep.subr.bf16.mxu0 0
      %1034 = vmatpush1.bf16.msra.mxu0 0
      %1035 = vmatprep.subr.bf16.mxu0 0
      %1036 = vmatpush1.bf16.msra.mxu0 0
      %1037 = vmatprep.subr.bf16.mxu0 0
      %1038 = vmatpush1.bf16.msra.mxu0 0
      %1039 = vmatprep.subr.bf16.mxu0 0
      %1040 = vmatpush1.bf16.msra.mxu0 0
      %1041 = vmatprep.subr.bf16.mxu0 0
      %1042 = vmatpush1.bf16.msra.mxu0 0
      %1043 = vmatprep.subr.bf16.mxu0 0
      %1044 = vmatpush1.bf16.msra.mxu0 0
      %1045 = vmatprep.subr.bf16.mxu0 0
      %1046 = vmatpush1.bf16.msra.mxu0 0
      %1047 = vmatprep.subr.bf16.mxu0 0
      %1048 = vmatpush1.bf16.msra.mxu0 0
      %1049 = vmatprep.subr.bf16.mxu0 0
      %1050 = vmatpush1.bf16.msra.mxu0 0
      %1051 = vmatprep.subr.bf16.mxu0 0
      %1052 = vmatpush1.bf16.msra.mxu0 0
      %1053 = vmatprep.subr.bf16.mxu0 0
      %1054 = vmatpush1.bf16.msra.mxu0 0
      %1055 = vmatprep.subr.bf16.mxu0 0
      %1056 = vmatpush1.bf16.msra.mxu0 0
      %1057 = vmatprep.subr.bf16.mxu0 0
      %1058 = vmatpush1.bf16.msra.mxu0 0
      %1059 = vmatprep.mubr.bf16.mxu0 0
      %1060 = vmatmul.mubr.bf16.gmra.mrb[0].mxu0 %v1013
      %v1061 = vpop.f32.mrb[0].mxu0
      %v1062 = vadd.f32 0.0, %v1061
      %v1063 = vpop.f32.mrb[0].mxu0
      %v1064 = vpop.f32.mrb[0].mxu0
      %v1065 = vadd.f32 0.0, %v1064
      %v1066 = vpop.f32.mrb[0].mxu0
      %1067 = vmatprep.mubr.bf16.mxu0 0
      %1068 = vmatmul.mubr.bf16.gmra.mrb[0].mxu0 %v1016
      %v1069 = vpop.f32.mrb[0].mxu0
      %v1070 = vadd.f32 0.0, %v1069
      %v1071 = vpop.f32.mrb[0].mxu0
      %v1072 = vpop.f32.mrb[0].mxu0
      %v1073 = vadd.f32 0.0, %v1072
      %v1074 = vpop.f32.mrb[0].mxu0
      %1075 = vmatprep.mubr.bf16.mxu0 0
      %1076 = vmatmul.mubr.bf16.gmra.mrb[0].mxu0 %v1019
      %v1077 = vpop.f32.mrb[0].mxu0
      %v1078 = vadd.f32 0.0, %v1077
      %v1079 = vpop.f32.mrb[0].mxu0
      %v1080 = vpop.f32.mrb[0].mxu0
      %v1081 = vadd.f32 0.0, %v1080
      %v1082 = vpop.f32.mrb[0].mxu0
      %1083 = vmatprep.mubr.bf16.mxu0 0
      %1084 = vmatmul.mubr.bf16.gmra.mrb[0].mxu0 %v1022
      %v1085 = vpop.f32.mrb[0].mxu0
      %v1086 = vadd.f32 0.0, %v1085
      %v1087 = vpop.f32.mrb[0].mxu0
      %v1088 = vpop.f32.mrb[0].mxu0
      %v1089 = vadd.f32 0.0, %v1088
      %v1090 = vpop.f32.mrb[0].mxu0
      %1091 = vdwg.mxu0
      %v1092 = vadd.f32 %v974, %v1062
      %v1093 = vadd.f32 %v975, %v1065
      %v1094 = vadd.f32 %v976, %v1070
      %v1095 = vadd.f32 %v977, %v1073
      %v1096 = vadd.f32 %v978, %v1078
      %v1097 = vadd.f32 %v979, %v1081
      %v1098 = vadd.f32 %v980, %v1086
      %v1099 = vadd.f32 %v981, %v1089
      %v1100 = vld [vmem:[%s860] sm:$0xf]
      %v1101 = vld [vmem:[%s860 + $0x4] sm:$0x1]
      %v1102 = vld [vmem:[%s860 + $0x8] sm:$0xf]
      %v1103 = vld [vmem:[%s860 + $0xc] sm:$0x1]
      %v1104 = vld [vmem:[%s860 + $0x10] sm:$0xf]
      %v1105 = vld [vmem:[%s860 + $0x14] sm:$0x1]
      %v1106 = vld [vmem:[%s860 + $0x18] sm:$0xf]
      %v1107 = vld [vmem:[%s860 + $0x1c] sm:$0x1]
      %v1108 = vld [vmem:[%s860 + $0x20] sm:$0xf]
      %v1109 = vld [vmem:[%s860 + $0x24] sm:$0x1]
      %v1110 = vld [vmem:[%s860 + $0x28] sm:$0xf]
      %v1111 = vld [vmem:[%s860 + $0x2c] sm:$0x1]
      %v1112 = vld [vmem:[%s860 + $0x30] sm:$0xf]
      %v1113 = vld [vmem:[%s860 + $0x34] sm:$0x1]
      %v1114 = vld [vmem:[%s860 + $0x38] sm:$0xf]
      %v1115 = vld [vmem:[%s860 + $0x3c] sm:$0x1]
      %v1117 = vshrl.u32 %v1100, 16
      %v1119 = vrot.slane %v1117, 4
      %v1120 = vshll.u32 %v1100, 16
      %v1122 = vrot.slane %v1120, 5
      %v1123 = vor.u32 %v1119, %v1122
      %v1124 = vrot.slane %v1123, 4
      %v1126 = vshll.u32 %v1101, 16
      %v1128 = vrot.slane %v1126, 5
      %v1129 = vsel %vm646, %v1124, %v1128
      %v1131 = vshrl.u32 %v1102, 16
      %v1133 = vrot.slane %v1131, 4
      %v1134 = vshll.u32 %v1102, 16
      %v1136 = vrot.slane %v1134, 5
      %v1137 = vor.u32 %v1133, %v1136
      %v1138 = vrot.slane %v1137, 4
      %v1140 = vshll.u32 %v1103, 16
      %v1142 = vrot.slane %v1140, 5
      %v1143 = vsel %vm646, %v1138, %v1142
      %v1145 = vshrl.u32 %v1104, 16
      %v1147 = vrot.slane %v1145, 4
      %v1148 = vshll.u32 %v1104, 16
      %v1150 = vrot.slane %v1148, 5
      %v1151 = vor.u32 %v1147, %v1150
      %v1152 = vrot.slane %v1151, 4
      %v1154 = vshll.u32 %v1105, 16
      %v1156 = vrot.slane %v1154, 5
      %v1157 = vsel %vm646, %v1152, %v1156
      %v1159 = vshrl.u32 %v1106, 16
      %v1161 = vrot.slane %v1159, 4
      %v1162 = vshll.u32 %v1106, 16
      %v1164 = vrot.slane %v1162, 5
      %v1165 = vor.u32 %v1161, %v1164
      %v1166 = vrot.slane %v1165, 4
      %v1168 = vshll.u32 %v1107, 16
      %v1170 = vrot.slane %v1168, 5
      %v1171 = vsel %vm646, %v1166, %v1170
      %v1173 = vshrl.u32 %v1108, 16
      %v1175 = vrot.slane %v1173, 4
      %v1176 = vshll.u32 %v1108, 16
      %v1178 = vrot.slane %v1176, 5
      %v1179 = vor.u32 %v1175, %v1178
      %v1180 = vrot.slane %v1179, 4
      %v1182 = vshll.u32 %v1109, 16
      %v1184 = vrot.slane %v1182, 5
      %v1185 = vsel %vm646, %v1180, %v1184
      %v1187 = vshrl.u32 %v1110, 16
      %v1189 = vrot.slane %v1187, 4
      %v1190 = vshll.u32 %v1110, 16
      %v1192 = vrot.slane %v1190, 5
      %v1193 = vor.u32 %v1189, %v1192
      %v1194 = vrot.slane %v1193, 4
      %v1196 = vshll.u32 %v1111, 16
      %v1198 = vrot.slane %v1196, 5
      %v1199 = vsel %vm646, %v1194, %v1198
      %v1201 = vshrl.u32 %v1112, 16
      %v1203 = vrot.slane %v1201, 4
      %v1204 = vshll.u32 %v1112, 16
      %v1206 = vrot.slane %v1204, 5
      %v1207 = vor.u32 %v1203, %v1206
      %v1208 = vrot.slane %v1207, 4
      %v1210 = vshll.u32 %v1113, 16
      %v1212 = vrot.slane %v1210, 5
      %v1213 = vsel %vm646, %v1208, %v1212
      %v1215 = vshrl.u32 %v1114, 16
      %v1217 = vrot.slane %v1215, 4
      %v1218 = vshll.u32 %v1114, 16
      %v1220 = vrot.slane %v1218, 5
      %v1221 = vor.u32 %v1217, %v1220
      %v1222 = vrot.slane %v1221, 4
      %v1224 = vshll.u32 %v1115, 16
      %v1226 = vrot.slane %v1224, 5
      %v1227 = vsel %vm646, %v1222, %v1226
      %v1228 = vld [vmem:[%s1 + $0x8] sm:$0xc]
      %v1229 = vunpack.c.l.b16 %v1129
      %v1230 = vunpack.c.l.b16 %v1143
      %v1231 = vunpack.c.l.b16 %v1157
      %v1232 = vunpack.c.l.b16 %v1171
      %v1233 = vunpack.c.l.b16 %v1185
      %v1234 = vunpack.c.l.b16 %v1199
      %v1235 = vunpack.c.l.b16 %v1213
      %v1236 = vunpack.c.l.b16 %v1227
      %v1237 = vpack.c.b16 %v1230, %v1229
      %v1238 = vpack.c.b16 %v1232, %v1231
      %v1239 = vpack.c.b16 %v1234, %v1233
      %v1240 = vpack.c.b16 %v1236, %v1235
      %v1242 = vunpack.c.l.b16 %v1228
      %v1243 = vpack.c.b16 %v1242, %v1242
      %v1244 = vrot.slane %v1243, 2
      %v1246 = vsel %vm446, %v1237, 0
      %v1249 = vsel %vm446, %v1238, 0
      %v1252 = vsel %vm446, %v1239, 0
      %v1255 = vsel %vm446, %v1240, 0
      %v1258 = vsel %vm459, %v1244, 0
      %1260 = vmatprep.subr.bf16.mxu0 0
      %1261 = vmatpush1.bf16.msra.mxu0 %v1258
      %1262 = vmatprep.subr.bf16.mxu0 0
      %1263 = vmatpush1.bf16.msra.mxu0 0
      %1264 = vmatprep.subr.bf16.mxu0 0
      %1265 = vmatpush1.bf16.msra.mxu0 0
      %1266 = vmatprep.subr.bf16.mxu0 0
      %1267 = vmatpush1.bf16.msra.mxu0 0
      %1268 = vmatprep.subr.bf16.mxu0 0
      %1269 = vmatpush1.bf16.msra.mxu0 0
      %1270 = vmatprep.subr.bf16.mxu0 0
      %1271 = vmatpush1.bf16.msra.mxu0 0
      %1272 = vmatprep.subr.bf16.mxu0 0
      %1273 = vmatpush1.bf16.msra.mxu0 0
      %1274 = vmatprep.subr.bf16.mxu0 0
      %1275 = vmatpush1.bf16.msra.mxu0 0
      %1276 = vmatprep.subr.bf16.mxu0 0
      %1277 = vmatpush1.bf16.msra.mxu0 0
      %1278 = vmatprep.subr.bf16.mxu0 0
      %1279 = vmatpush1.bf16.msra.mxu0 0
      %1280 = vmatprep.subr.bf16.mxu0 0
      %1281 = vmatpush1.bf16.msra.mxu0 0
      %1282 = vmatprep.subr.bf16.mxu0 0
      %1283 = vmatpush1.bf16.msra.mxu0 0
      %1284 = vmatprep.subr.bf16.mxu0 0
      %1285 = vmatpush1.bf16.msra.mxu0 0
      %1286 = vmatprep.subr.bf16.mxu0 0
      %1287 = vmatpush1.bf16.msra.mxu0 0
      %1288 = vmatprep.subr.bf16.mxu0 0
      %1289 = vmatpush1.bf16.msra.mxu0 0
      %1290 = vmatprep.subr.bf16.mxu0 0
      %1291 = vmatpush1.bf16.msra.mxu0 0
      %1292 = vmatprep.mubr.bf16.mxu0 0
      %1293 = vmatmul.mubr.bf16.gmra.mrb[0].mxu0 %v1246
      %v1294 = vpop.f32.mrb[0].mxu0
      %v1295 = vadd.f32 0.0, %v1294
      %v1296 = vpop.f32.mrb[0].mxu0
      %v1297 = vpop.f32.mrb[0].mxu0
      %v1298 = vadd.f32 0.0, %v1297
      %v1299 = vpop.f32.mrb[0].mxu0
      %1300 = vmatprep.mubr.bf16.mxu0 0
      %1301 = vmatmul.mubr.bf16.gmra.mrb[0].mxu0 %v1249
      %v1302 = vpop.f32.mrb[0].mxu0
      %v1303 = vadd.f32 0.0, %v1302
      %v1304 = vpop.f32.mrb[0].mxu0
      %v1305 = vpop.f32.mrb[0].mxu0
      %v1306 = vadd.f32 0.0, %v1305
      %v1307 = vpop.f32.mrb[0].mxu0
      %1308 = vmatprep.mubr.bf16.mxu0 0
      %1309 = vmatmul.mubr.bf16.gmra.mrb[0].mxu0 %v1252
      %v1310 = vpop.f32.mrb[0].mxu0
      %v1311 = vadd.f32 0.0, %v1310
      %v1312 = vpop.f32.mrb[0].mxu0
      %v1313 = vpop.f32.mrb[0].mxu0
      %v1314 = vadd.f32 0.0, %v1313
      %v1315 = vpop.f32.mrb[0].mxu0
      %1316 = vmatprep.mubr.bf16.mxu0 0
      %1317 = vmatmul.mubr.bf16.gmra.mrb[0].mxu0 %v1255
      %v1318 = vpop.f32.mrb[0].mxu0
      %v1319 = vadd.f32 0.0, %v1318
      %v1320 = vpop.f32.mrb[0].mxu0
      %v1321 = vpop.f32.mrb[0].mxu0
      %v1322 = vadd.f32 0.0, %v1321
      %v1323 = vpop.f32.mrb[0].mxu0
      %1324 = vdwg.mxu0
      %v1325 = vadd.f32 %v1092, %v1295
      %v1326 = vadd.f32 %v1093, %v1298
      %v1327 = vadd.f32 %v1094, %v1303
      %v1328 = vadd.f32 %v1095, %v1306
      %v1329 = vadd.f32 %v1096, %v1311
      %v1330 = vadd.f32 %v1097, %v1314
      %v1331 = vadd.f32 %v1098, %v1319
      %v1332 = vadd.f32 %v1099, %v1322
      %s1333 = scalar_lea.vmem %s389, 8
      %v1334 = vld [vmem:[%s1333] sm:$0xf]
      %v1335 = vld [vmem:[%s1333 + $0x8] sm:$0xf]
      %v1336 = vld [vmem:[%s1333 + $0x10] sm:$0xf]
      %v1337 = vld [vmem:[%s1333 + $0x18] sm:$0xf]
      %v1338 = vld [vmem:[%s1333 + $0x20] sm:$0xf]
      %v1339 = vld [vmem:[%s1333 + $0x28] sm:$0xf]
      %v1340 = vld [vmem:[%s1333 + $0x30] sm:$0xf]
      %v1341 = vld [vmem:[%s1333 + $0x38] sm:$0xf]
      %v1342 = vld [vmem:[%s1 + $0xc] sm:$0x3]
      %v1351 = vunpack.c.l.b16 %v1334
      %v1352 = vunpack.c.l.b16 %v1335
      %v1353 = vunpack.c.l.b16 %v1336
      %v1354 = vunpack.c.l.b16 %v1337
      %v1355 = vunpack.c.l.b16 %v1338
      %v1356 = vunpack.c.l.b16 %v1339
      %v1357 = vunpack.c.l.b16 %v1340
      %v1358 = vunpack.c.l.b16 %v1341
      %v1359 = vpack.c.b16 %v1352, %v1351
      %v1360 = vpack.c.b16 %v1354, %v1353
      %v1361 = vpack.c.b16 %v1356, %v1355
      %v1362 = vpack.c.b16 %v1358, %v1357
      %v1364 = vsel %vm446, %v1359, 0
      %v1367 = vsel %vm446, %v1360, 0
      %v1370 = vsel %vm446, %v1361, 0
      %v1373 = vsel %vm446, %v1362, 0
      %v1376 = vsel %vm459, %v1342, 0
      %1378 = vmatprep.subr.bf16.mxu0 0
      %1379 = vmatpush1.bf16.msra.mxu0 %v1376
      %1380 = vmatprep.subr.bf16.mxu0 0
      %1381 = vmatpush1.bf16.msra.mxu0 0
      %1382 = vmatprep.subr.bf16.mxu0 0
      %1383 = vmatpush1.bf16.msra.mxu0 0
      %1384 = vmatprep.subr.bf16.mxu0 0
      %1385 = vmatpush1.bf16.msra.mxu0 0
      %1386 = vmatprep.subr.bf16.mxu0 0
      %1387 = vmatpush1.bf16.msra.mxu0 0
      %1388 = vmatprep.subr.bf16.mxu0 0
      %1389 = vmatpush1.bf16.msra.mxu0 0
      %1390 = vmatprep.subr.bf16.mxu0 0
      %1391 = vmatpush1.bf16.msra.mxu0 0
      %1392 = vmatprep.subr.bf16.mxu0 0
      %1393 = vmatpush1.bf16.msra.mxu0 0
      %1394 = vmatprep.subr.bf16.mxu0 0
      %1395 = vmatpush1.bf16.msra.mxu0 0
      %1396 = vmatprep.subr.bf16.mxu0 0
      %1397 = vmatpush1.bf16.msra.mxu0 0
      %1398 = vmatprep.subr.bf16.mxu0 0
      %1399 = vmatpush1.bf16.msra.mxu0 0
      %1400 = vmatprep.subr.bf16.mxu0 0
      %1401 = vmatpush1.bf16.msra.mxu0 0
      %1402 = vmatprep.subr.bf16.mxu0 0
      %1403 = vmatpush1.bf16.msra.mxu0 0
      %1404 = vmatprep.subr.bf16.mxu0 0
      %1405 = vmatpush1.bf16.msra.mxu0 0
      %1406 = vmatprep.subr.bf16.mxu0 0
      %1407 = vmatpush1.bf16.msra.mxu0 0
      %1408 = vmatprep.subr.bf16.mxu0 0
      %1409 = vmatpush1.bf16.msra.mxu0 0
      %1410 = vmatprep.mubr.bf16.mxu0 0
      %1411 = vmatmul.mubr.bf16.gmra.mrb[0].mxu0 %v1364
      %v1412 = vpop.f32.mrb[0].mxu0
      %v1413 = vadd.f32 0.0, %v1412
      %v1414 = vpop.f32.mrb[0].mxu0
      %v1415 = vpop.f32.mrb[0].mxu0
      %v1416 = vadd.f32 0.0, %v1415
      %v1417 = vpop.f32.mrb[0].mxu0
      %1418 = vmatprep.mubr.bf16.mxu0 0
      %1419 = vmatmul.mubr.bf16.gmra.mrb[0].mxu0 %v1367
      %v1420 = vpop.f32.mrb[0].mxu0
      %v1421 = vadd.f32 0.0, %v1420
      %v1422 = vpop.f32.mrb[0].mxu0
      %v1423 = vpop.f32.mrb[0].mxu0
      %v1424 = vadd.f32 0.0, %v1423
      %v1425 = vpop.f32.mrb[0].mxu0
      %1426 = vmatprep.mubr.bf16.mxu0 0
      %1427 = vmatmul.mubr.bf16.gmra.mrb[0].mxu0 %v1370
      %v1428 = vpop.f32.mrb[0].mxu0
      %v1429 = vadd.f32 0.0, %v1428
      %v1430 = vpop.f32.mrb[0].mxu0
      %v1431 = vpop.f32.mrb[0].mxu0
      %v1432 = vadd.f32 0.0, %v1431
      %v1433 = vpop.f32.mrb[0].mxu0
      %1434 = vmatprep.mubr.bf16.mxu0 0
      %1435 = vmatmul.mubr.bf16.gmra.mrb[0].mxu0 %v1373
      %v1436 = vpop.f32.mrb[0].mxu0
      %v1437 = vadd.f32 0.0, %v1436
      %v1438 = vpop.f32.mrb[0].mxu0
      %v1439 = vpop.f32.mrb[0].mxu0
      %v1440 = vadd.f32 0.0, %v1439
      %v1441 = vpop.f32.mrb[0].mxu0
      %1442 = vdwg.mxu0
      %v1443 = vadd.f32 %v1325, %v1413
      %v1444 = vadd.f32 %v1326, %v1416
      %v1445 = vadd.f32 %v1327, %v1421
      %v1446 = vadd.f32 %v1328, %v1424
      %v1447 = vadd.f32 %v1329, %v1429
      %v1448 = vadd.f32 %v1330, %v1432
      %v1449 = vadd.f32 %v1331, %v1437
      %v1450 = vadd.f32 %v1332, %v1440
      %s1451 = scalar_lea.vmem %s389, 80
      %v1452 = vld [vmem:[%s1451] sm:$0xf]
      %v1453 = vld [vmem:[%s1451 + $0x8] sm:$0xf]
      %v1454 = vld [vmem:[%s1451 + $0x10] sm:$0xf]
      %v1455 = vld [vmem:[%s1451 + $0x18] sm:$0xf]
      %v1456 = vld [vmem:[%s1451 + $0x20] sm:$0xf]
      %v1457 = vld [vmem:[%s1451 + $0x28] sm:$0xf]
      %v1458 = vld [vmem:[%s1451 + $0x30] sm:$0xf]
      %v1459 = vld [vmem:[%s1451 + $0x38] sm:$0xf]
      %v1460 = vld [vmem:[%s1 + $0xc] sm:$0xc]
      %v1469 = vunpack.c.l.b16 %v1452
      %v1470 = vunpack.c.l.b16 %v1453
      %v1471 = vunpack.c.l.b16 %v1454
      %v1472 = vunpack.c.l.b16 %v1455
      %v1473 = vunpack.c.l.b16 %v1456
      %v1474 = vunpack.c.l.b16 %v1457
      %v1475 = vunpack.c.l.b16 %v1458
      %v1476 = vunpack.c.l.b16 %v1459
      %v1477 = vpack.c.b16 %v1470, %v1469
      %v1478 = vpack.c.b16 %v1472, %v1471
      %v1479 = vpack.c.b16 %v1474, %v1473
      %v1480 = vpack.c.b16 %v1476, %v1475
      %v1482 = vunpack.c.l.b16 %v1460
      %v1483 = vpack.c.b16 %v1482, %v1482
      %v1484 = vrot.slane %v1483, 2
      %v1486 = vsel %vm446, %v1477, 0
      %v1489 = vsel %vm446, %v1478, 0
      %v1492 = vsel %vm446, %v1479, 0
      %v1495 = vsel %vm446, %v1480, 0
      %v1498 = vsel %vm459, %v1484, 0
      %1500 = vmatprep.subr.bf16.mxu0 0
      %1501 = vmatpush1.bf16.msra.mxu0 %v1498
      %1502 = vmatprep.subr.bf16.mxu0 0
      %1503 = vmatpush1.bf16.msra.mxu0 0
      %1504 = vmatprep.subr.bf16.mxu0 0
      %1505 = vmatpush1.bf16.msra.mxu0 0
      %1506 = vmatprep.subr.bf16.mxu0 0
      %1507 = vmatpush1.bf16.msra.mxu0 0
      %1508 = vmatprep.subr.bf16.mxu0 0
      %1509 = vmatpush1.bf16.msra.mxu0 0
      %1510 = vmatprep.subr.bf16.mxu0 0
      %1511 = vmatpush1.bf16.msra.mxu0 0
      %1512 = vmatprep.subr.bf16.mxu0 0
      %1513 = vmatpush1.bf16.msra.mxu0 0
      %1514 = vmatprep.subr.bf16.mxu0 0
      %1515 = vmatpush1.bf16.msra.mxu0 0
      %1516 = vmatprep.subr.bf16.mxu0 0
      %1517 = vmatpush1.bf16.msra.mxu0 0
      %1518 = vmatprep.subr.bf16.mxu0 0
      %1519 = vmatpush1.bf16.msra.mxu0 0
      %1520 = vmatprep.subr.bf16.mxu0 0
      %1521 = vmatpush1.bf16.msra.mxu0 0
      %1522 = vmatprep.subr.bf16.mxu0 0
      %1523 = vmatpush1.bf16.msra.mxu0 0
      %1524 = vmatprep.subr.bf16.mxu0 0
      %1525 = vmatpush1.bf16.msra.mxu0 0
      %1526 = vmatprep.subr.bf16.mxu0 0
      %1527 = vmatpush1.bf16.msra.mxu0 0
      %1528 = vmatprep.subr.bf16.mxu0 0
      %1529 = vmatpush1.bf16.msra.mxu0 0
      %1530 = vmatprep.subr.bf16.mxu0 0
      %1531 = vmatpush1.bf16.msra.mxu0 0
      %1532 = vmatprep.mubr.bf16.mxu0 0
      %1533 = vmatmul.mubr.bf16.gmra.mrb[0].mxu0 %v1486
      %v1534 = vpop.f32.mrb[0].mxu0
      %v1535 = vadd.f32 0.0, %v1534
      %v1536 = vpop.f32.mrb[0].mxu0
      %v1537 = vpop.f32.mrb[0].mxu0
      %v1538 = vadd.f32 0.0, %v1537
      %v1539 = vpop.f32.mrb[0].mxu0
      %1540 = vmatprep.mubr.bf16.mxu0 0
      %1541 = vmatmul.mubr.bf16.gmra.mrb[0].mxu0 %v1489
      %v1542 = vpop.f32.mrb[0].mxu0
      %v1543 = vadd.f32 0.0, %v1542
      %v1544 = vpop.f32.mrb[0].mxu0
      %v1545 = vpop.f32.mrb[0].mxu0
      %v1546 = vadd.f32 0.0, %v1545
      %v1547 = vpop.f32.mrb[0].mxu0
      %1548 = vmatprep.mubr.bf16.mxu0 0
      %1549 = vmatmul.mubr.bf16.gmra.mrb[0].mxu0 %v1492
      %v1550 = vpop.f32.mrb[0].mxu0
      %v1551 = vadd.f32 0.0, %v1550
      %v1552 = vpop.f32.mrb[0].mxu0
      %v1553 = vpop.f32.mrb[0].mxu0
      %v1554 = vadd.f32 0.0, %v1553
      %v1555 = vpop.f32.mrb[0].mxu0
      %1556 = vmatprep.mubr.bf16.mxu0 0
      %1557 = vmatmul.mubr.bf16.gmra.mrb[0].mxu0 %v1495
      %v1558 = vpop.f32.mrb[0].mxu0
      %v1559 = vadd.f32 0.0, %v1558
      %v1560 = vpop.f32.mrb[0].mxu0
      %v1561 = vpop.f32.mrb[0].mxu0
      %v1562 = vadd.f32 0.0, %v1561
      %v1563 = vpop.f32.mrb[0].mxu0
      %1564 = vdwg.mxu0
      %v1565 = vadd.f32 %v1443, %v1535
      %v1566 = vadd.f32 %v1444, %v1538
      %v1567 = vadd.f32 %v1445, %v1543
      %v1568 = vadd.f32 %v1446, %v1546
      %v1569 = vadd.f32 %v1447, %v1551
      %v1570 = vadd.f32 %v1448, %v1554
      %v1571 = vadd.f32 %v1449, %v1559
      %v1572 = vadd.f32 %v1450, %v1562
      %v1573 = vld [vmem:[%s1333] sm:$0xf]
      %v1574 = vld [vmem:[%s1333 + $0x4] sm:$0x1]
      %v1575 = vld [vmem:[%s1333 + $0x8] sm:$0xf]
      %v1576 = vld [vmem:[%s1333 + $0xc] sm:$0x1]
      %v1577 = vld [vmem:[%s1333 + $0x10] sm:$0xf]
      %v1578 = vld [vmem:[%s1333 + $0x14] sm:$0x1]
      %v1579 = vld [vmem:[%s1333 + $0x18] sm:$0xf]
      %v1580 = vld [vmem:[%s1333 + $0x1c] sm:$0x1]
      %v1581 = vld [vmem:[%s1333 + $0x20] sm:$0xf]
      %v1582 = vld [vmem:[%s1333 + $0x24] sm:$0x1]
      %v1583 = vld [vmem:[%s1333 + $0x28] sm:$0xf]
      %v1584 = vld [vmem:[%s1333 + $0x2c] sm:$0x1]
      %v1585 = vld [vmem:[%s1333 + $0x30] sm:$0xf]
      %v1586 = vld [vmem:[%s1333 + $0x34] sm:$0x1]
      %v1587 = vld [vmem:[%s1333 + $0x38] sm:$0xf]
      %v1588 = vld [vmem:[%s1333 + $0x3c] sm:$0x1]
      %v1590 = vshrl.u32 %v1573, 16
      %v1592 = vrot.slane %v1590, 4
      %v1593 = vshll.u32 %v1573, 16
      %v1595 = vrot.slane %v1593, 5
      %v1596 = vor.u32 %v1592, %v1595
      %v1597 = vrot.slane %v1596, 4
      %v1599 = vshll.u32 %v1574, 16
      %v1601 = vrot.slane %v1599, 5
      %v1602 = vsel %vm646, %v1597, %v1601
      %v1604 = vshrl.u32 %v1575, 16
      %v1606 = vrot.slane %v1604, 4
      %v1607 = vshll.u32 %v1575, 16
      %v1609 = vrot.slane %v1607, 5
      %v1610 = vor.u32 %v1606, %v1609
      %v1611 = vrot.slane %v1610, 4
      %v1613 = vshll.u32 %v1576, 16
      %v1615 = vrot.slane %v1613, 5
      %v1616 = vsel %vm646, %v1611, %v1615
      %v1618 = vshrl.u32 %v1577, 16
      %v1620 = vrot.slane %v1618, 4
      %v1621 = vshll.u32 %v1577, 16
      %v1623 = vrot.slane %v1621, 5
      %v1624 = vor.u32 %v1620, %v1623
      %v1625 = vrot.slane %v1624, 4
      %v1627 = vshll.u32 %v1578, 16
      %v1629 = vrot.slane %v1627, 5
      %v1630 = vsel %vm646, %v1625, %v1629
      %v1632 = vshrl.u32 %v1579, 16
      %v1634 = vrot.slane %v1632, 4
      %v1635 = vshll.u32 %v1579, 16
      %v1637 = vrot.slane %v1635, 5
      %v1638 = vor.u32 %v1634, %v1637
      %v1639 = vrot.slane %v1638, 4
      %v1641 = vshll.u32 %v1580, 16
      %v1643 = vrot.slane %v1641, 5
      %v1644 = vsel %vm646, %v1639, %v1643
      %v1646 = vshrl.u32 %v1581, 16
      %v1648 = vrot.slane %v1646, 4
      %v1649 = vshll.u32 %v1581, 16
      %v1651 = vrot.slane %v1649, 5
      %v1652 = vor.u32 %v1648, %v1651
      %v1653 = vrot.slane %v1652, 4
      %v1655 = vshll.u32 %v1582, 16
      %v1657 = vrot.slane %v1655, 5
      %v1658 = vsel %vm646, %v1653, %v1657
      %v1660 = vshrl.u32 %v1583, 16
      %v1662 = vrot.slane %v1660, 4
      %v1663 = vshll.u32 %v1583, 16
      %v1665 = vrot.slane %v1663, 5
      %v1666 = vor.u32 %v1662, %v1665
      %v1667 = vrot.slane %v1666, 4
      %v1669 = vshll.u32 %v1584, 16
      %v1671 = vrot.slane %v1669, 5
      %v1672 = vsel %vm646, %v1667, %v1671
      %v1674 = vshrl.u32 %v1585, 16
      %v1676 = vrot.slane %v1674, 4
      %v1677 = vshll.u32 %v1585, 16
      %v1679 = vrot.slane %v1677, 5
      %v1680 = vor.u32 %v1676, %v1679
      %v1681 = vrot.slane %v1680, 4
      %v1683 = vshll.u32 %v1586, 16
      %v1685 = vrot.slane %v1683, 5
      %v1686 = vsel %vm646, %v1681, %v1685
      %v1688 = vshrl.u32 %v1587, 16
      %v1690 = vrot.slane %v1688, 4
      %v1691 = vshll.u32 %v1587, 16
      %v1693 = vrot.slane %v1691, 5
      %v1694 = vor.u32 %v1690, %v1693
      %v1695 = vrot.slane %v1694, 4
      %v1697 = vshll.u32 %v1588, 16
      %v1699 = vrot.slane %v1697, 5
      %v1700 = vsel %vm646, %v1695, %v1699
      %v1701 = vld [vmem:[%s1 + $0x10] sm:$0x3]
      %v1702 = vunpack.c.l.b16 %v1602
      %v1703 = vunpack.c.l.b16 %v1616
      %v1704 = vunpack.c.l.b16 %v1630
      %v1705 = vunpack.c.l.b16 %v1644
      %v1706 = vunpack.c.l.b16 %v1658
      %v1707 = vunpack.c.l.b16 %v1672
      %v1708 = vunpack.c.l.b16 %v1686
      %v1709 = vunpack.c.l.b16 %v1700
      %v1710 = vpack.c.b16 %v1703, %v1702
      %v1711 = vpack.c.b16 %v1705, %v1704
      %v1712 = vpack.c.b16 %v1707, %v1706
      %v1713 = vpack.c.b16 %v1709, %v1708
      %v1715 = vsel %vm446, %v1710, 0
      %v1718 = vsel %vm446, %v1711, 0
      %v1721 = vsel %vm446, %v1712, 0
      %v1724 = vsel %vm446, %v1713, 0
      %v1727 = vsel %vm459, %v1701, 0
      %1729 = vmatprep.subr.bf16.mxu0 0
      %1730 = vmatpush1.bf16.msra.mxu0 %v1727
      %1731 = vmatprep.subr.bf16.mxu0 0
      %1732 = vmatpush1.bf16.msra.mxu0 0
      %1733 = vmatprep.subr.bf16.mxu0 0
      %1734 = vmatpush1.bf16.msra.mxu0 0
      %1735 = vmatprep.subr.bf16.mxu0 0
      %1736 = vmatpush1.bf16.msra.mxu0 0
      %1737 = vmatprep.subr.bf16.mxu0 0
      %1738 = vmatpush1.bf16.msra.mxu0 0
      %1739 = vmatprep.subr.bf16.mxu0 0
      %1740 = vmatpush1.bf16.msra.mxu0 0
      %1741 = vmatprep.subr.bf16.mxu0 0
      %1742 = vmatpush1.bf16.msra.mxu0 0
      %1743 = vmatprep.subr.bf16.mxu0 0
      %1744 = vmatpush1.bf16.msra.mxu0 0
      %1745 = vmatprep.subr.bf16.mxu0 0
      %1746 = vmatpush1.bf16.msra.mxu0 0
      %1747 = vmatprep.subr.bf16.mxu0 0
      %1748 = vmatpush1.bf16.msra.mxu0 0
      %1749 = vmatprep.subr.bf16.mxu0 0
      %1750 = vmatpush1.bf16.msra.mxu0 0
      %1751 = vmatprep.subr.bf16.mxu0 0
      %1752 = vmatpush1.bf16.msra.mxu0 0
      %1753 = vmatprep.subr.bf16.mxu0 0
      %1754 = vmatpush1.bf16.msra.mxu0 0
      %1755 = vmatprep.subr.bf16.mxu0 0
      %1756 = vmatpush1.bf16.msra.mxu0 0
      %1757 = vmatprep.subr.bf16.mxu0 0
      %1758 = vmatpush1.bf16.msra.mxu0 0
      %1759 = vmatprep.subr.bf16.mxu0 0
      %1760 = vmatpush1.bf16.msra.mxu0 0
      %1761 = vmatprep.mubr.bf16.mxu0 0
      %1762 = vmatmul.mubr.bf16.gmra.mrb[0].mxu0 %v1715
      %v1763 = vpop.f32.mrb[0].mxu0
      %v1764 = vadd.f32 0.0, %v1763
      %v1765 = vpop.f32.mrb[0].mxu0
      %v1766 = vpop.f32.mrb[0].mxu0
      %v1767 = vadd.f32 0.0, %v1766
      %v1768 = vpop.f32.mrb[0].mxu0
      %1769 = vmatprep.mubr.bf16.mxu0 0
      %1770 = vmatmul.mubr.bf16.gmra.mrb[0].mxu0 %v1718
      %v1771 = vpop.f32.mrb[0].mxu0
      %v1772 = vadd.f32 0.0, %v1771
      %v1773 = vpop.f32.mrb[0].mxu0
      %v1774 = vpop.f32.mrb[0].mxu0
      %v1775 = vadd.f32 0.0, %v1774
      %v1776 = vpop.f32.mrb[0].mxu0
      %1777 = vmatprep.mubr.bf16.mxu0 0
      %1778 = vmatmul.mubr.bf16.gmra.mrb[0].mxu0 %v1721
      %v1779 = vpop.f32.mrb[0].mxu0
      %v1780 = vadd.f32 0.0, %v1779
      %v1781 = vpop.f32.mrb[0].mxu0
      %v1782 = vpop.f32.mrb[0].mxu0
      %v1783 = vadd.f32 0.0, %v1782
      %v1784 = vpop.f32.mrb[0].mxu0
      %1785 = vmatprep.mubr.bf16.mxu0 0
      %1786 = vmatmul.mubr.bf16.gmra.mrb[0].mxu0 %v1724
      %v1787 = vpop.f32.mrb[0].mxu0
      %v1788 = vadd.f32 0.0, %v1787
      %v1789 = vpop.f32.mrb[0].mxu0
      %v1790 = vpop.f32.mrb[0].mxu0
      %v1791 = vadd.f32 0.0, %v1790
      %v1792 = vpop.f32.mrb[0].mxu0
      %1793 = vdwg.mxu0
      %v1794 = vadd.f32 %v1565, %v1764
      %v1795 = vadd.f32 %v1566, %v1767
      %v1796 = vadd.f32 %v1567, %v1772
      %v1797 = vadd.f32 %v1568, %v1775
      %v1798 = vadd.f32 %v1569, %v1780
      %v1799 = vadd.f32 %v1570, %v1783
      %v1800 = vadd.f32 %v1571, %v1788
      %v1801 = vadd.f32 %v1572, %v1791
      %v1802 = vld [vmem:[%s2] sm:$0x1]
      %v1804 = vlaneseq
      %v1805 = vshrl.u32 %v1804, 7
      %v1806 = vsub.s32 0, %v1805
      %v1807 = vrot.slane %v1802, %v1806
      %v1809 = vmul.f32 %v1794, %v1807
      %v1810 = vmul.f32 %v1795, %v1807
      %v1811 = vmul.f32 %v1796, %v1807
      %v1812 = vmul.f32 %v1797, %v1807
      %v1813 = vmul.f32 %v1798, %v1807
      %v1814 = vmul.f32 %v1799, %v1807
      %v1815 = vmul.f32 %v1800, %v1807
      %v1816 = vmul.f32 %v1801, %v1807
      %v1817 = vld [vmem:[%s3] sm:$0x1]
      %v1819 = vlaneseq
      %v1820 = vshrl.u32 %v1819, 7
      %v1821 = vsub.s32 0, %v1820
      %v1822 = vrot.slane %v1817, %v1821
      %v1824 = vadd.f32 %v1809, %v1822
      %v1825 = vadd.f32 %v1810, %v1822
      %v1826 = vadd.f32 %v1811, %v1822
      %v1827 = vadd.f32 %v1812, %v1822
      %v1828 = vadd.f32 %v1813, %v1822
      %v1829 = vadd.f32 %v1814, %v1822
      %v1830 = vadd.f32 %v1815, %v1822
      %v1831 = vadd.f32 %v1816, %v1822
      %v1832 = vmax.f32 %v1824, 0.0
      %v1833 = vmax.f32 %v1825, 0.0
      %v1834 = vmax.f32 %v1826, 0.0
      %v1835 = vmax.f32 %v1827, 0.0
      %v1836 = vmax.f32 %v1828, 0.0
      %v1837 = vmax.f32 %v1829, 0.0
      %v1838 = vmax.f32 %v1830, 0.0
      %v1839 = vmax.f32 %v1831, 0.0
      %vm1840 = vcmask 60416
      %1841 = vst.msk [vmem:[#allocation2] sm:$0xf] %vm1840, 0
      %vm1842 = vcmask 57344
      %1843 = vst.msk [vmem:[#allocation2 + $0x4] sm:$0x1] %vm1842, 0
      %s1844 = scalar_lea.vmem [#allocation2], 72
      %1845 = vst.msk [vmem:[%s1844] sm:$0xf] %vm1840, 0
      %1846 = vst.msk [vmem:[%s1844 + $0x4] sm:$0x1] %vm1842, 0
      %s1847 = scalar_lea.vmem [#allocation2], 8
      %vm1848 = vcmask 57344
      %vm1849 = vsmask.f32 256
      %vm1850 = vmand %vm1848, %vm1849
      %v1851 = vld [vmem:[%s1847] sm:$0x1]
      %v1852 = vsel %vm1850, 0, %v1851
      %1853 = vst [vmem:[%s1847] sm:$0x1] %v1852
      %v1854 = vld [vmem:[%s1847 + $0x8] sm:$0x1]
      %v1855 = vsel %vm1850, 0, %v1854
      %1856 = vst [vmem:[%s1847 + $0x8] sm:$0x1] %v1855
      %v1857 = vld [vmem:[%s1847 + $0x10] sm:$0x1]
      %v1858 = vsel %vm1850, 0, %v1857
      %1859 = vst [vmem:[%s1847 + $0x10] sm:$0x1] %v1858
      %v1860 = vld [vmem:[%s1847 + $0x18] sm:$0x1]
      %v1861 = vsel %vm1850, 0, %v1860
      %1862 = vst [vmem:[%s1847 + $0x18] sm:$0x1] %v1861
      %v1863 = vld [vmem:[%s1847 + $0x20] sm:$0x1]
      %v1864 = vsel %vm1850, 0, %v1863
      %1865 = vst [vmem:[%s1847 + $0x20] sm:$0x1] %v1864
      %v1866 = vld [vmem:[%s1847 + $0x28] sm:$0x1]
      %v1867 = vsel %vm1850, 0, %v1866
      %1868 = vst [vmem:[%s1847 + $0x28] sm:$0x1] %v1867
      %v1869 = vld [vmem:[%s1847 + $0x30] sm:$0x1]
      %v1870 = vsel %vm1850, 0, %v1869
      %1871 = vst [vmem:[%s1847 + $0x30] sm:$0x1] %v1870
      %v1872 = vld [vmem:[%s1847 + $0x38] sm:$0x1]
      %v1873 = vsel %vm1850, 0, %v1872
      %1874 = vst [vmem:[%s1847 + $0x38] sm:$0x1] %v1873
      %vm1875 = vsmask.f32 7938
      %vm1876 = vmand %vm1848, %vm1875
      %v1877 = vld [vmem:[%s1847 + $0x4] sm:$0x1]
      %v1878 = vsel %vm1876, 0, %v1877
      %1879 = vst [vmem:[%s1847 + $0x4] sm:$0x1] %v1878
      %v1880 = vld [vmem:[%s1847 + $0xc] sm:$0x1]
      %v1881 = vsel %vm1876, 0, %v1880
      %1882 = vst [vmem:[%s1847 + $0xc] sm:$0x1] %v1881
      %v1883 = vld [vmem:[%s1847 + $0x14] sm:$0x1]
      %v1884 = vsel %vm1876, 0, %v1883
      %1885 = vst [vmem:[%s1847 + $0x14] sm:$0x1] %v1884
      %v1886 = vld [vmem:[%s1847 + $0x1c] sm:$0x1]
      %v1887 = vsel %vm1876, 0, %v1886
      %1888 = vst [vmem:[%s1847 + $0x1c] sm:$0x1] %v1887
      %v1889 = vld [vmem:[%s1847 + $0x24] sm:$0x1]
      %v1890 = vsel %vm1876, 0, %v1889
      %1891 = vst [vmem:[%s1847 + $0x24] sm:$0x1] %v1890
      %v1892 = vld [vmem:[%s1847 + $0x2c] sm:$0x1]
      %v1893 = vsel %vm1876, 0, %v1892
      %1894 = vst [vmem:[%s1847 + $0x2c] sm:$0x1] %v1893
      %v1895 = vld [vmem:[%s1847 + $0x34] sm:$0x1]
      %v1896 = vsel %vm1876, 0, %v1895
      %1897 = vst [vmem:[%s1847 + $0x34] sm:$0x1] %v1896
      %v1898 = vld [vmem:[%s1847 + $0x3c] sm:$0x1]
      %v1899 = vsel %vm1876, 0, %v1898
      %1900 = vst [vmem:[%s1847 + $0x3c] sm:$0x1] %v1899
      %v1901 = vpack.c.bf16 %v1832, %v1832
      %v1902 = vpack.c.bf16 %v1833, %v1833
      %v1903 = vpack.c.bf16 %v1834, %v1834
      %v1904 = vpack.c.bf16 %v1835, %v1835
      %v1905 = vpack.c.bf16 %v1836, %v1836
      %v1906 = vpack.c.bf16 %v1837, %v1837
      %v1907 = vpack.c.bf16 %v1838, %v1838
      %v1908 = vpack.c.bf16 %v1839, %v1839
      %v1917 = vunpack.c.l.b16 %v1901
      %v1918 = vunpack.c.l.b16 %v1902
      %v1919 = vunpack.c.l.b16 %v1903
      %v1920 = vunpack.c.l.b16 %v1904
      %v1921 = vunpack.c.l.b16 %v1905
      %v1922 = vunpack.c.l.b16 %v1906
      %v1923 = vunpack.c.l.b16 %v1907
      %v1924 = vunpack.c.l.b16 %v1908
      %v1925 = vpack.c.b16 %v1917, %v1917
      %v1926 = vpack.c.b16 %v1918, %v1918
      %v1927 = vpack.c.b16 %v1919, %v1919
      %v1928 = vpack.c.b16 %v1920, %v1920
      %v1929 = vpack.c.b16 %v1921, %v1921
      %v1930 = vpack.c.b16 %v1922, %v1922
      %v1931 = vpack.c.b16 %v1923, %v1923
      %v1932 = vpack.c.b16 %v1924, %v1924
      %v1934 = vshrl.u32 %v1925, 16
      %v1936 = vrot.slane %v1934, 7
      %v1937 = vshll.u32 %v1925, 16
      %v1939 = vor.u32 %v1936, %v1937
      %v1940 = vrot.slane %v1936, 4
      %v1942 = vshrl.u32 %v1926, 16
      %v1944 = vrot.slane %v1942, 7
      %v1945 = vshll.u32 %v1926, 16
      %v1947 = vor.u32 %v1944, %v1945
      %v1948 = vrot.slane %v1944, 4
      %v1950 = vshrl.u32 %v1927, 16
      %v1952 = vrot.slane %v1950, 7
      %v1953 = vshll.u32 %v1927, 16
      %v1955 = vor.u32 %v1952, %v1953
      %v1956 = vrot.slane %v1952, 4
      %v1958 = vshrl.u32 %v1928, 16
      %v1960 = vrot.slane %v1958, 7
      %v1961 = vshll.u32 %v1928, 16
      %v1963 = vor.u32 %v1960, %v1961
      %v1964 = vrot.slane %v1960, 4
      %v1966 = vshrl.u32 %v1929, 16
      %v1968 = vrot.slane %v1966, 7
      %v1969 = vshll.u32 %v1929, 16
      %v1971 = vor.u32 %v1968, %v1969
      %v1972 = vrot.slane %v1968, 4
      %v1974 = vshrl.u32 %v1930, 16
      %v1976 = vrot.slane %v1974, 7
      %v1977 = vshll.u32 %v1930, 16
      %v1979 = vor.u32 %v1976, %v1977
      %v1980 = vrot.slane %v1976, 4
      %v1982 = vshrl.u32 %v1931, 16
      %v1984 = vrot.slane %v1982, 7
      %v1985 = vshll.u32 %v1931, 16
      %v1987 = vor.u32 %v1984, %v1985
      %v1988 = vrot.slane %v1984, 4
      %v1990 = vshrl.u32 %v1932, 16
      %v1992 = vrot.slane %v1990, 7
      %v1993 = vshll.u32 %v1932, 16
      %v1995 = vor.u32 %v1992, %v1993
      %v1996 = vrot.slane %v1992, 4
      %vm2013 = vcmask 60416
      %vm2014 = vmand %vm2013, %vm1875
      %v2015 = vld [vmem:[%s1847] sm:$0xf]
      %v2016 = vsel %vm2014, %v1939, %v2015
      %2017 = vst [vmem:[%s1847] sm:$0xf] %v2016
      %v2018 = vld [vmem:[%s1847 + $0x4] sm:$0x1]
      %v2019 = vsel %vm1850, %v1940, %v2018
      %2020 = vst [vmem:[%s1847 + $0x4] sm:$0x1] %v2019
      %v2021 = vld [vmem:[%s1847 + $0x8] sm:$0xf]
      %v2022 = vsel %vm2014, %v1947, %v2021
      %2023 = vst [vmem:[%s1847 + $0x8] sm:$0xf] %v2022
      %v2024 = vld [vmem:[%s1847 + $0xc] sm:$0x1]
      %v2025 = vsel %vm1850, %v1948, %v2024
      %2026 = vst [vmem:[%s1847 + $0xc] sm:$0x1] %v2025
      %v2027 = vld [vmem:[%s1847 + $0x10] sm:$0xf]
      %v2028 = vsel %vm2014, %v1955, %v2027
      %2029 = vst [vmem:[%s1847 + $0x10] sm:$0xf] %v2028
      %v2030 = vld [vmem:[%s1847 + $0x14] sm:$0x1]
      %v2031 = vsel %vm1850, %v1956, %v2030
      %2032 = vst [vmem:[%s1847 + $0x14] sm:$0x1] %v2031
      %v2033 = vld [vmem:[%s1847 + $0x18] sm:$0xf]
      %v2034 = vsel %vm2014, %v1963, %v2033
      %2035 = vst [vmem:[%s1847 + $0x18] sm:$0xf] %v2034
      %v2036 = vld [vmem:[%s1847 + $0x1c] sm:$0x1]
      %v2037 = vsel %vm1850, %v1964, %v2036
      %2038 = vst [vmem:[%s1847 + $0x1c] sm:$0x1] %v2037
      %v2039 = vld [vmem:[%s1847 + $0x20] sm:$0xf]
      %v2040 = vsel %vm2014, %v1971, %v2039
      %2041 = vst [vmem:[%s1847 + $0x20] sm:$0xf] %v2040
      %v2042 = vld [vmem:[%s1847 + $0x24] sm:$0x1]
      %v2043 = vsel %vm1850, %v1972, %v2042
      %2044 = vst [vmem:[%s1847 + $0x24] sm:$0x1] %v2043
      %v2045 = vld [vmem:[%s1847 + $0x28] sm:$0xf]
      %v2046 = vsel %vm2014, %v1979, %v2045
      %2047 = vst [vmem:[%s1847 + $0x28] sm:$0xf] %v2046
      %v2048 = vld [vmem:[%s1847 + $0x2c] sm:$0x1]
      %v2049 = vsel %vm1850, %v1980, %v2048
      %2050 = vst [vmem:[%s1847 + $0x2c] sm:$0x1] %v2049
      %v2051 = vld [vmem:[%s1847 + $0x30] sm:$0xf]
      %v2052 = vsel %vm2014, %v1987, %v2051
      %2053 = vst [vmem:[%s1847 + $0x30] sm:$0xf] %v2052
      %v2054 = vld [vmem:[%s1847 + $0x34] sm:$0x1]
      %v2055 = vsel %vm1850, %v1988, %v2054
      %2056 = vst [vmem:[%s1847 + $0x34] sm:$0x1] %v2055
      %v2057 = vld [vmem:[%s1847 + $0x38] sm:$0xf]
      %v2058 = vsel %vm2014, %v1995, %v2057
      %2059 = vst [vmem:[%s1847 + $0x38] sm:$0xf] %v2058
      %v2060 = vld [vmem:[%s1847 + $0x3c] sm:$0x1]
      %v2061 = vsel %vm1850, %v1996, %v2060
      %2062 = vst [vmem:[%s1847 + $0x3c] sm:$0x1] %v2061
      %v2063 = vld [vmem:[#allocation2] sm:$0xf]
      %v2064 = vld [vmem:[#allocation2 + $0x8] sm:$0xf]
      %v2065 = vld [vmem:[#allocation2 + $0x10] sm:$0xf]
      %v2066 = vld [vmem:[#allocation2 + $0x18] sm:$0xf]
      %v2067 = vld [vmem:[#allocation2 + $0x20] sm:$0xf]
      %v2068 = vld [vmem:[#allocation2 + $0x28] sm:$0xf]
      %v2069 = vld [vmem:[#allocation2 + $0x30] sm:$0xf]
      %v2070 = vld [vmem:[#allocation2 + $0x38] sm:$0xf]
      %v2071 = vld [vmem:[%s4] sm:$0xf]
      %v2072 = vld [vmem:[#allocation2 + $0x4] sm:$0x1]
      %v2073 = vld [vmem:[#allocation2 + $0xc] sm:$0x1]
      %v2074 = vld [vmem:[#allocation2 + $0x14] sm:$0x1]
      %v2075 = vld [vmem:[#allocation2 + $0x1c] sm:$0x1]
      %v2076 = vld [vmem:[#allocation2 + $0x24] sm:$0x1]
      %v2077 = vld [vmem:[#allocation2 + $0x2c] sm:$0x1]
      %v2078 = vld [vmem:[#allocation2 + $0x34] sm:$0x1]
      %v2079 = vld [vmem:[#allocation2 + $0x3c] sm:$0x1]
      %v2081 = vshrl.u32 %v2063, 16
      %v2083 = vrot.slane %v2081, 4
      %v2084 = vshll.u32 %v2063, 16
      %v2086 = vrot.slane %v2084, 5
      %v2087 = vor.u32 %v2083, %v2086
      %v2088 = vrot.slane %v2087, 4
      %v2090 = vshll.u32 %v2072, 16
      %v2092 = vrot.slane %v2090, 5
      %v2093 = vsel %vm646, %v2088, %v2092
      %v2095 = vshrl.u32 %v2064, 16
      %v2097 = vrot.slane %v2095, 4
      %v2098 = vshll.u32 %v2064, 16
      %v2100 = vrot.slane %v2098, 5
      %v2101 = vor.u32 %v2097, %v2100
      %v2102 = vrot.slane %v2101, 4
      %v2104 = vshll.u32 %v2073, 16
      %v2106 = vrot.slane %v2104, 5
      %v2107 = vsel %vm646, %v2102, %v2106
      %v2109 = vshrl.u32 %v2065, 16
      %v2111 = vrot.slane %v2109, 4
      %v2112 = vshll.u32 %v2065, 16
      %v2114 = vrot.slane %v2112, 5
      %v2115 = vor.u32 %v2111, %v2114
      %v2116 = vrot.slane %v2115, 4
      %v2118 = vshll.u32 %v2074, 16
      %v2120 = vrot.slane %v2118, 5
      %v2121 = vsel %vm646, %v2116, %v2120
      %v2123 = vshrl.u32 %v2066, 16
      %v2125 = vrot.slane %v2123, 4
      %v2126 = vshll.u32 %v2066, 16
      %v2128 = vrot.slane %v2126, 5
      %v2129 = vor.u32 %v2125, %v2128
      %v2130 = vrot.slane %v2129, 4
      %v2132 = vshll.u32 %v2075, 16
      %v2134 = vrot.slane %v2132, 5
      %v2135 = vsel %vm646, %v2130, %v2134
      %v2137 = vshrl.u32 %v2067, 16
      %v2139 = vrot.slane %v2137, 4
      %v2140 = vshll.u32 %v2067, 16
      %v2142 = vrot.slane %v2140, 5
      %v2143 = vor.u32 %v2139, %v2142
      %v2144 = vrot.slane %v2143, 4
      %v2146 = vshll.u32 %v2076, 16
      %v2148 = vrot.slane %v2146, 5
      %v2149 = vsel %vm646, %v2144, %v2148
      %v2151 = vshrl.u32 %v2068, 16
      %v2153 = vrot.slane %v2151, 4
      %v2154 = vshll.u32 %v2068, 16
      %v2156 = vrot.slane %v2154, 5
      %v2157 = vor.u32 %v2153, %v2156
      %v2158 = vrot.slane %v2157, 4
      %v2160 = vshll.u32 %v2077, 16
      %v2162 = vrot.slane %v2160, 5
      %v2163 = vsel %vm646, %v2158, %v2162
      %v2165 = vshrl.u32 %v2069, 16
      %v2167 = vrot.slane %v2165, 4
      %v2168 = vshll.u32 %v2069, 16
      %v2170 = vrot.slane %v2168, 5
      %v2171 = vor.u32 %v2167, %v2170
      %v2172 = vrot.slane %v2171, 4
      %v2174 = vshll.u32 %v2078, 16
      %v2176 = vrot.slane %v2174, 5
      %v2177 = vsel %vm646, %v2172, %v2176
      %v2179 = vshrl.u32 %v2070, 16
      %v2181 = vrot.slane %v2179, 4
      %v2182 = vshll.u32 %v2070, 16
      %v2184 = vrot.slane %v2182, 5
      %v2185 = vor.u32 %v2181, %v2184
      %v2186 = vrot.slane %v2185, 4
      %v2188 = vshll.u32 %v2079, 16
      %v2190 = vrot.slane %v2188, 5
      %v2191 = vsel %vm646, %v2186, %v2190
      %v2192 = vld [vmem:[%s4 + $0x4] sm:$0xf]
      %v2193 = vunpack.c.l.b16 %v2093
      %v2194 = vunpack.c.l.b16 %v2107
      %v2195 = vunpack.c.l.b16 %v2121
      %v2196 = vunpack.c.l.b16 %v2135
      %v2197 = vunpack.c.l.b16 %v2149
      %v2198 = vunpack.c.l.b16 %v2163
      %v2199 = vunpack.c.l.b16 %v2177
      %v2200 = vunpack.c.l.b16 %v2191
      %v2201 = vpack.c.b16 %v2194, %v2193
      %v2202 = vpack.c.b16 %v2196, %v2195
      %v2203 = vpack.c.b16 %v2198, %v2197
      %v2204 = vpack.c.b16 %v2200, %v2199
      %vm2205 = vcmask 64512
      %v2207 = vsel %vm2205, %v2201, 0
      %v2210 = vsel %vm2205, %v2202, 0
      %v2213 = vsel %vm2205, %v2203, 0
      %v2216 = vsel %vm2205, %v2204, 0
      %vm2218 = vcmask 1043456
      %v2220 = vsel %vm2218, %v2192, 0
      %2222 = vmatprep.subr.bf16.mxu0 0
      %2223 = vmatpush1.bf16.msra.mxu0 %v2220
      %2224 = vmatprep.subr.bf16.mxu0 0
      %2225 = vmatpush1.bf16.msra.mxu0 0
      %2226 = vmatprep.subr.bf16.mxu0 0
      %2227 = vmatpush1.bf16.msra.mxu0 0
      %2228 = vmatprep.subr.bf16.mxu0 0
      %2229 = vmatpush1.bf16.msra.mxu0 0
      %2230 = vmatprep.subr.bf16.mxu0 0
      %2231 = vmatpush1.bf16.msra.mxu0 0
      %2232 = vmatprep.subr.bf16.mxu0 0
      %2233 = vmatpush1.bf16.msra.mxu0 0
      %2234 = vmatprep.subr.bf16.mxu0 0
      %2235 = vmatpush1.bf16.msra.mxu0 0
      %2236 = vmatprep.subr.bf16.mxu0 0
      %2237 = vmatpush1.bf16.msra.mxu0 0
      %2238 = vmatprep.subr.bf16.mxu0 0
      %2239 = vmatpush1.bf16.msra.mxu0 0
      %2240 = vmatprep.subr.bf16.mxu0 0
      %2241 = vmatpush1.bf16.msra.mxu0 0
      %2242 = vmatprep.subr.bf16.mxu0 0
      %2243 = vmatpush1.bf16.msra.mxu0 0
      %2244 = vmatprep.subr.bf16.mxu0 0
      %2245 = vmatpush1.bf16.msra.mxu0 0
      %2246 = vmatprep.subr.bf16.mxu0 0
      %2247 = vmatpush1.bf16.msra.mxu0 0
      %2248 = vmatprep.subr.bf16.mxu0 0
      %2249 = vmatpush1.bf16.msra.mxu0 0
      %2250 = vmatprep.subr.bf16.mxu0 0
      %2251 = vmatpush1.bf16.msra.mxu0 0
      %2252 = vmatprep.subr.bf16.mxu0 0
      %2253 = vmatpush1.bf16.msra.mxu0 0
      %2254 = vmatprep.mubr.bf16.mxu0 0
      %2255 = vmatmul.mubr.bf16.gmra.mrb[0].mxu0 %v2207
      %v2256 = vpop.f32.mrb[0].mxu0
      %v2257 = vadd.f32 0.0, %v2256
      %v2258 = vpop.f32.mrb[0].mxu0
      %v2259 = vpop.f32.mrb[0].mxu0
      %v2260 = vadd.f32 0.0, %v2259
      %v2261 = vpop.f32.mrb[0].mxu0
      %2262 = vmatprep.mubr.bf16.mxu0 0
      %2263 = vmatmul.mubr.bf16.gmra.mrb[0].mxu0 %v2210
      %v2264 = vpop.f32.mrb[0].mxu0
      %v2265 = vadd.f32 0.0, %v2264
      %v2266 = vpop.f32.mrb[0].mxu0
      %v2267 = vpop.f32.mrb[0].mxu0
      %v2268 = vadd.f32 0.0, %v2267
      %v2269 = vpop.f32.mrb[0].mxu0
      %2270 = vmatprep.mubr.bf16.mxu0 0
      %2271 = vmatmul.mubr.bf16.gmra.mrb[0].mxu0 %v2213
      %v2272 = vpop.f32.mrb[0].mxu0
      %v2273 = vadd.f32 0.0, %v2272
      %v2274 = vpop.f32.mrb[0].mxu0
      %v2275 = vpop.f32.mrb[0].mxu0
      %v2276 = vadd.f32 0.0, %v2275
      %v2277 = vpop.f32.mrb[0].mxu0
      %2278 = vmatprep.mubr.bf16.mxu0 0
      %2279 = vmatmul.mubr.bf16.gmra.mrb[0].mxu0 %v2216
      %v2280 = vpop.f32.mrb[0].mxu0
      %v2281 = vadd.f32 0.0, %v2280
      %v2282 = vpop.f32.mrb[0].mxu0
      %v2283 = vpop.f32.mrb[0].mxu0
      %v2284 = vadd.f32 0.0, %v2283
      %v2285 = vpop.f32.mrb[0].mxu0
      %2286 = vdwg.mxu0
      %v2295 = vunpack.c.l.b16 %v2063
      %v2296 = vunpack.c.l.b16 %v2064
      %v2297 = vunpack.c.l.b16 %v2065
      %v2298 = vunpack.c.l.b16 %v2066
      %v2299 = vunpack.c.l.b16 %v2067
      %v2300 = vunpack.c.l.b16 %v2068
      %v2301 = vunpack.c.l.b16 %v2069
      %v2302 = vunpack.c.l.b16 %v2070
      %v2303 = vpack.c.b16 %v2296, %v2295
      %v2304 = vpack.c.b16 %v2298, %v2297
      %v2305 = vpack.c.b16 %v2300, %v2299
      %v2306 = vpack.c.b16 %v2302, %v2301
      %v2308 = vsel %vm2205, %v2303, 0
      %v2311 = vsel %vm2205, %v2304, 0
      %v2314 = vsel %vm2205, %v2305, 0
      %v2317 = vsel %vm2205, %v2306, 0
      %v2320 = vsel %vm2218, %v2071, 0
      %2322 = vmatprep.subr.bf16.mxu0 0
      %2323 = vmatpush1.bf16.msra.mxu0 %v2320
      %2324 = vmatprep.subr.bf16.mxu0 0
      %2325 = vmatpush1.bf16.msra.mxu0 0
      %2326 = vmatprep.subr.bf16.mxu0 0
      %2327 = vmatpush1.bf16.msra.mxu0 0
      %2328 = vmatprep.subr.bf16.mxu0 0
      %2329 = vmatpush1.bf16.msra.mxu0 0
      %2330 = vmatprep.subr.bf16.mxu0 0
      %2331 = vmatpush1.bf16.msra.mxu0 0
      %2332 = vmatprep.subr.bf16.mxu0 0
      %2333 = vmatpush1.bf16.msra.mxu0 0
      %2334 = vmatprep.subr.bf16.mxu0 0
      %2335 = vmatpush1.bf16.msra.mxu0 0
      %2336 = vmatprep.subr.bf16.mxu0 0
      %2337 = vmatpush1.bf16.msra.mxu0 0
      %2338 = vmatprep.subr.bf16.mxu0 0
      %2339 = vmatpush1.bf16.msra.mxu0 0
      %2340 = vmatprep.subr.bf16.mxu0 0
      %2341 = vmatpush1.bf16.msra.mxu0 0
      %2342 = vmatprep.subr.bf16.mxu0 0
      %2343 = vmatpush1.bf16.msra.mxu0 0
      %2344 = vmatprep.subr.bf16.mxu0 0
      %2345 = vmatpush1.bf16.msra.mxu0 0
      %2346 = vmatprep.subr.bf16.mxu0 0
      %2347 = vmatpush1.bf16.msra.mxu0 0
      %2348 = vmatprep.subr.bf16.mxu0 0
      %2349 = vmatpush1.bf16.msra.mxu0 0
      %2350 = vmatprep.subr.bf16.mxu0 0
      %2351 = vmatpush1.bf16.msra.mxu0 0
      %2352 = vmatprep.subr.bf16.mxu0 0
      %2353 = vmatpush1.bf16.msra.mxu0 0
      %2354 = vmatprep.mubr.bf16.mxu0 0
      %2355 = vmatmul.mubr.bf16.gmra.mrb[0].mxu0 %v2308
      %v2356 = vpop.f32.mrb[0].mxu0
      %v2357 = vadd.f32 %v2257, %v2356
      %v2358 = vpop.f32.mrb[0].mxu0
      %v2359 = vpop.f32.mrb[0].mxu0
      %v2360 = vadd.f32 %v2260, %v2359
      %v2361 = vpop.f32.mrb[0].mxu0
      %2362 = vmatprep.mubr.bf16.mxu0 0
      %2363 = vmatmul.mubr.bf16.gmra.mrb[0].mxu0 %v2311
      %v2364 = vpop.f32.mrb[0].mxu0
      %v2365 = vadd.f32 %v2265, %v2364
      %v2366 = vpop.f32.mrb[0].mxu0
      %v2367 = vpop.f32.mrb[0].mxu0
      %v2368 = vadd.f32 %v2268, %v2367
      %v2369 = vpop.f32.mrb[0].mxu0
      %2370 = vmatprep.mubr.bf16.mxu0 0
      %2371 = vmatmul.mubr.bf16.gmra.mrb[0].mxu0 %v2314
      %v2372 = vpop.f32.mrb[0].mxu0
      %v2373 = vadd.f32 %v2273, %v2372
      %v2374 = vpop.f32.mrb[0].mxu0
      %v2375 = vpop.f32.mrb[0].mxu0
      %v2376 = vadd.f32 %v2276, %v2375
      %v2377 = vpop.f32.mrb[0].mxu0
      %2378 = vmatprep.mubr.bf16.mxu0 0
      %2379 = vmatmul.mubr.bf16.gmra.mrb[0].mxu0 %v2317
      %v2380 = vpop.f32.mrb[0].mxu0
      %v2381 = vadd.f32 %v2281, %v2380
      %v2382 = vpop.f32.mrb[0].mxu0
      %v2383 = vpop.f32.mrb[0].mxu0
      %v2384 = vadd.f32 %v2284, %v2383
      %v2385 = vpop.f32.mrb[0].mxu0
      %2386 = vdwg.mxu0
      %v2387 = vld [vmem:[#allocation2] sm:$0xe]
      %v2388 = vld [vmem:[#allocation2 + $0x8] sm:$0xe]
      %v2389 = vld [vmem:[#allocation2 + $0x10] sm:$0xe]
      %v2390 = vld [vmem:[#allocation2 + $0x18] sm:$0xe]
      %v2391 = vld [vmem:[#allocation2 + $0x20] sm:$0xe]
      %v2392 = vld [vmem:[#allocation2 + $0x28] sm:$0xe]
      %v2393 = vld [vmem:[#allocation2 + $0x30] sm:$0xe]
      %v2394 = vld [vmem:[#allocation2 + $0x38] sm:$0xe]
      %vm2411 = vcmask 1042432
      %vm2412 = vcmask 1046532
      %vm2413 = vmor %vm2411, %vm2412
      %v2414 = vrot.slane %v2387, 5
      %v2415 = vrot.slane %v2414, 4
      %v2416 = vrot.slane %v2072, 5
      %v2417 = vsel %vm2413, %v2415, %v2416
      %v2418 = vrot.slane %v2388, 5
      %v2419 = vrot.slane %v2418, 4
      %v2420 = vrot.slane %v2073, 5
      %v2421 = vsel %vm2413, %v2419, %v2420
      %v2422 = vrot.slane %v2389, 5
      %v2423 = vrot.slane %v2422, 4
      %v2424 = vrot.slane %v2074, 5
      %v2425 = vsel %vm2413, %v2423, %v2424
      %v2426 = vrot.slane %v2390, 5
      %v2427 = vrot.slane %v2426, 4
      %v2428 = vrot.slane %v2075, 5
      %v2429 = vsel %vm2413, %v2427, %v2428
      %v2430 = vrot.slane %v2391, 5
      %v2431 = vrot.slane %v2430, 4
      %v2432 = vrot.slane %v2076, 5
      %v2433 = vsel %vm2413, %v2431, %v2432
      %v2434 = vrot.slane %v2392, 5
      %v2435 = vrot.slane %v2434, 4
      %v2436 = vrot.slane %v2077, 5
      %v2437 = vsel %vm2413, %v2435, %v2436
      %v2438 = vrot.slane %v2393, 5
      %v2439 = vrot.slane %v2438, 4
      %v2440 = vrot.slane %v2078, 5
      %v2441 = vsel %vm2413, %v2439, %v2440
      %v2442 = vrot.slane %v2394, 5
      %v2443 = vrot.slane %v2442, 4
      %v2444 = vrot.slane %v2079, 5
      %v2445 = vsel %vm2413, %v2443, %v2444
      %v2446 = vld [vmem:[%s4 + $0x8] sm:$0xf]
      %v2447 = vunpack.c.l.b16 %v2417
      %v2448 = vunpack.c.l.b16 %v2421
      %v2449 = vunpack.c.l.b16 %v2425
      %v2450 = vunpack.c.l.b16 %v2429
      %v2451 = vunpack.c.l.b16 %v2433
      %v2452 = vunpack.c.l.b16 %v2437
      %v2453 = vunpack.c.l.b16 %v2441
      %v2454 = vunpack.c.l.b16 %v2445
      %v2455 = vpack.c.b16 %v2448, %v2447
      %v2456 = vpack.c.b16 %v2450, %v2449
      %v2457 = vpack.c.b16 %v2452, %v2451
      %v2458 = vpack.c.b16 %v2454, %v2453
      %v2460 = vsel %vm2205, %v2455, 0
      %v2463 = vsel %vm2205, %v2456, 0
      %v2466 = vsel %vm2205, %v2457, 0
      %v2469 = vsel %vm2205, %v2458, 0
      %v2472 = vsel %vm2218, %v2446, 0
      %2474 = vmatprep.subr.bf16.mxu0 0
      %2475 = vmatpush1.bf16.msra.mxu0 %v2472
      %2476 = vmatprep.subr.bf16.mxu0 0
      %2477 = vmatpush1.bf16.msra.mxu0 0
      %2478 = vmatprep.subr.bf16.mxu0 0
      %2479 = vmatpush1.bf16.msra.mxu0 0
      %2480 = vmatprep.subr.bf16.mxu0 0
      %2481 = vmatpush1.bf16.msra.mxu0 0
      %2482 = vmatprep.subr.bf16.mxu0 0
      %2483 = vmatpush1.bf16.msra.mxu0 0
      %2484 = vmatprep.subr.bf16.mxu0 0
      %2485 = vmatpush1.bf16.msra.mxu0 0
      %2486 = vmatprep.subr.bf16.mxu0 0
      %2487 = vmatpush1.bf16.msra.mxu0 0
      %2488 = vmatprep.subr.bf16.mxu0 0
      %2489 = vmatpush1.bf16.msra.mxu0 0
      %2490 = vmatprep.subr.bf16.mxu0 0
      %2491 = vmatpush1.bf16.msra.mxu0 0
      %2492 = vmatprep.subr.bf16.mxu0 0
      %2493 = vmatpush1.bf16.msra.mxu0 0
      %2494 = vmatprep.subr.bf16.mxu0 0
      %2495 = vmatpush1.bf16.msra.mxu0 0
      %2496 = vmatprep.subr.bf16.mxu0 0
      %2497 = vmatpush1.bf16.msra.mxu0 0
      %2498 = vmatprep.subr.bf16.mxu0 0
      %2499 = vmatpush1.bf16.msra.mxu0 0
      %2500 = vmatprep.subr.bf16.mxu0 0
      %2501 = vmatpush1.bf16.msra.mxu0 0
      %2502 = vmatprep.subr.bf16.mxu0 0
      %2503 = vmatpush1.bf16.msra.mxu0 0
      %2504 = vmatprep.subr.bf16.mxu0 0
      %2505 = vmatpush1.bf16.msra.mxu0 0
      %2506 = vmatprep.mubr.bf16.mxu0 0
      %2507 = vmatmul.mubr.bf16.gmra.mrb[0].mxu0 %v2460
      %v2508 = vpop.f32.mrb[0].mxu0
      %v2509 = vadd.f32 0.0, %v2508
      %v2510 = vpop.f32.mrb[0].mxu0
      %v2511 = vpop.f32.mrb[0].mxu0
      %v2512 = vadd.f32 0.0, %v2511
      %v2513 = vpop.f32.mrb[0].mxu0
      %2514 = vmatprep.mubr.bf16.mxu0 0
      %2515 = vmatmul.mubr.bf16.gmra.mrb[0].mxu0 %v2463
      %v2516 = vpop.f32.mrb[0].mxu0
      %v2517 = vadd.f32 0.0, %v2516
      %v2518 = vpop.f32.mrb[0].mxu0
      %v2519 = vpop.f32.mrb[0].mxu0
      %v2520 = vadd.f32 0.0, %v2519
      %v2521 = vpop.f32.mrb[0].mxu0
      %2522 = vmatprep.mubr.bf16.mxu0 0
      %2523 = vmatmul.mubr.bf16.gmra.mrb[0].mxu0 %v2466
      %v2524 = vpop.f32.mrb[0].mxu0
      %v2525 = vadd.f32 0.0, %v2524
      %v2526 = vpop.f32.mrb[0].mxu0
      %v2527 = vpop.f32.mrb[0].mxu0
      %v2528 = vadd.f32 0.0, %v2527
      %v2529 = vpop.f32.mrb[0].mxu0
      %2530 = vmatprep.mubr.bf16.mxu0 0
      %2531 = vmatmul.mubr.bf16.gmra.mrb[0].mxu0 %v2469
      %v2532 = vpop.f32.mrb[0].mxu0
      %v2533 = vadd.f32 0.0, %v2532
      %v2534 = vpop.f32.mrb[0].mxu0
      %v2535 = vpop.f32.mrb[0].mxu0
      %v2536 = vadd.f32 0.0, %v2535
      %v2537 = vpop.f32.mrb[0].mxu0
      %2538 = vdwg.mxu0
      %v2539 = vadd.f32 %v2357, %v2509
      %v2540 = vadd.f32 %v2360, %v2512
      %v2541 = vadd.f32 %v2365, %v2517
      %v2542 = vadd.f32 %v2368, %v2520
      %v2543 = vadd.f32 %v2373, %v2525
      %v2544 = vadd.f32 %v2376, %v2528
      %v2545 = vadd.f32 %v2381, %v2533
      %v2546 = vadd.f32 %v2384, %v2536
      %v2547 = vld [vmem:[%s1847] sm:$0xf]
      %v2548 = vld [vmem:[%s1847 + $0x8] sm:$0xf]
      %v2549 = vld [vmem:[%s1847 + $0x10] sm:$0xf]
      %v2550 = vld [vmem:[%s1847 + $0x18] sm:$0xf]
      %v2551 = vld [vmem:[%s1847 + $0x20] sm:$0xf]
      %v2552 = vld [vmem:[%s1847 + $0x28] sm:$0xf]
      %v2553 = vld [vmem:[%s1847 + $0x30] sm:$0xf]
      %v2554 = vld [vmem:[%s1847 + $0x38] sm:$0xf]
      %v2555 = vld [vmem:[%s4 + $0xc] sm:$0xf]
      %v2564 = vunpack.c.l.b16 %v2547
      %v2565 = vunpack.c.l.b16 %v2548
      %v2566 = vunpack.c.l.b16 %v2549
      %v2567 = vunpack.c.l.b16 %v2550
      %v2568 = vunpack.c.l.b16 %v2551
      %v2569 = vunpack.c.l.b16 %v2552
      %v2570 = vunpack.c.l.b16 %v2553
      %v2571 = vunpack.c.l.b16 %v2554
      %v2572 = vpack.c.b16 %v2565, %v2564
      %v2573 = vpack.c.b16 %v2567, %v2566
      %v2574 = vpack.c.b16 %v2569, %v2568
      %v2575 = vpack.c.b16 %v2571, %v2570
      %v2577 = vsel %vm2205, %v2572, 0
      %v2580 = vsel %vm2205, %v2573, 0
      %v2583 = vsel %vm2205, %v2574, 0
      %v2586 = vsel %vm2205, %v2575, 0
      %v2589 = vsel %vm2218, %v2555, 0
      %2591 = vmatprep.subr.bf16.mxu0 0
      %2592 = vmatpush1.bf16.msra.mxu0 %v2589
      %2593 = vmatprep.subr.bf16.mxu0 0
      %2594 = vmatpush1.bf16.msra.mxu0 0
      %2595 = vmatprep.subr.bf16.mxu0 0
      %2596 = vmatpush1.bf16.msra.mxu0 0
      %2597 = vmatprep.subr.bf16.mxu0 0
      %2598 = vmatpush1.bf16.msra.mxu0 0
      %2599 = vmatprep.subr.bf16.mxu0 0
      %2600 = vmatpush1.bf16.msra.mxu0 0
      %2601 = vmatprep.subr.bf16.mxu0 0
      %2602 = vmatpush1.bf16.msra.mxu0 0
      %2603 = vmatprep.subr.bf16.mxu0 0
      %2604 = vmatpush1.bf16.msra.mxu0 0
      %2605 = vmatprep.subr.bf16.mxu0 0
      %2606 = vmatpush1.bf16.msra.mxu0 0
      %2607 = vmatprep.subr.bf16.mxu0 0
      %2608 = vmatpush1.bf16.msra.mxu0 0
      %2609 = vmatprep.subr.bf16.mxu0 0
      %2610 = vmatpush1.bf16.msra.mxu0 0
      %2611 = vmatprep.subr.bf16.mxu0 0
      %2612 = vmatpush1.bf16.msra.mxu0 0
      %2613 = vmatprep.subr.bf16.mxu0 0
      %2614 = vmatpush1.bf16.msra.mxu0 0
      %2615 = vmatprep.subr.bf16.mxu0 0
      %2616 = vmatpush1.bf16.msra.mxu0 0
      %2617 = vmatprep.subr.bf16.mxu0 0
      %2618 = vmatpush1.bf16.msra.mxu0 0
      %2619 = vmatprep.subr.bf16.mxu0 0
      %2620 = vmatpush1.bf16.msra.mxu0 0
      %2621 = vmatprep.subr.bf16.mxu0 0
      %2622 = vmatpush1.bf16.msra.mxu0 0
      %2623 = vmatprep.mubr.bf16.mxu0 0
      %2624 = vmatmul.mubr.bf16.gmra.mrb[0].mxu0 %v2577
      %v2625 = vpop.f32.mrb[0].mxu0
      %v2626 = vadd.f32 0.0, %v2625
      %v2627 = vpop.f32.mrb[0].mxu0
      %v2628 = vpop.f32.mrb[0].mxu0
      %v2629 = vadd.f32 0.0, %v2628
      %v2630 = vpop.f32.mrb[0].mxu0
      %2631 = vmatprep.mubr.bf16.mxu0 0
      %2632 = vmatmul.mubr.bf16.gmra.mrb[0].mxu0 %v2580
      %v2633 = vpop.f32.mrb[0].mxu0
      %v2634 = vadd.f32 0.0, %v2633
      %v2635 = vpop.f32.mrb[0].mxu0
      %v2636 = vpop.f32.mrb[0].mxu0
      %v2637 = vadd.f32 0.0, %v2636
      %v2638 = vpop.f32.mrb[0].mxu0
      %2639 = vmatprep.mubr.bf16.mxu0 0
      %2640 = vmatmul.mubr.bf16.gmra.mrb[0].mxu0 %v2583
      %v2641 = vpop.f32.mrb[0].mxu0
      %v2642 = vadd.f32 0.0, %v2641
      %v2643 = vpop.f32.mrb[0].mxu0
      %v2644 = vpop.f32.mrb[0].mxu0
      %v2645 = vadd.f32 0.0, %v2644
      %v2646 = vpop.f32.mrb[0].mxu0
      %2647 = vmatprep.mubr.bf16.mxu0 0
      %2648 = vmatmul.mubr.bf16.gmra.mrb[0].mxu0 %v2586
      %v2649 = vpop.f32.mrb[0].mxu0
      %v2650 = vadd.f32 0.0, %v2649
      %v2651 = vpop.f32.mrb[0].mxu0
      %v2652 = vpop.f32.mrb[0].mxu0
      %v2653 = vadd.f32 0.0, %v2652
      %v2654 = vpop.f32.mrb[0].mxu0
      %2655 = vdwg.mxu0
      %v2656 = vadd.f32 %v2539, %v2626
      %v2657 = vadd.f32 %v2540, %v2629
      %v2658 = vadd.f32 %v2541, %v2634
      %v2659 = vadd.f32 %v2542, %v2637
      %v2660 = vadd.f32 %v2543, %v2642
      %v2661 = vadd.f32 %v2544, %v2645
      %v2662 = vadd.f32 %v2545, %v2650
      %v2663 = vadd.f32 %v2546, %v2653
      %v2664 = vld [vmem:[%s1847] sm:$0xf]
      %v2665 = vld [vmem:[%s1847 + $0x4] sm:$0x1]
      %v2666 = vld [vmem:[%s1847 + $0x8] sm:$0xf]
      %v2667 = vld [vmem:[%s1847 + $0xc] sm:$0x1]
      %v2668 = vld [vmem:[%s1847 + $0x10] sm:$0xf]
      %v2669 = vld [vmem:[%s1847 + $0x14] sm:$0x1]
      %v2670 = vld [vmem:[%s1847 + $0x18] sm:$0xf]
      %v2671 = vld [vmem:[%s1847 + $0x1c] sm:$0x1]
      %v2672 = vld [vmem:[%s1847 + $0x20] sm:$0xf]
      %v2673 = vld [vmem:[%s1847 + $0x24] sm:$0x1]
      %v2674 = vld [vmem:[%s1847 + $0x28] sm:$0xf]
      %v2675 = vld [vmem:[%s1847 + $0x2c] sm:$0x1]
      %v2676 = vld [vmem:[%s1847 + $0x30] sm:$0xf]
      %v2677 = vld [vmem:[%s1847 + $0x34] sm:$0x1]
      %v2678 = vld [vmem:[%s1847 + $0x38] sm:$0xf]
      %v2679 = vld [vmem:[%s1847 + $0x3c] sm:$0x1]
      %v2681 = vshrl.u32 %v2664, 16
      %v2683 = vrot.slane %v2681, 4
      %v2684 = vshll.u32 %v2664, 16
      %v2686 = vrot.slane %v2684, 5
      %v2687 = vor.u32 %v2683, %v2686
      %v2688 = vrot.slane %v2687, 4
      %v2690 = vshll.u32 %v2665, 16
      %v2692 = vrot.slane %v2690, 5
      %v2693 = vsel %vm646, %v2688, %v2692
      %v2695 = vshrl.u32 %v2666, 16
      %v2697 = vrot.slane %v2695, 4
      %v2698 = vshll.u32 %v2666, 16
      %v2700 = vrot.slane %v2698, 5
      %v2701 = vor.u32 %v2697, %v2700
      %v2702 = vrot.slane %v2701, 4
      %v2704 = vshll.u32 %v2667, 16
      %v2706 = vrot.slane %v2704, 5
      %v2707 = vsel %vm646, %v2702, %v2706
      %v2709 = vshrl.u32 %v2668, 16
      %v2711 = vrot.slane %v2709, 4
      %v2712 = vshll.u32 %v2668, 16
      %v2714 = vrot.slane %v2712, 5
      %v2715 = vor.u32 %v2711, %v2714
      %v2716 = vrot.slane %v2715, 4
      %v2718 = vshll.u32 %v2669, 16
      %v2720 = vrot.slane %v2718, 5
      %v2721 = vsel %vm646, %v2716, %v2720
      %v2723 = vshrl.u32 %v2670, 16
      %v2725 = vrot.slane %v2723, 4
      %v2726 = vshll.u32 %v2670, 16
      %v2728 = vrot.slane %v2726, 5
      %v2729 = vor.u32 %v2725, %v2728
      %v2730 = vrot.slane %v2729, 4
      %v2732 = vshll.u32 %v2671, 16
      %v2734 = vrot.slane %v2732, 5
      %v2735 = vsel %vm646, %v2730, %v2734
      %v2737 = vshrl.u32 %v2672, 16
      %v2739 = vrot.slane %v2737, 4
      %v2740 = vshll.u32 %v2672, 16
      %v2742 = vrot.slane %v2740, 5
      %v2743 = vor.u32 %v2739, %v2742
      %v2744 = vrot.slane %v2743, 4
      %v2746 = vshll.u32 %v2673, 16
      %v2748 = vrot.slane %v2746, 5
      %v2749 = vsel %vm646, %v2744, %v2748
      %v2751 = vshrl.u32 %v2674, 16
      %v2753 = vrot.slane %v2751, 4
      %v2754 = vshll.u32 %v2674, 16
      %v2756 = vrot.slane %v2754, 5
      %v2757 = vor.u32 %v2753, %v2756
      %v2758 = vrot.slane %v2757, 4
      %v2760 = vshll.u32 %v2675, 16
      %v2762 = vrot.slane %v2760, 5
      %v2763 = vsel %vm646, %v2758, %v2762
      %v2765 = vshrl.u32 %v2676, 16
      %v2767 = vrot.slane %v2765, 4
      %v2768 = vshll.u32 %v2676, 16
      %v2770 = vrot.slane %v2768, 5
      %v2771 = vor.u32 %v2767, %v2770
      %v2772 = vrot.slane %v2771, 4
      %v2774 = vshll.u32 %v2677, 16
      %v2776 = vrot.slane %v2774, 5
      %v2777 = vsel %vm646, %v2772, %v2776
      %v2779 = vshrl.u32 %v2678, 16
      %v2781 = vrot.slane %v2779, 4
      %v2782 = vshll.u32 %v2678, 16
      %v2784 = vrot.slane %v2782, 5
      %v2785 = vor.u32 %v2781, %v2784
      %v2786 = vrot.slane %v2785, 4
      %v2788 = vshll.u32 %v2679, 16
      %v2790 = vrot.slane %v2788, 5
      %v2791 = vsel %vm646, %v2786, %v2790
      %v2792 = vld [vmem:[%s4 + $0x10] sm:$0xf]
      %v2793 = vunpack.c.l.b16 %v2693
      %v2794 = vunpack.c.l.b16 %v2707
      %v2795 = vunpack.c.l.b16 %v2721
      %v2796 = vunpack.c.l.b16 %v2735
      %v2797 = vunpack.c.l.b16 %v2749
      %v2798 = vunpack.c.l.b16 %v2763
      %v2799 = vunpack.c.l.b16 %v2777
      %v2800 = vunpack.c.l.b16 %v2791
      %v2801 = vpack.c.b16 %v2794, %v2793
      %v2802 = vpack.c.b16 %v2796, %v2795
      %v2803 = vpack.c.b16 %v2798, %v2797
      %v2804 = vpack.c.b16 %v2800, %v2799
      %v2806 = vsel %vm2205, %v2801, 0
      %v2809 = vsel %vm2205, %v2802, 0
      %v2812 = vsel %vm2205, %v2803, 0
      %v2815 = vsel %vm2205, %v2804, 0
      %v2818 = vsel %vm2218, %v2792, 0
      %2820 = vmatprep.subr.bf16.mxu0 0
      %2821 = vmatpush1.bf16.msra.mxu0 %v2818
      %2822 = vmatprep.subr.bf16.mxu0 0
      %2823 = vmatpush1.bf16.msra.mxu0 0
      %2824 = vmatprep.subr.bf16.mxu0 0
      %2825 = vmatpush1.bf16.msra.mxu0 0
      %2826 = vmatprep.subr.bf16.mxu0 0
      %2827 = vmatpush1.bf16.msra.mxu0 0
      %2828 = vmatprep.subr.bf16.mxu0 0
      %2829 = vmatpush1.bf16.msra.mxu0 0
      %2830 = vmatprep.subr.bf16.mxu0 0
      %2831 = vmatpush1.bf16.msra.mxu0 0
      %2832 = vmatprep.subr.bf16.mxu0 0
      %2833 = vmatpush1.bf16.msra.mxu0 0
      %2834 = vmatprep.subr.bf16.mxu0 0
      %2835 = vmatpush1.bf16.msra.mxu0 0
      %2836 = vmatprep.subr.bf16.mxu0 0
      %2837 = vmatpush1.bf16.msra.mxu0 0
      %2838 = vmatprep.subr.bf16.mxu0 0
      %2839 = vmatpush1.bf16.msra.mxu0 0
      %2840 = vmatprep.subr.bf16.mxu0 0
      %2841 = vmatpush1.bf16.msra.mxu0 0
      %2842 = vmatprep.subr.bf16.mxu0 0
      %2843 = vmatpush1.bf16.msra.mxu0 0
      %2844 = vmatprep.subr.bf16.mxu0 0
      %2845 = vmatpush1.bf16.msra.mxu0 0
      %2846 = vmatprep.subr.bf16.mxu0 0
      %2847 = vmatpush1.bf16.msra.mxu0 0
      %2848 = vmatprep.subr.bf16.mxu0 0
      %2849 = vmatpush1.bf16.msra.mxu0 0
      %2850 = vmatprep.subr.bf16.mxu0 0
      %2851 = vmatpush1.bf16.msra.mxu0 0
      %2852 = vmatprep.mubr.bf16.mxu0 0
      %2853 = vmatmul.mubr.bf16.gmra.mrb[0].mxu0 %v2806
      %v2854 = vpop.f32.mrb[0].mxu0
      %v2855 = vadd.f32 0.0, %v2854
      %v2856 = vpop.f32.mrb[0].mxu0
      %v2857 = vpop.f32.mrb[0].mxu0
      %v2858 = vadd.f32 0.0, %v2857
      %v2859 = vpop.f32.mrb[0].mxu0
      %2860 = vmatprep.mubr.bf16.mxu0 0
      %2861 = vmatmul.mubr.bf16.gmra.mrb[0].mxu0 %v2809
      %v2862 = vpop.f32.mrb[0].mxu0
      %v2863 = vadd.f32 0.0, %v2862
      %v2864 = vpop.f32.mrb[0].mxu0
      %v2865 = vpop.f32.mrb[0].mxu0
      %v2866 = vadd.f32 0.0, %v2865
      %v2867 = vpop.f32.mrb[0].mxu0
      %2868 = vmatprep.mubr.bf16.mxu0 0
      %2869 = vmatmul.mubr.bf16.gmra.mrb[0].mxu0 %v2812
      %v2870 = vpop.f32.mrb[0].mxu0
      %v2871 = vadd.f32 0.0, %v2870
      %v2872 = vpop.f32.mrb[0].mxu0
      %v2873 = vpop.f32.mrb[0].mxu0
      %v2874 = vadd.f32 0.0, %v2873
      %v2875 = vpop.f32.mrb[0].mxu0
      %2876 = vmatprep.mubr.bf16.mxu0 0
      %2877 = vmatmul.mubr.bf16.gmra.mrb[0].mxu0 %v2815
      %v2878 = vpop.f32.mrb[0].mxu0
      %v2879 = vadd.f32 0.0, %v2878
      %v2880 = vpop.f32.mrb[0].mxu0
      %v2881 = vpop.f32.mrb[0].mxu0
      %v2882 = vadd.f32 0.0, %v2881
      %v2883 = vpop.f32.mrb[0].mxu0
      %2884 = vdwg.mxu0
      %v2885 = vadd.f32 %v2656, %v2855
      %v2886 = vadd.f32 %v2657, %v2858
      %v2887 = vadd.f32 %v2658, %v2863
      %v2888 = vadd.f32 %v2659, %v2866
      %v2889 = vadd.f32 %v2660, %v2871
      %v2890 = vadd.f32 %v2661, %v2874
      %v2891 = vadd.f32 %v2662, %v2879
      %v2892 = vadd.f32 %v2663, %v2882
      %v2893 = vld [vmem:[%s1847] sm:$0xe]
      %v2894 = vld [vmem:[%s1847 + $0x8] sm:$0xe]
      %v2895 = vld [vmem:[%s1847 + $0x10] sm:$0xe]
      %v2896 = vld [vmem:[%s1847 + $0x18] sm:$0xe]
      %v2897 = vld [vmem:[%s1847 + $0x20] sm:$0xe]
      %v2898 = vld [vmem:[%s1847 + $0x28] sm:$0xe]
      %v2899 = vld [vmem:[%s1847 + $0x30] sm:$0xe]
      %v2900 = vld [vmem:[%s1847 + $0x38] sm:$0xe]
      %v2917 = vrot.slane %v2893, 5
      %v2918 = vrot.slane %v2917, 4
      %v2919 = vrot.slane %v2665, 5
      %v2920 = vsel %vm2413, %v2918, %v2919
      %v2921 = vrot.slane %v2894, 5
      %v2922 = vrot.slane %v2921, 4
      %v2923 = vrot.slane %v2667, 5
      %v2924 = vsel %vm2413, %v2922, %v2923
      %v2925 = vrot.slane %v2895, 5
      %v2926 = vrot.slane %v2925, 4
      %v2927 = vrot.slane %v2669, 5
      %v2928 = vsel %vm2413, %v2926, %v2927
      %v2929 = vrot.slane %v2896, 5
      %v2930 = vrot.slane %v2929, 4
      %v2931 = vrot.slane %v2671, 5
      %v2932 = vsel %vm2413, %v2930, %v2931
      %v2933 = vrot.slane %v2897, 5
      %v2934 = vrot.slane %v2933, 4
      %v2935 = vrot.slane %v2673, 5
      %v2936 = vsel %vm2413, %v2934, %v2935
      %v2937 = vrot.slane %v2898, 5
      %v2938 = vrot.slane %v2937, 4
      %v2939 = vrot.slane %v2675, 5
      %v2940 = vsel %vm2413, %v2938, %v2939
      %v2941 = vrot.slane %v2899, 5
      %v2942 = vrot.slane %v2941, 4
      %v2943 = vrot.slane %v2677, 5
      %v2944 = vsel %vm2413, %v2942, %v2943
      %v2945 = vrot.slane %v2900, 5
      %v2946 = vrot.slane %v2945, 4
      %v2947 = vrot.slane %v2679, 5
      %v2948 = vsel %vm2413, %v2946, %v2947
      %v2949 = vld [vmem:[%s4 + $0x14] sm:$0xf]
      %v2950 = vunpack.c.l.b16 %v2920
      %v2951 = vunpack.c.l.b16 %v2924
      %v2952 = vunpack.c.l.b16 %v2928
      %v2953 = vunpack.c.l.b16 %v2932
      %v2954 = vunpack.c.l.b16 %v2936
      %v2955 = vunpack.c.l.b16 %v2940
      %v2956 = vunpack.c.l.b16 %v2944
      %v2957 = vunpack.c.l.b16 %v2948
      %v2958 = vpack.c.b16 %v2951, %v2950
      %v2959 = vpack.c.b16 %v2953, %v2952
      %v2960 = vpack.c.b16 %v2955, %v2954
      %v2961 = vpack.c.b16 %v2957, %v2956
      %v2963 = vsel %vm2205, %v2958, 0
      %v2966 = vsel %vm2205, %v2959, 0
      %v2969 = vsel %vm2205, %v2960, 0
      %v2972 = vsel %vm2205, %v2961, 0
      %v2975 = vsel %vm2218, %v2949, 0
      %2977 = vmatprep.subr.bf16.mxu0 0
      %2978 = vmatpush1.bf16.msra.mxu0 %v2975
      %2979 = vmatprep.subr.bf16.mxu0 0
      %2980 = vmatpush1.bf16.msra.mxu0 0
      %2981 = vmatprep.subr.bf16.mxu0 0
      %2982 = vmatpush1.bf16.msra.mxu0 0
      %2983 = vmatprep.subr.bf16.mxu0 0
      %2984 = vmatpush1.bf16.msra.mxu0 0
      %2985 = vmatprep.subr.bf16.mxu0 0
      %2986 = vmatpush1.bf16.msra.mxu0 0
      %2987 = vmatprep.subr.bf16.mxu0 0
      %2988 = vmatpush1.bf16.msra.mxu0 0
      %2989 = vmatprep.subr.bf16.mxu0 0
      %2990 = vmatpush1.bf16.msra.mxu0 0
      %2991 = vmatprep.subr.bf16.mxu0 0
      %2992 = vmatpush1.bf16.msra.mxu0 0
      %2993 = vmatprep.subr.bf16.mxu0 0
      %2994 = vmatpush1.bf16.msra.mxu0 0
      %2995 = vmatprep.subr.bf16.mxu0 0
      %2996 = vmatpush1.bf16.msra.mxu0 0
      %2997 = vmatprep.subr.bf16.mxu0 0
      %2998 = vmatpush1.bf16.msra.mxu0 0
      %2999 = vmatprep.subr.bf16.mxu0 0
      %3000 = vmatpush1.bf16.msra.mxu0 0
      %3001 = vmatprep.subr.bf16.mxu0 0
      %3002 = vmatpush1.bf16.msra.mxu0 0
      %3003 = vmatprep.subr.bf16.mxu0 0
      %3004 = vmatpush1.bf16.msra.mxu0 0
      %3005 = vmatprep.subr.bf16.mxu0 0
      %3006 = vmatpush1.bf16.msra.mxu0 0
      %3007 = vmatprep.subr.bf16.mxu0 0
      %3008 = vmatpush1.bf16.msra.mxu0 0
      %3009 = vmatprep.mubr.bf16.mxu0 0
      %3010 = vmatmul.mubr.bf16.gmra.mrb[0].mxu0 %v2963
      %v3011 = vpop.f32.mrb[0].mxu0
      %v3012 = vadd.f32 0.0, %v3011
      %v3013 = vpop.f32.mrb[0].mxu0
      %v3014 = vpop.f32.mrb[0].mxu0
      %v3015 = vadd.f32 0.0, %v3014
      %v3016 = vpop.f32.mrb[0].mxu0
      %3017 = vmatprep.mubr.bf16.mxu0 0
      %3018 = vmatmul.mubr.bf16.gmra.mrb[0].mxu0 %v2966
      %v3019 = vpop.f32.mrb[0].mxu0
      %v3020 = vadd.f32 0.0, %v3019
      %v3021 = vpop.f32.mrb[0].mxu0
      %v3022 = vpop.f32.mrb[0].mxu0
      %v3023 = vadd.f32 0.0, %v3022
      %v3024 = vpop.f32.mrb[0].mxu0
      %3025 = vmatprep.mubr.bf16.mxu0 0
      %3026 = vmatmul.mubr.bf16.gmra.mrb[0].mxu0 %v2969
      %v3027 = vpop.f32.mrb[0].mxu0
      %v3028 = vadd.f32 0.0, %v3027
      %v3029 = vpop.f32.mrb[0].mxu0
      %v3030 = vpop.f32.mrb[0].mxu0
      %v3031 = vadd.f32 0.0, %v3030
      %v3032 = vpop.f32.mrb[0].mxu0
      %3033 = vmatprep.mubr.bf16.mxu0 0
      %3034 = vmatmul.mubr.bf16.gmra.mrb[0].mxu0 %v2972
      %v3035 = vpop.f32.mrb[0].mxu0
      %v3036 = vadd.f32 0.0, %v3035
      %v3037 = vpop.f32.mrb[0].mxu0
      %v3038 = vpop.f32.mrb[0].mxu0
      %v3039 = vadd.f32 0.0, %v3038
      %v3040 = vpop.f32.mrb[0].mxu0
      %3041 = vdwg.mxu0
      %v3042 = vadd.f32 %v2885, %v3012
      %v3043 = vadd.f32 %v2886, %v3015
      %v3044 = vadd.f32 %v2887, %v3020
      %v3045 = vadd.f32 %v2888, %v3023
      %v3046 = vadd.f32 %v2889, %v3028
      %v3047 = vadd.f32 %v2890, %v3031
      %v3048 = vadd.f32 %v2891, %v3036
      %v3049 = vadd.f32 %v2892, %v3039
      %s3050 = scalar_lea.vmem [#allocation2], 16
      %v3051 = vld [vmem:[%s3050] sm:$0xf]
      %v3052 = vld [vmem:[%s3050 + $0x8] sm:$0xf]
      %v3053 = vld [vmem:[%s3050 + $0x10] sm:$0xf]
      %v3054 = vld [vmem:[%s3050 + $0x18] sm:$0xf]
      %v3055 = vld [vmem:[%s3050 + $0x20] sm:$0xf]
      %v3056 = vld [vmem:[%s3050 + $0x28] sm:$0xf]
      %v3057 = vld [vmem:[%s3050 + $0x30] sm:$0xf]
      %v3058 = vld [vmem:[%s3050 + $0x38] sm:$0xf]
      %v3059 = vld [vmem:[%s4 + $0x18] sm:$0xf]
      %v3068 = vunpack.c.l.b16 %v3051
      %v3069 = vunpack.c.l.b16 %v3052
      %v3070 = vunpack.c.l.b16 %v3053
      %v3071 = vunpack.c.l.b16 %v3054
      %v3072 = vunpack.c.l.b16 %v3055
      %v3073 = vunpack.c.l.b16 %v3056
      %v3074 = vunpack.c.l.b16 %v3057
      %v3075 = vunpack.c.l.b16 %v3058
      %v3076 = vpack.c.b16 %v3069, %v3068
      %v3077 = vpack.c.b16 %v3071, %v3070
      %v3078 = vpack.c.b16 %v3073, %v3072
      %v3079 = vpack.c.b16 %v3075, %v3074
      %v3081 = vsel %vm2205, %v3076, 0
      %v3084 = vsel %vm2205, %v3077, 0
      %v3087 = vsel %vm2205, %v3078, 0
      %v3090 = vsel %vm2205, %v3079, 0
      %v3093 = vsel %vm2218, %v3059, 0
      %3095 = vmatprep.subr.bf16.mxu0 0
      %3096 = vmatpush1.bf16.msra.mxu0 %v3093
      %3097 = vmatprep.subr.bf16.mxu0 0
      %3098 = vmatpush1.bf16.msra.mxu0 0
      %3099 = vmatprep.subr.bf16.mxu0 0
      %3100 = vmatpush1.bf16.msra.mxu0 0
      %3101 = vmatprep.subr.bf16.mxu0 0
      %3102 = vmatpush1.bf16.msra.mxu0 0
      %3103 = vmatprep.subr.bf16.mxu0 0
      %3104 = vmatpush1.bf16.msra.mxu0 0
      %3105 = vmatprep.subr.bf16.mxu0 0
      %3106 = vmatpush1.bf16.msra.mxu0 0
      %3107 = vmatprep.subr.bf16.mxu0 0
      %3108 = vmatpush1.bf16.msra.mxu0 0
      %3109 = vmatprep.subr.bf16.mxu0 0
      %3110 = vmatpush1.bf16.msra.mxu0 0
      %3111 = vmatprep.subr.bf16.mxu0 0
      %3112 = vmatpush1.bf16.msra.mxu0 0
      %3113 = vmatprep.subr.bf16.mxu0 0
      %3114 = vmatpush1.bf16.msra.mxu0 0
      %3115 = vmatprep.subr.bf16.mxu0 0
      %3116 = vmatpush1.bf16.msra.mxu0 0
      %3117 = vmatprep.subr.bf16.mxu0 0
      %3118 = vmatpush1.bf16.msra.mxu0 0
      %3119 = vmatprep.subr.bf16.mxu0 0
      %3120 = vmatpush1.bf16.msra.mxu0 0
      %3121 = vmatprep.subr.bf16.mxu0 0
      %3122 = vmatpush1.bf16.msra.mxu0 0
      %3123 = vmatprep.subr.bf16.mxu0 0
      %3124 = vmatpush1.bf16.msra.mxu0 0
      %3125 = vmatprep.subr.bf16.mxu0 0
      %3126 = vmatpush1.bf16.msra.mxu0 0
      %3127 = vmatprep.mubr.bf16.mxu0 0
      %3128 = vmatmul.mubr.bf16.gmra.mrb[0].mxu0 %v3081
      %v3129 = vpop.f32.mrb[0].mxu0
      %v3130 = vadd.f32 0.0, %v3129
      %v3131 = vpop.f32.mrb[0].mxu0
      %v3132 = vpop.f32.mrb[0].mxu0
      %v3133 = vadd.f32 0.0, %v3132
      %v3134 = vpop.f32.mrb[0].mxu0
      %3135 = vmatprep.mubr.bf16.mxu0 0
      %3136 = vmatmul.mubr.bf16.gmra.mrb[0].mxu0 %v3084
      %v3137 = vpop.f32.mrb[0].mxu0
      %v3138 = vadd.f32 0.0, %v3137
      %v3139 = vpop.f32.mrb[0].mxu0
      %v3140 = vpop.f32.mrb[0].mxu0
      %v3141 = vadd.f32 0.0, %v3140
      %v3142 = vpop.f32.mrb[0].mxu0
      %3143 = vmatprep.mubr.bf16.mxu0 0
      %3144 = vmatmul.mubr.bf16.gmra.mrb[0].mxu0 %v3087
      %v3145 = vpop.f32.mrb[0].mxu0
      %v3146 = vadd.f32 0.0, %v3145
      %v3147 = vpop.f32.mrb[0].mxu0
      %v3148 = vpop.f32.mrb[0].mxu0
      %v3149 = vadd.f32 0.0, %v3148
      %v3150 = vpop.f32.mrb[0].mxu0
      %3151 = vmatprep.mubr.bf16.mxu0 0
      %3152 = vmatmul.mubr.bf16.gmra.mrb[0].mxu0 %v3090
      %v3153 = vpop.f32.mrb[0].mxu0
      %v3154 = vadd.f32 0.0, %v3153
      %v3155 = vpop.f32.mrb[0].mxu0
      %v3156 = vpop.f32.mrb[0].mxu0
      %v3157 = vadd.f32 0.0, %v3156
      %v3158 = vpop.f32.mrb[0].mxu0
      %3159 = vdwg.mxu0
      %v3160 = vadd.f32 %v3042, %v3130
      %v3161 = vadd.f32 %v3043, %v3133
      %v3162 = vadd.f32 %v3044, %v3138
      %v3163 = vadd.f32 %v3045, %v3141
      %v3164 = vadd.f32 %v3046, %v3146
      %v3165 = vadd.f32 %v3047, %v3149
      %v3166 = vadd.f32 %v3048, %v3154
      %v3167 = vadd.f32 %v3049, %v3157
      %v3168 = vld [vmem:[%s3050] sm:$0xf]
      %v3169 = vld [vmem:[%s3050 + $0x4] sm:$0x1]
      %v3170 = vld [vmem:[%s3050 + $0x8] sm:$0xf]
      %v3171 = vld [vmem:[%s3050 + $0xc] sm:$0x1]
      %v3172 = vld [vmem:[%s3050 + $0x10] sm:$0xf]
      %v3173 = vld [vmem:[%s3050 + $0x14] sm:$0x1]
      %v3174 = vld [vmem:[%s3050 + $0x18] sm:$0xf]
      %v3175 = vld [vmem:[%s3050 + $0x1c] sm:$0x1]
      %v3176 = vld [vmem:[%s3050 + $0x20] sm:$0xf]
      %v3177 = vld [vmem:[%s3050 + $0x24] sm:$0x1]
      %v3178 = vld [vmem:[%s3050 + $0x28] sm:$0xf]
      %v3179 = vld [vmem:[%s3050 + $0x2c] sm:$0x1]
      %v3180 = vld [vmem:[%s3050 + $0x30] sm:$0xf]
      %v3181 = vld [vmem:[%s3050 + $0x34] sm:$0x1]
      %v3182 = vld [vmem:[%s3050 + $0x38] sm:$0xf]
      %v3183 = vld [vmem:[%s3050 + $0x3c] sm:$0x1]
      %v3185 = vshrl.u32 %v3168, 16
      %v3187 = vrot.slane %v3185, 4
      %v3188 = vshll.u32 %v3168, 16
      %v3190 = vrot.slane %v3188, 5
      %v3191 = vor.u32 %v3187, %v3190
      %v3192 = vrot.slane %v3191, 4
      %v3194 = vshll.u32 %v3169, 16
      %v3196 = vrot.slane %v3194, 5
      %v3197 = vsel %vm646, %v3192, %v3196
      %v3199 = vshrl.u32 %v3170, 16
      %v3201 = vrot.slane %v3199, 4
      %v3202 = vshll.u32 %v3170, 16
      %v3204 = vrot.slane %v3202, 5
      %v3205 = vor.u32 %v3201, %v3204
      %v3206 = vrot.slane %v3205, 4
      %v3208 = vshll.u32 %v3171, 16
      %v3210 = vrot.slane %v3208, 5
      %v3211 = vsel %vm646, %v3206, %v3210
      %v3213 = vshrl.u32 %v3172, 16
      %v3215 = vrot.slane %v3213, 4
      %v3216 = vshll.u32 %v3172, 16
      %v3218 = vrot.slane %v3216, 5
      %v3219 = vor.u32 %v3215, %v3218
      %v3220 = vrot.slane %v3219, 4
      %v3222 = vshll.u32 %v3173, 16
      %v3224 = vrot.slane %v3222, 5
      %v3225 = vsel %vm646, %v3220, %v3224
      %v3227 = vshrl.u32 %v3174, 16
      %v3229 = vrot.slane %v3227, 4
      %v3230 = vshll.u32 %v3174, 16
      %v3232 = vrot.slane %v3230, 5
      %v3233 = vor.u32 %v3229, %v3232
      %v3234 = vrot.slane %v3233, 4
      %v3236 = vshll.u32 %v3175, 16
      %v3238 = vrot.slane %v3236, 5
      %v3239 = vsel %vm646, %v3234, %v3238
      %v3241 = vshrl.u32 %v3176, 16
      %v3243 = vrot.slane %v3241, 4
      %v3244 = vshll.u32 %v3176, 16
      %v3246 = vrot.slane %v3244, 5
      %v3247 = vor.u32 %v3243, %v3246
      %v3248 = vrot.slane %v3247, 4
      %v3250 = vshll.u32 %v3177, 16
      %v3252 = vrot.slane %v3250, 5
      %v3253 = vsel %vm646, %v3248, %v3252
      %v3255 = vshrl.u32 %v3178, 16
      %v3257 = vrot.slane %v3255, 4
      %v3258 = vshll.u32 %v3178, 16
      %v3260 = vrot.slane %v3258, 5
      %v3261 = vor.u32 %v3257, %v3260
      %v3262 = vrot.slane %v3261, 4
      %v3264 = vshll.u32 %v3179, 16
      %v3266 = vrot.slane %v3264, 5
      %v3267 = vsel %vm646, %v3262, %v3266
      %v3269 = vshrl.u32 %v3180, 16
      %v3271 = vrot.slane %v3269, 4
      %v3272 = vshll.u32 %v3180, 16
      %v3274 = vrot.slane %v3272, 5
      %v3275 = vor.u32 %v3271, %v3274
      %v3276 = vrot.slane %v3275, 4
      %v3278 = vshll.u32 %v3181, 16
      %v3280 = vrot.slane %v3278, 5
      %v3281 = vsel %vm646, %v3276, %v3280
      %v3283 = vshrl.u32 %v3182, 16
      %v3285 = vrot.slane %v3283, 4
      %v3286 = vshll.u32 %v3182, 16
      %v3288 = vrot.slane %v3286, 5
      %v3289 = vor.u32 %v3285, %v3288
      %v3290 = vrot.slane %v3289, 4
      %v3292 = vshll.u32 %v3183, 16
      %v3294 = vrot.slane %v3292, 5
      %v3295 = vsel %vm646, %v3290, %v3294
      %v3296 = vld [vmem:[%s4 + $0x1c] sm:$0xf]
      %v3297 = vunpack.c.l.b16 %v3197
      %v3298 = vunpack.c.l.b16 %v3211
      %v3299 = vunpack.c.l.b16 %v3225
      %v3300 = vunpack.c.l.b16 %v3239
      %v3301 = vunpack.c.l.b16 %v3253
      %v3302 = vunpack.c.l.b16 %v3267
      %v3303 = vunpack.c.l.b16 %v3281
      %v3304 = vunpack.c.l.b16 %v3295
      %v3305 = vpack.c.b16 %v3298, %v3297
      %v3306 = vpack.c.b16 %v3300, %v3299
      %v3307 = vpack.c.b16 %v3302, %v3301
      %v3308 = vpack.c.b16 %v3304, %v3303
      %v3310 = vsel %vm2205, %v3305, 0
      %v3313 = vsel %vm2205, %v3306, 0
      %v3316 = vsel %vm2205, %v3307, 0
      %v3319 = vsel %vm2205, %v3308, 0
      %v3322 = vsel %vm2218, %v3296, 0
      %3324 = vmatprep.subr.bf16.mxu0 0
      %3325 = vmatpush1.bf16.msra.mxu0 %v3322
      %3326 = vmatprep.subr.bf16.mxu0 0
      %3327 = vmatpush1.bf16.msra.mxu0 0
      %3328 = vmatprep.subr.bf16.mxu0 0
      %3329 = vmatpush1.bf16.msra.mxu0 0
      %3330 = vmatprep.subr.bf16.mxu0 0
      %3331 = vmatpush1.bf16.msra.mxu0 0
      %3332 = vmatprep.subr.bf16.mxu0 0
      %3333 = vmatpush1.bf16.msra.mxu0 0
      %3334 = vmatprep.subr.bf16.mxu0 0
      %3335 = vmatpush1.bf16.msra.mxu0 0
      %3336 = vmatprep.subr.bf16.mxu0 0
      %3337 = vmatpush1.bf16.msra.mxu0 0
      %3338 = vmatprep.subr.bf16.mxu0 0
      %3339 = vmatpush1.bf16.msra.mxu0 0
      %3340 = vmatprep.subr.bf16.mxu0 0
      %3341 = vmatpush1.bf16.msra.mxu0 0
      %3342 = vmatprep.subr.bf16.mxu0 0
      %3343 = vmatpush1.bf16.msra.mxu0 0
      %3344 = vmatprep.subr.bf16.mxu0 0
      %3345 = vmatpush1.bf16.msra.mxu0 0
      %3346 = vmatprep.subr.bf16.mxu0 0
      %3347 = vmatpush1.bf16.msra.mxu0 0
      %3348 = vmatprep.subr.bf16.mxu0 0
      %3349 = vmatpush1.bf16.msra.mxu0 0
      %3350 = vmatprep.subr.bf16.mxu0 0
      %3351 = vmatpush1.bf16.msra.mxu0 0
      %3352 = vmatprep.subr.bf16.mxu0 0
      %3353 = vmatpush1.bf16.msra.mxu0 0
      %3354 = vmatprep.subr.bf16.mxu0 0
      %3355 = vmatpush1.bf16.msra.mxu0 0
      %3356 = vmatprep.mubr.bf16.mxu0 0
      %3357 = vmatmul.mubr.bf16.gmra.mrb[0].mxu0 %v3310
      %v3358 = vpop.f32.mrb[0].mxu0
      %v3359 = vadd.f32 0.0, %v3358
      %v3360 = vpop.f32.mrb[0].mxu0
      %v3361 = vpop.f32.mrb[0].mxu0
      %v3362 = vadd.f32 0.0, %v3361
      %v3363 = vpop.f32.mrb[0].mxu0
      %3364 = vmatprep.mubr.bf16.mxu0 0
      %3365 = vmatmul.mubr.bf16.gmra.mrb[0].mxu0 %v3313
      %v3366 = vpop.f32.mrb[0].mxu0
      %v3367 = vadd.f32 0.0, %v3366
      %v3368 = vpop.f32.mrb[0].mxu0
      %v3369 = vpop.f32.mrb[0].mxu0
      %v3370 = vadd.f32 0.0, %v3369
      %v3371 = vpop.f32.mrb[0].mxu0
      %3372 = vmatprep.mubr.bf16.mxu0 0
      %3373 = vmatmul.mubr.bf16.gmra.mrb[0].mxu0 %v3316
      %v3374 = vpop.f32.mrb[0].mxu0
      %v3375 = vadd.f32 0.0, %v3374
      %v3376 = vpop.f32.mrb[0].mxu0
      %v3377 = vpop.f32.mrb[0].mxu0
      %v3378 = vadd.f32 0.0, %v3377
      %v3379 = vpop.f32.mrb[0].mxu0
      %3380 = vmatprep.mubr.bf16.mxu0 0
      %3381 = vmatmul.mubr.bf16.gmra.mrb[0].mxu0 %v3319
      %v3382 = vpop.f32.mrb[0].mxu0
      %v3383 = vadd.f32 0.0, %v3382
      %v3384 = vpop.f32.mrb[0].mxu0
      %v3385 = vpop.f32.mrb[0].mxu0
      %v3386 = vadd.f32 0.0, %v3385
      %v3387 = vpop.f32.mrb[0].mxu0
      %3388 = vdwg.mxu0
      %v3389 = vadd.f32 %v3160, %v3359
      %v3390 = vadd.f32 %v3161, %v3362
      %v3391 = vadd.f32 %v3162, %v3367
      %v3392 = vadd.f32 %v3163, %v3370
      %v3393 = vadd.f32 %v3164, %v3375
      %v3394 = vadd.f32 %v3165, %v3378
      %v3395 = vadd.f32 %v3166, %v3383
      %v3396 = vadd.f32 %v3167, %v3386
      %v3397 = vld [vmem:[%s3050] sm:$0xe]
      %v3398 = vld [vmem:[%s3050 + $0x8] sm:$0xe]
      %v3399 = vld [vmem:[%s3050 + $0x10] sm:$0xe]
      %v3400 = vld [vmem:[%s3050 + $0x18] sm:$0xe]
      %v3401 = vld [vmem:[%s3050 + $0x20] sm:$0xe]
      %v3402 = vld [vmem:[%s3050 + $0x28] sm:$0xe]
      %v3403 = vld [vmem:[%s3050 + $0x30] sm:$0xe]
      %v3404 = vld [vmem:[%s3050 + $0x38] sm:$0xe]
      %v3421 = vrot.slane %v3397, 5
      %v3422 = vrot.slane %v3421, 4
      %v3423 = vrot.slane %v3169, 5
      %v3424 = vsel %vm2413, %v3422, %v3423
      %v3425 = vrot.slane %v3398, 5
      %v3426 = vrot.slane %v3425, 4
      %v3427 = vrot.slane %v3171, 5
      %v3428 = vsel %vm2413, %v3426, %v3427
      %v3429 = vrot.slane %v3399, 5
      %v3430 = vrot.slane %v3429, 4
      %v3431 = vrot.slane %v3173, 5
      %v3432 = vsel %vm2413, %v3430, %v3431
      %v3433 = vrot.slane %v3400, 5
      %v3434 = vrot.slane %v3433, 4
      %v3435 = vrot.slane %v3175, 5
      %v3436 = vsel %vm2413, %v3434, %v3435
      %v3437 = vrot.slane %v3401, 5
      %v3438 = vrot.slane %v3437, 4
      %v3439 = vrot.slane %v3177, 5
      %v3440 = vsel %vm2413, %v3438, %v3439
      %v3441 = vrot.slane %v3402, 5
      %v3442 = vrot.slane %v3441, 4
      %v3443 = vrot.slane %v3179, 5
      %v3444 = vsel %vm2413, %v3442, %v3443
      %v3445 = vrot.slane %v3403, 5
      %v3446 = vrot.slane %v3445, 4
      %v3447 = vrot.slane %v3181, 5
      %v3448 = vsel %vm2413, %v3446, %v3447
      %v3449 = vrot.slane %v3404, 5
      %v3450 = vrot.slane %v3449, 4
      %v3451 = vrot.slane %v3183, 5
      %v3452 = vsel %vm2413, %v3450, %v3451
      %v3453 = vld [vmem:[%s4 + $0x20] sm:$0xf]
      %v3454 = vunpack.c.l.b16 %v3424
      %v3455 = vunpack.c.l.b16 %v3428
      %v3456 = vunpack.c.l.b16 %v3432
      %v3457 = vunpack.c.l.b16 %v3436
      %v3458 = vunpack.c.l.b16 %v3440
      %v3459 = vunpack.c.l.b16 %v3444
      %v3460 = vunpack.c.l.b16 %v3448
      %v3461 = vunpack.c.l.b16 %v3452
      %v3462 = vpack.c.b16 %v3455, %v3454
      %v3463 = vpack.c.b16 %v3457, %v3456
      %v3464 = vpack.c.b16 %v3459, %v3458
      %v3465 = vpack.c.b16 %v3461, %v3460
      %v3467 = vsel %vm2205, %v3462, 0
      %v3470 = vsel %vm2205, %v3463, 0
      %v3473 = vsel %vm2205, %v3464, 0
      %v3476 = vsel %vm2205, %v3465, 0
      %v3479 = vsel %vm2218, %v3453, 0
      %3481 = vmatprep.subr.bf16.mxu0 0
      %3482 = vmatpush1.bf16.msra.mxu0 %v3479
      %3483 = vmatprep.subr.bf16.mxu0 0
      %3484 = vmatpush1.bf16.msra.mxu0 0
      %3485 = vmatprep.subr.bf16.mxu0 0
      %3486 = vmatpush1.bf16.msra.mxu0 0
      %3487 = vmatprep.subr.bf16.mxu0 0
      %3488 = vmatpush1.bf16.msra.mxu0 0
      %3489 = vmatprep.subr.bf16.mxu0 0
      %3490 = vmatpush1.bf16.msra.mxu0 0
      %3491 = vmatprep.subr.bf16.mxu0 0
      %3492 = vmatpush1.bf16.msra.mxu0 0
      %3493 = vmatprep.subr.bf16.mxu0 0
      %3494 = vmatpush1.bf16.msra.mxu0 0
      %3495 = vmatprep.subr.bf16.mxu0 0
      %3496 = vmatpush1.bf16.msra.mxu0 0
      %3497 = vmatprep.subr.bf16.mxu0 0
      %3498 = vmatpush1.bf16.msra.mxu0 0
      %3499 = vmatprep.subr.bf16.mxu0 0
      %3500 = vmatpush1.bf16.msra.mxu0 0
      %3501 = vmatprep.subr.bf16.mxu0 0
      %3502 = vmatpush1.bf16.msra.mxu0 0
      %3503 = vmatprep.subr.bf16.mxu0 0
      %3504 = vmatpush1.bf16.msra.mxu0 0
      %3505 = vmatprep.subr.bf16.mxu0 0
      %3506 = vmatpush1.bf16.msra.mxu0 0
      %3507 = vmatprep.subr.bf16.mxu0 0
      %3508 = vmatpush1.bf16.msra.mxu0 0
      %3509 = vmatprep.subr.bf16.mxu0 0
      %3510 = vmatpush1.bf16.msra.mxu0 0
      %3511 = vmatprep.subr.bf16.mxu0 0
      %3512 = vmatpush1.bf16.msra.mxu0 0
      %3513 = vmatprep.mubr.bf16.mxu0 0
      %3514 = vmatmul.mubr.bf16.gmra.mrb[0].mxu0 %v3467
      %v3515 = vpop.f32.mrb[0].mxu0
      %v3516 = vadd.f32 0.0, %v3515
      %v3517 = vpop.f32.mrb[0].mxu0
      %v3518 = vpop.f32.mrb[0].mxu0
      %v3519 = vadd.f32 0.0, %v3518
      %v3520 = vpop.f32.mrb[0].mxu0
      %3521 = vmatprep.mubr.bf16.mxu0 0
      %3522 = vmatmul.mubr.bf16.gmra.mrb[0].mxu0 %v3470
      %v3523 = vpop.f32.mrb[0].mxu0
      %v3524 = vadd.f32 0.0, %v3523
      %v3525 = vpop.f32.mrb[0].mxu0
      %v3526 = vpop.f32.mrb[0].mxu0
      %v3527 = vadd.f32 0.0, %v3526
      %v3528 = vpop.f32.mrb[0].mxu0
      %3529 = vmatprep.mubr.bf16.mxu0 0
      %3530 = vmatmul.mubr.bf16.gmra.mrb[0].mxu0 %v3473
      %v3531 = vpop.f32.mrb[0].mxu0
      %v3532 = vadd.f32 0.0, %v3531
      %v3533 = vpop.f32.mrb[0].mxu0
      %v3534 = vpop.f32.mrb[0].mxu0
      %v3535 = vadd.f32 0.0, %v3534
      %v3536 = vpop.f32.mrb[0].mxu0
      %3537 = vmatprep.mubr.bf16.mxu0 0
      %3538 = vmatmul.mubr.bf16.gmra.mrb[0].mxu0 %v3476
      %v3539 = vpop.f32.mrb[0].mxu0
      %v3540 = vadd.f32 0.0, %v3539
      %v3541 = vpop.f32.mrb[0].mxu0
      %v3542 = vpop.f32.mrb[0].mxu0
      %v3543 = vadd.f32 0.0, %v3542
      %v3544 = vpop.f32.mrb[0].mxu0
      %3545 = vdwg.mxu0
      %v3546 = vadd.f32 %v3389, %v3516
      %v3547 = vadd.f32 %v3390, %v3519
      %v3548 = vadd.f32 %v3391, %v3524
      %v3549 = vadd.f32 %v3392, %v3527
      %v3550 = vadd.f32 %v3393, %v3532
      %v3551 = vadd.f32 %v3394, %v3535
      %v3552 = vadd.f32 %v3395, %v3540
      %v3553 = vadd.f32 %v3396, %v3543
      %v3554 = vld [vmem:[%s5] sm:$0x1]
      %v3556 = vlaneseq
      %v3557 = vshrl.u32 %v3556, 7
      %v3558 = vsub.s32 0, %v3557
      %v3559 = vrot.slane %v3554, %v3558
      %v3561 = vmul.f32 %v3546, %v3559
      %v3562 = vmul.f32 %v3547, %v3559
      %v3563 = vmul.f32 %v3548, %v3559
      %v3564 = vmul.f32 %v3549, %v3559
      %v3565 = vmul.f32 %v3550, %v3559
      %v3566 = vmul.f32 %v3551, %v3559
      %v3567 = vmul.f32 %v3552, %v3559
      %v3568 = vmul.f32 %v3553, %v3559
      %v3569 = vld [vmem:[%s6] sm:$0x1]
      %v3571 = vlaneseq
      %v3572 = vshrl.u32 %v3571, 7
      %v3573 = vsub.s32 0, %v3572
      %v3574 = vrot.slane %v3569, %v3573
      %v3576 = vadd.f32 %v3561, %v3574
      %v3577 = vadd.f32 %v3562, %v3574
      %v3578 = vadd.f32 %v3563, %v3574
      %v3579 = vadd.f32 %v3564, %v3574
      %v3580 = vadd.f32 %v3565, %v3574
      %v3581 = vadd.f32 %v3566, %v3574
      %v3582 = vadd.f32 %v3567, %v3574
      %v3583 = vadd.f32 %v3568, %v3574
      %v3584 = vld [vmem:[%s7] sm:$0x3]
      %v3586 = vsel %vm459, %v3584, 0
      %3588 = vmatprep.subr.bf16.mxu0 0
      %3589 = vmatpush1.bf16.msra.mxu0 %v3586
      %3590 = vmatprep.subr.bf16.mxu0 0
      %3591 = vmatpush1.bf16.msra.mxu0 0
      %3592 = vmatprep.subr.bf16.mxu0 0
      %3593 = vmatpush1.bf16.msra.mxu0 0
      %3594 = vmatprep.subr.bf16.mxu0 0
      %3595 = vmatpush1.bf16.msra.mxu0 0
      %3596 = vmatprep.subr.bf16.mxu0 0
      %3597 = vmatpush1.bf16.msra.mxu0 0
      %3598 = vmatprep.subr.bf16.mxu0 0
      %3599 = vmatpush1.bf16.msra.mxu0 0
      %3600 = vmatprep.subr.bf16.mxu0 0
      %3601 = vmatpush1.bf16.msra.mxu0 0
      %3602 = vmatprep.subr.bf16.mxu0 0
      %3603 = vmatpush1.bf16.msra.mxu0 0
      %3604 = vmatprep.subr.bf16.mxu0 0
      %3605 = vmatpush1.bf16.msra.mxu0 0
      %3606 = vmatprep.subr.bf16.mxu0 0
      %3607 = vmatpush1.bf16.msra.mxu0 0
      %3608 = vmatprep.subr.bf16.mxu0 0
      %3609 = vmatpush1.bf16.msra.mxu0 0
      %3610 = vmatprep.subr.bf16.mxu0 0
      %3611 = vmatpush1.bf16.msra.mxu0 0
      %3612 = vmatprep.subr.bf16.mxu0 0
      %3613 = vmatpush1.bf16.msra.mxu0 0
      %3614 = vmatprep.subr.bf16.mxu0 0
      %3615 = vmatpush1.bf16.msra.mxu0 0
      %3616 = vmatprep.subr.bf16.mxu0 0
      %3617 = vmatpush1.bf16.msra.mxu0 0
      %3618 = vmatprep.subr.bf16.mxu0 0
      %3619 = vmatpush1.bf16.msra.mxu0 0
      %3620 = vmatprep.mubr.bf16.mxu0 0
      %3621 = vmatmul.mubr.bf16.gmra.mrb[0].mxu0 %v1013
      %v3622 = vpop.f32.mrb[0].mxu0
      %v3623 = vadd.f32 0.0, %v3622
      %v3624 = vpop.f32.mrb[0].mxu0
      %v3625 = vpop.f32.mrb[0].mxu0
      %v3626 = vadd.f32 0.0, %v3625
      %v3627 = vpop.f32.mrb[0].mxu0
      %3628 = vmatprep.mubr.bf16.mxu0 0
      %3629 = vmatmul.mubr.bf16.gmra.mrb[0].mxu0 %v1016
      %v3630 = vpop.f32.mrb[0].mxu0
      %v3631 = vadd.f32 0.0, %v3630
      %v3632 = vpop.f32.mrb[0].mxu0
      %v3633 = vpop.f32.mrb[0].mxu0
      %v3634 = vadd.f32 0.0, %v3633
      %v3635 = vpop.f32.mrb[0].mxu0
      %3636 = vmatprep.mubr.bf16.mxu0 0
      %3637 = vmatmul.mubr.bf16.gmra.mrb[0].mxu0 %v1019
      %v3638 = vpop.f32.mrb[0].mxu0
      %v3639 = vadd.f32 0.0, %v3638
      %v3640 = vpop.f32.mrb[0].mxu0
      %v3641 = vpop.f32.mrb[0].mxu0
      %v3642 = vadd.f32 0.0, %v3641
      %v3643 = vpop.f32.mrb[0].mxu0
      %3644 = vmatprep.mubr.bf16.mxu0 0
      %3645 = vmatmul.mubr.bf16.gmra.mrb[0].mxu0 %v1022
      %v3646 = vpop.f32.mrb[0].mxu0
      %v3647 = vadd.f32 0.0, %v3646
      %v3648 = vpop.f32.mrb[0].mxu0
      %v3649 = vpop.f32.mrb[0].mxu0
      %v3650 = vadd.f32 0.0, %v3649
      %v3651 = vpop.f32.mrb[0].mxu0
      %3652 = vdwg.mxu0
      %v3653 = vld [vmem:[%s8] sm:$0x1]
      %v3655 = vlaneseq
      %v3656 = vshrl.u32 %v3655, 7
      %v3657 = vsub.s32 0, %v3656
      %v3658 = vrot.slane %v3653, %v3657
      %v3660 = vmul.f32 %v3623, %v3658
      %v3661 = vmul.f32 %v3626, %v3658
      %v3662 = vmul.f32 %v3631, %v3658
      %v3663 = vmul.f32 %v3634, %v3658
      %v3664 = vmul.f32 %v3639, %v3658
      %v3665 = vmul.f32 %v3642, %v3658
      %v3666 = vmul.f32 %v3647, %v3658
      %v3667 = vmul.f32 %v3650, %v3658
      %v3668 = vld [vmem:[%s9] sm:$0x1]
      %v3670 = vlaneseq
      %v3671 = vshrl.u32 %v3670, 7
      %v3672 = vsub.s32 0, %v3671
      %v3673 = vrot.slane %v3668, %v3672
      %v3675 = vadd.f32 %v3660, %v3673
      %v3676 = vadd.f32 %v3661, %v3673
      %v3677 = vadd.f32 %v3662, %v3673
      %v3678 = vadd.f32 %v3663, %v3673
      %v3679 = vadd.f32 %v3664, %v3673
      %v3680 = vadd.f32 %v3665, %v3673
      %v3681 = vadd.f32 %v3666, %v3673
      %v3682 = vadd.f32 %v3667, %v3673
      %v3683 = vadd.f32 %v3576, %v3675
      %v3684 = vadd.f32 %v3577, %v3676
      %v3685 = vadd.f32 %v3578, %v3677
      %v3686 = vadd.f32 %v3579, %v3678
      %v3687 = vadd.f32 %v3580, %v3679
      %v3688 = vadd.f32 %v3581, %v3680
      %v3689 = vadd.f32 %v3582, %v3681
      %v3690 = vadd.f32 %v3583, %v3682
      %v3691 = vmax.f32 %v3683, 0.0
      %v3692 = vmax.f32 %v3684, 0.0
      %v3693 = vmax.f32 %v3685, 0.0
      %v3694 = vmax.f32 %v3686, 0.0
      %v3695 = vmax.f32 %v3687, 0.0
      %v3696 = vmax.f32 %v3688, 0.0
      %v3697 = vmax.f32 %v3689, 0.0
      %v3698 = vmax.f32 %v3690, 0.0
      %3699 = vst.msk [vmem:[%s394] sm:$0xff] %vm2205, %v3691
      %3700 = vst.msk [vmem:[%s394 + $0x8] sm:$0xff] %vm2205, %v3692
      %3701 = vst.msk [vmem:[%s394 + $0x10] sm:$0xff] %vm2205, %v3693
      %3702 = vst.msk [vmem:[%s394 + $0x18] sm:$0xff] %vm2205, %v3694
      %3703 = vst.msk [vmem:[%s394 + $0x20] sm:$0xff] %vm2205, %v3695
      %3704 = vst.msk [vmem:[%s394 + $0x28] sm:$0xff] %vm2205, %v3696
      %3705 = vst.msk [vmem:[%s394 + $0x30] sm:$0xff] %vm2205, %v3697
      %3706 = vst.msk [vmem:[%s394 + $0x38] sm:$0xff] %vm2205, %v3698
      %3707 = vst.msk [vmem:[%s400] sm:$0xff] %vm2205, %v3683
      %3708 = vst.msk [vmem:[%s400 + $0x8] sm:$0xff] %vm2205, %v3684
      %3709 = vst.msk [vmem:[%s400 + $0x10] sm:$0xff] %vm2205, %v3685
      %3710 = vst.msk [vmem:[%s400 + $0x18] sm:$0xff] %vm2205, %v3686
      %3711 = vst.msk [vmem:[%s400 + $0x20] sm:$0xff] %vm2205, %v3687
      %3712 = vst.msk [vmem:[%s400 + $0x28] sm:$0xff] %vm2205, %v3688
      %3713 = vst.msk [vmem:[%s400 + $0x30] sm:$0xff] %vm2205, %v3689
      %3714 = vst.msk [vmem:[%s400 + $0x38] sm:$0xff] %vm2205, %v3690
      %s3715 = smul.u32 8, %s23
      %p3716 = scmp.lt.s32.totalorder %s3715, 15
      %s3717 = scalar_select %p3716, %s3715, 15
      %s3718 = smul.addr %s3717, 8
      %s3719 = scalar_lea.vmem %s10, %s3718
      %s3720 = smul.u32 8, %s23
      %p3721 = scmp.lt.s32.totalorder %s3720, 15
      %s3722 = scalar_select %p3721, %s3720, 15
      %s3723 = smul.addr %s3722, 8
      %s3724 = scalar_lea.vmem %s11, %s3723
      // Predicated region
      $region61: #{tpu_custom_call.1} parent=59 // pred_check
        %p3725 = pneg %p256
      $region62: #{tpu_custom_call.1} parent=59 // pred_check_branch
        %3727 = sbr.rel (%p3725) target = $region64
      $region63: #{tpu_custom_call.1} parent=59 // pred_region
        %s3728 = smul.u32 8, %s23
      $region64: #{tpu_custom_call.1} parent=59 // pred_fallthru
        _
      // Predicated region
      $region65: #{tpu_custom_call.1} parent=59 // pred_check
        %p3729 = pneg %p282
      $region66: #{tpu_custom_call.1} parent=59 // pred_check_branch
        %3731 = sbr.rel (%p3729) target = $region68
      $region67: #{tpu_custom_call.1} parent=59 // pred_region
        %s3732 = smul.u32 8, %s23
      $region68: #{tpu_custom_call.1} parent=59 // pred_fallthru
        _
    $region60: #{tpu_custom_call.1} parent=5 // pred_fallthru
      _
    %p3733 = scmp.le.s32.totalorder 2, %s18
    // Predicated region
    $region69: #{tpu_custom_call.1} parent=5 // pred_check
      %p3734 = pneg %p3733
    $region70: #{tpu_custom_call.1} parent=5 // pred_check_branch
      %3736 = sbr.rel (%p3734) target = $region72
    $region71: #{tpu_custom_call.1} parent=5 // pred_region
      %s3737 = ssub.s32 %s18, 2
      // Predicated region
      $region73: #{tpu_custom_call.1} parent=71 // pred_check
        %p3738 = pneg %p262
      $region74: #{tpu_custom_call.1} parent=71 // pred_check_branch
        %3740 = sbr.rel (%p3738) target = $region76
      $region75: #{tpu_custom_call.1} parent=71 // pred_region
        %s3741 = smul.u32 8, %s24
        %p3742 = scmp.lt.s32.totalorder %s3741, 15
        %s3743 = scalar_select %p3742, %s3741, 15
        %s3744 = smul.addr %s3743, 8
        %s3745 = scalar_lea.vmem %s10, %s3744
      $region76: #{tpu_custom_call.1} parent=71 // pred_fallthru
        _
      // Predicated region
      $region77: #{tpu_custom_call.1} parent=71 // pred_check
        %p3746 = pneg %p288
      $region78: #{tpu_custom_call.1} parent=71 // pred_check_branch
        %3748 = sbr.rel (%p3746) target = $region80
      $region79: #{tpu_custom_call.1} parent=71 // pred_region
        %s3749 = smul.u32 8, %s24
        %p3750 = scmp.lt.s32.totalorder %s3749, 15
        %s3751 = scalar_select %p3750, %s3749, 15
        %s3752 = smul.addr %s3751, 8
        %s3753 = scalar_lea.vmem %s11, %s3752
      $region80: #{tpu_custom_call.1} parent=71 // pred_fallthru
        _
    $region72: #{tpu_custom_call.1} parent=5 // pred_fallthru
      _
  $region6: #{tpu_custom_call.1} parent=0 // loop_footer
    %s22 = sadd.s32 1, %s18
  $region7: #{tpu_custom_call.1} parent=0 // loop_footer_branch
    %17 = sbr.rel target = $region3
  $region8: #{tpu_custom_call.1} parent=0 // loop_exit
    _

</llo_original>
